<compile_context>
chip_gen: v5e
topology: v5e:2x2
jax: 0.10.0
libtpu: 0.0.40
codegen_flags: <defaults>
</compile_context>

<pallas_src>
import functools

import jax
import jax.numpy as jnp
from jax.experimental import pallas as pl
from jax.experimental.pallas import tpu as pltpu

# ---- model constants (from the PyTorch module) ------------------------------
NEG_SLOPE = 0.01             # nn.LeakyReLU(negative_slope=0.01)
LN_EPS = 1e-5                # nn.LayerNorm default eps
FFN_DIM = 2048               # nn.TransformerEncoderLayer default dim_feedforward
NUM_HEADS = 5
NUM_LAYERS = 6
ORIG_D_A, ORIG_D_L = 128, 300
D = 60                       # d_a == d_l
HD = D // NUM_HEADS          # 12
COMBINED_DIM = 2 * D         # 120
OUT_FEATS = 104

# ---- lane-dense padded sizes -------------------------------------------------
DP = 128                     # padded embed / combined / output width
QKV_W = 3 * DP               # 384: q | k | v, each one 128-lane block
XIN_W = 384                  # common padded width of both raw modalities


# -----------------------------------------------------------------------------
# In-kernel helpers
# -----------------------------------------------------------------------------
def _masked_layernorm(x, g, b, lane_mask, d_real):
    """Exact LayerNorm over the first d_real lanes of zero-padded rows.

    Two-pass (x - mu)^2 variance like PyTorch; the explicit lane mask makes
    the statistics robust even if padded lanes are ever non-zero.  g/b are
    zero in padded lanes, so padded output lanes are re-zeroed every LN.
    """
    inv_d = 1.0 / float(d_real)
    xm = x * lane_mask
    mu = jnp.sum(xm, axis=-1, keepdims=True) * inv_d
    diff = (xm - mu) * lane_mask
    var = jnp.sum(diff * diff, axis=-1, keepdims=True) * inv_d
    return (x - mu) * jax.lax.rsqrt(var + LN_EPS) * g + b


# -----------------------------------------------------------------------------
# Fused encoder-layer kernel (one grid step == one full layer of one stack)
# -----------------------------------------------------------------------------
def _encoder_layer_kernel(xin_ref, wproj_ref, wqkv_ref, bqkv_ref, wout_ref,
                          bout_ref, g1_ref, b1_ref, wff1_ref, bff1_ref,
                          wff2_ref, bff2_ref, g2_ref, b2_ref, y_ref, *,
                          num_heads, d_real, batch, seq):
    hd = d_real // num_heads
    scale = 1.0 / float(hd) ** 0.5

    @pl.when(pl.program_id(1) == 0)
    def _init():
        # Conv1d(kernel_size=1, bias=False) == channel matmul of this stack's
        # modality.  Written straight into the VMEM-resident output block,
        # which doubles as the layer carry (no scratch, no HBM round trip).
        y_ref[0] = jnp.dot(xin_ref[0], wproj_ref[0],
                           preferred_element_type=jnp.float32)

    x = y_ref[0]                                             # (N, 128) f32

    # ---- fused QKV projection: one (N,128)@(128,384) bf16 MXU op ----------
    qkv = jnp.dot(x.astype(jnp.bfloat16), wqkv_ref[0, 0],
                  preferred_element_type=jnp.float32) + bqkv_ref[0, 0]

    q = qkv[:, 0 * DP:1 * DP].reshape(batch, 1, seq, DP)
    k = qkv[:, 1 * DP:2 * DP].reshape(batch, 1, seq, DP)
    v = qkv[:, 2 * DP:3 * DP].reshape(batch, 1, seq, DP)

    # Disjoint per-head lane masks: head h owns lanes [h*hd, (h+1)*hd).
    lane = jax.lax.broadcasted_iota(jnp.int32, (num_heads, DP), 1)
    hidx = jax.lax.broadcasted_iota(jnp.int32, (num_heads, DP), 0)
    hmask = ((lane >= hidx * hd) & (lane < (hidx + 1) * hd))
    hmask = hmask.astype(jnp.float32).reshape(1, num_heads, 1, DP)

    bh = batch * num_heads
    qf = (q * hmask).reshape(bh, seq, DP)
    kf = (k * hmask).reshape(bh, seq, DP)
    vf = (v * hmask).reshape(bh, seq, DP)

    # ---- attention: batched over (batch, head); exact softmax -------------
    s = jnp.einsum("zqd,zkd->zqk", qf, kf,
                   preferred_element_type=jnp.float32) * scale
    s = s - jnp.max(s, axis=-1, keepdims=True)
    p = jnp.exp(s)
    p = p / jnp.sum(p, axis=-1, keepdims=True)
    ctx = jnp.einsum("zqk,zkd->zqd", p, vf,
                     preferred_element_type=jnp.float32)
    # Heads live in disjoint lanes -> summing over heads produces the
    # concatenated-heads layout expected by the single (128,128) out proj.
    ctx = jnp.sum(ctx.reshape(batch, num_heads, seq, DP), axis=1)
    ctx = ctx.reshape(batch * seq, DP)

    attn = jnp.dot(ctx.astype(jnp.bfloat16), wout_ref[0, 0],
                   preferred_element_type=jnp.float32) + bout_ref[0, 0]

    lmask = (jax.lax.broadcasted_iota(jnp.int32, (1, DP), 1)
             < d_real).astype(jnp.float32)
    x = _masked_layernorm(x + attn, g1_ref[0, 0], b1_ref[0, 0], lmask, d_real)

    # ---- feed-forward: the (N, 2048) intermediate never leaves VMEM -------
    hmid = jnp.dot(x.astype(jnp.bfloat16), wff1_ref[0, 0],
                   preferred_element_type=jnp.float32) + bff1_ref[0, 0]
    hmid = jnp.maximum(hmid, 0.0)
    ff = jnp.dot(hmid.astype(jnp.bfloat16), wff2_ref[0, 0],
                 preferred_element_type=jnp.float32) + bff2_ref[0, 0]

    x = _masked_layernorm(x + ff, g2_ref[0, 0], b2_ref[0, 0], lmask, d_real)
    y_ref[0] = x                                  # layer carry / final output


def encoder_stacks(xin, wproj, ew, *, batch, seq):
    """Run both 6-layer encoder stacks.  xin: (2, N, XIN_W) padded raw inputs."""
    n = xin.shape[1]
    wmap = lambda s, l: (s, l, 0, 0)
    smap = lambda s, l: (s, 0, 0)
    kernel = functools.partial(_encoder_layer_kernel, num_heads=NUM_HEADS,
                               d_real=D, batch=batch, seq=seq)
    return pl.pallas_call(
        kernel,
        out_shape=jax.ShapeDtypeStruct((2, n, DP), jnp.float32),
        grid=(2, NUM_LAYERS),
        in_specs=[
            pl.BlockSpec((1, n, XIN_W), smap),               # raw modality input
            pl.BlockSpec((1, XIN_W, DP), smap),              # input Conv1d weight
            pl.BlockSpec((1, 1, DP, QKV_W), wmap),           # wqkv (bf16)
            pl.BlockSpec((1, 1, 1, QKV_W), wmap),            # bqkv
            pl.BlockSpec((1, 1, DP, DP), wmap),              # wout (bf16)
            pl.BlockSpec((1, 1, 1, DP), wmap),               # bout
            pl.BlockSpec((1, 1, 1, DP), wmap),               # ln1 gamma
            pl.BlockSpec((1, 1, 1, DP), wmap),               # ln1 beta
            pl.BlockSpec((1, 1, DP, FFN_DIM), wmap),         # wff1 (bf16)
            pl.BlockSpec((1, 1, 1, FFN_DIM), wmap),          # bff1
            pl.BlockSpec((1, 1, FFN_DIM, DP), wmap),         # wff2 (bf16)
            pl.BlockSpec((1, 1, 1, DP), wmap),               # bff2
            pl.BlockSpec((1, 1, 1, DP), wmap),               # ln2 gamma
            pl.BlockSpec((1, 1, 1, DP), wmap),               # ln2 beta
        ],
        out_specs=pl.BlockSpec((1, n, DP), smap),
        compiler_params=pltpu.CompilerParams(
            dimension_semantics=("parallel", "arbitrary")),
    )(xin, wproj, ew["wqkv"], ew["bqkv"], ew["wout"], ew["bout"],
      ew["g1"], ew["b1"], ew["wff1"], ew["bff1"],
      ew["wff2"], ew["bff2"], ew["g2"], ew["b2"])


# -----------------------------------------------------------------------------
# Fused tail kernel: proj1 + LeakyReLU + proj2 + out_layer
# -----------------------------------------------------------------------------
def _tail_kernel(enc_ref, w1a_ref, w1b_ref, b1_ref, w2_ref, b2_ref,
                 w3_ref, b3_ref, o_ref):
    # proj1 over concat(ha, hl) expressed as two matmuls on the padded
    # per-stack activations, then LeakyReLU, proj2 and out_layer, all in VMEM.
    z = (jnp.dot(enc_ref[0], w1a_ref[...], preferred_element_type=jnp.float32)
         + jnp.dot(enc_ref[1], w1b_ref[...], preferred_element_type=jnp.float32)
         + b1_ref[...])
    z = jnp.where(z > 0, z, NEG_SLOPE * z)
    z = jnp.dot(z, w2_ref[...], preferred_element_type=jnp.float32) + b2_ref[...]
    z = jnp.dot(z, w3_ref[...], preferred_element_type=jnp.float32) + b3_ref[...]
    o_ref[...] = z.astype(o_ref.dtype)


def tail_projection(enc, tp):
    n = enc.shape[1]
    return pl.pallas_call(
        _tail_kernel,
        out_shape=jax.ShapeDtypeStruct((n, DP), jnp.float32),
    )(enc, tp["w1a"], tp["w1b"], tp["b1"], tp["w2"], tp["b2"], tp["w3"], tp["b3"])


# -----------------------------------------------------------------------------
# Parameters: unpadded init (PyTorch-equivalent, (in,out)-oriented) + packing
# into the lane-dense padded buffers the kernels consume.
# -----------------------------------------------------------------------------
def init_params(key):
    keys = iter(jax.random.split(key, 256))

    def nrm(shape, scale=0.02):
        return scale * jax.random.normal(next(keys), shape, dtype=jnp.float32)

    def layer_params():
        return {
            "in_proj_w": nrm((D, 3 * D)), "in_proj_b": nrm((3 * D,)),
            "out_proj_w": nrm((D, D)), "out_proj_b": nrm((D,)),
            "ffn1_w": nrm((D, FFN_DIM)), "ffn1_b": nrm((FFN_DIM,)),
            "ffn2_w": nrm((FFN_DIM, D)), "ffn2_b": nrm((D,)),
            "norm1_g": jnp.ones((D,), jnp.float32),
            "norm1_b": jnp.zeros((D,), jnp.float32),
            "norm2_g": jnp.ones((D,), jnp.float32),
            "norm2_b": jnp.zeros((D,), jnp.float32),
        }

    return {
        "proj_a_w": nrm((ORIG_D_A, D)),
        "proj_l_w": nrm((ORIG_D_L, D)),
        "enc_a": [layer_params() for _ in range(NUM_LAYERS)],
        "enc_l": [layer_params() for _ in range(NUM_LAYERS)],
        "proj1_w": nrm((COMBINED_DIM, COMBINED_DIM)), "proj1_b": nrm((COMBINED_DIM,)),
        "proj2_w": nrm((COMBINED_DIM, OUT_FEATS)), "proj2_b": nrm((OUT_FEATS,)),
        "out_w": nrm((OUT_FEATS, OUT_FEATS)), "out_b": nrm((OUT_FEATS,)),
    }


def _pad2(x, shape, dtype=jnp.float32):
    out = jnp.zeros(shape, jnp.float32)
    out = out.at[:x.shape[0], :x.shape[1]].set(x)
    return out.astype(dtype)


def _pack_layer(lp):
    """Pack one encoder layer into lane-dense, 128-aligned buffers.

    wqkv is (128, 384): three lane-dense blocks q|k|v with the 60 real dims
    (5 heads x 12, PyTorch head order) in lanes 0..59 of each block.  Big
    weights are stored in bf16 (streamed-byte halving; ~1e-3 rel error).
    """
    wqkv = jnp.zeros((DP, QKV_W), jnp.float32)
    bqkv = jnp.zeros((1, QKV_W), jnp.float32)
    for c in range(3):                                   # q, k, v blocks
        wqkv = wqkv.at[:D, c * DP:c * DP + D].set(lp["in_proj_w"][:, c * D:(c + 1) * D])
        bqkv = bqkv.at[0, c * DP:c * DP + D].set(lp["in_proj_b"][c * D:(c + 1) * D])
    return {
        "wqkv": wqkv.astype(jnp.bfloat16),
        "bqkv": bqkv,
        "wout": _pad2(lp["out_proj_w"], (DP, DP), jnp.bfloat16),
        "bout": _pad2(lp["out_proj_b"][None, :], (1, DP)),
        "g1": _pad2(lp["norm1_g"][None, :], (1, DP)),
        "b1": _pad2(lp["norm1_b"][None, :], (1, DP)),
        "wff1": _pad2(lp["ffn1_w"], (DP, FFN_DIM), jnp.bfloat16),
        "bff1": lp["ffn1_b"][None, :],
        "wff2": _pad2(lp["ffn2_w"], (FFN_DIM, DP), jnp.bfloat16),
        "bff2": _pad2(lp["ffn2_b"][None, :], (1, DP)),
        "g2": _pad2(lp["norm2_g"][None, :], (1, DP)),
        "b2": _pad2(lp["norm2_b"][None, :], (1, DP)),
    }


def pack_params(raw):
    per_stack = [[_pack_layer(lp) for lp in raw[name]] for name in ("enc_a", "enc_l")]
    enc = {
        field: jnp.stack([jnp.stack([per_stack[s][l][field]
                                     for l in range(NUM_LAYERS)])
                          for s in range(2)])
        for field in per_stack[0][0]
    }
    wproj = jnp.zeros((2, XIN_W, DP), jnp.float32)        # per-stack Conv1d(k=1)
    wproj = wproj.at[0, :ORIG_D_A, :D].set(raw["proj_a_w"])
    wproj = wproj.at[1, :ORIG_D_L, :D].set(raw["proj_l_w"])
    return {
        "wproj": wproj,
        "enc": enc,
        "tail": {
            "w1a": _pad2(raw["proj1_w"][:D, :], (DP, DP)),
            "w1b": _pad2(raw["proj1_w"][D:, :], (DP, DP)),
            "b1": _pad2(raw["proj1_b"][None, :], (1, DP)),
            "w2": _pad2(raw["proj2_w"], (DP, DP)),
            "b2": _pad2(raw["proj2_b"][None, :], (1, DP)),
            "w3": _pad2(raw["out_w"], (DP, DP)),
            "b3": _pad2(raw["out_b"][None, :], (1, DP)),
        },
    }


# -----------------------------------------------------------------------------
# Forward
# -----------------------------------------------------------------------------
def trans_mm_fc_forward(params, x_a, x_l):
    """x_a: (B, T, 128), x_l: (B, T, 300)  ->  (B, T, 104).

    embed_dropout / relu_dropout / out_dropout are eval-mode no-ops; the
    module's internal_losses output is always an empty list and is omitted.
    """
    B, T, ca = x_a.shape
    cl = x_l.shape[-1]
    n = B * T

    xin = jnp.zeros((2, n, XIN_W), jnp.float32)
    xin = xin.at[0, :, :ca].set(x_a.reshape(n, ca))
    xin = xin.at[1, :, :cl].set(x_l.reshape(n, cl))

    enc = encoder_stacks(xin, params["wproj"], params["enc"], batch=B, seq=T)
    z = tail_projection(enc, params["tail"])                           # (n,128)
    return z[:, :OUT_FEATS].reshape(B, T, OUT_FEATS)


if __name__ == "__main__":
    key = jax.random.PRNGKey(0)
    kp, ka, kl = jax.random.split(key, 3)
    B, T = 2, 8  # small seq length instead of default time_steps=64

    params = pack_params(init_params(kp))
    x_a = jax.random.normal(ka, (B, T, ORIG_D_A), dtype=jnp.float32)
    x_l = jax.random.normal(kl, (B, T, ORIG_D_L), dtype=jnp.float32)

    out = jax.jit(trans_mm_fc_forward)(params, x_a, x_l)
    out = jax.block_until_ready(out)
    assert out.shape == (B, T, OUT_FEATS)
    assert bool(jnp.all(jnp.isfinite(out)))
    print("KERNEL_OK")
</pallas_src>

<mosaic_0001>
module attributes {stable_mosaic.version = 11 : i64} {
  func.func @_tail_kernel(%arg0: memref<2x16x128xf32, #tpu.memory_space<vmem>>, %arg1: memref<128x128xf32, #tpu.memory_space<vmem>>, %arg2: memref<128x128xf32, #tpu.memory_space<vmem>>, %arg3: memref<1x128xf32, #tpu.memory_space<vmem>>, %arg4: memref<128x128xf32, #tpu.memory_space<vmem>>, %arg5: memref<1x128xf32, #tpu.memory_space<vmem>>, %arg6: memref<128x128xf32, #tpu.memory_space<vmem>>, %arg7: memref<1x128xf32, #tpu.memory_space<vmem>>, %arg8: memref<16x128xf32, #tpu.memory_space<vmem>>) attributes {dimension_semantics = [], scalar_prefetch = 0 : i64, scratch_operands = 0 : i64, tpu.core_type = #tpu.core_type<tc>} {
    %c0 = arith.constant 0 : index
    %c0_0 = arith.constant 0 : index
    %c0_1 = arith.constant 0 : index
    %0 = vector.load %arg0[%c0, %c0_0, %c0_1] : memref<2x16x128xf32, #tpu.memory_space<vmem>>, vector<1x16x128xf32>
    %1 = vector.shape_cast %0 : vector<1x16x128xf32> to vector<16x128xf32>
    %c0_2 = arith.constant 0 : index
    %c0_3 = arith.constant 0 : index
    %2 = vector.load %arg1[%c0_2, %c0_3] : memref<128x128xf32, #tpu.memory_space<vmem>>, vector<128x128xf32>
    %cst = arith.constant dense<0.000000e+00> : vector<16x128xf32>
    %3 = tpu.matmul %1, %2, %cst {dimension_numbers = #tpu.dot_dimension_numbers<[1], [0], [0], [1], [0, 0, 1, 1], [], []>} : vector<16x128xf32>, vector<128x128xf32>, vector<16x128xf32> -> vector<16x128xf32>
    %c1 = arith.constant 1 : index
    %c0_4 = arith.constant 0 : index
    %c0_5 = arith.constant 0 : index
    %4 = vector.load %arg0[%c1, %c0_4, %c0_5] : memref<2x16x128xf32, #tpu.memory_space<vmem>>, vector<1x16x128xf32>
    %5 = vector.shape_cast %4 : vector<1x16x128xf32> to vector<16x128xf32>
    %c0_6 = arith.constant 0 : index
    %c0_7 = arith.constant 0 : index
    %6 = vector.load %arg2[%c0_6, %c0_7] : memref<128x128xf32, #tpu.memory_space<vmem>>, vector<128x128xf32>
    %cst_8 = arith.constant dense<0.000000e+00> : vector<16x128xf32>
    %7 = tpu.matmul %5, %6, %cst_8 {dimension_numbers = #tpu.dot_dimension_numbers<[1], [0], [0], [1], [0, 0, 1, 1], [], []>} : vector<16x128xf32>, vector<128x128xf32>, vector<16x128xf32> -> vector<16x128xf32>
    %8 = arith.addf %3, %7 : vector<16x128xf32>
    %c0_9 = arith.constant 0 : index
    %c0_10 = arith.constant 0 : index
    %9 = vector.load %arg3[%c0_9, %c0_10] : memref<1x128xf32, #tpu.memory_space<vmem>>, vector<1x128xf32>
    %10 = vector.broadcast %9 : vector<1x128xf32> to vector<16x128xf32>
    %11 = arith.addf %8, %10 : vector<16x128xf32>
    %cst_11 = arith.constant 0.000000e+00 : f32
    %12 = vector.broadcast %cst_11 : f32 to vector<16x128xf32>
    %13 = arith.cmpf ogt, %11, %12 : vector<16x128xf32>
    %cst_12 = arith.constant 0.00999999977 : f32
    %14 = vector.broadcast %cst_12 : f32 to vector<16x128xf32>
    %15 = arith.mulf %14, %11 : vector<16x128xf32>
    %16 = arith.select %13, %11, %15 : vector<16x128xi1>, vector<16x128xf32>
    %c0_13 = arith.constant 0 : index
    %c0_14 = arith.constant 0 : index
    %17 = vector.load %arg4[%c0_13, %c0_14] : memref<128x128xf32, #tpu.memory_space<vmem>>, vector<128x128xf32>
    %cst_15 = arith.constant dense<0.000000e+00> : vector<16x128xf32>
    %18 = tpu.matmul %16, %17, %cst_15 {dimension_numbers = #tpu.dot_dimension_numbers<[1], [0], [0], [1], [0, 0, 1, 1], [], []>} : vector<16x128xf32>, vector<128x128xf32>, vector<16x128xf32> -> vector<16x128xf32>
    %c0_16 = arith.constant 0 : index
    %c0_17 = arith.constant 0 : index
    %19 = vector.load %arg5[%c0_16, %c0_17] : memref<1x128xf32, #tpu.memory_space<vmem>>, vector<1x128xf32>
    %20 = vector.broadcast %19 : vector<1x128xf32> to vector<16x128xf32>
    %21 = arith.addf %18, %20 : vector<16x128xf32>
    %c0_18 = arith.constant 0 : index
    %c0_19 = arith.constant 0 : index
    %22 = vector.load %arg6[%c0_18, %c0_19] : memref<128x128xf32, #tpu.memory_space<vmem>>, vector<128x128xf32>
    %cst_20 = arith.constant dense<0.000000e+00> : vector<16x128xf32>
    %23 = tpu.matmul %21, %22, %cst_20 {dimension_numbers = #tpu.dot_dimension_numbers<[1], [0], [0], [1], [0, 0, 1, 1], [], []>} : vector<16x128xf32>, vector<128x128xf32>, vector<16x128xf32> -> vector<16x128xf32>
    %c0_21 = arith.constant 0 : index
    %c0_22 = arith.constant 0 : index
    %24 = vector.load %arg7[%c0_21, %c0_22] : memref<1x128xf32, #tpu.memory_space<vmem>>, vector<1x128xf32>
    %25 = vector.broadcast %24 : vector<1x128xf32> to vector<16x128xf32>
    %26 = arith.addf %23, %25 : vector<16x128xf32>
    %c0_23 = arith.constant 0 : index
    %c0_24 = arith.constant 0 : index
    %27 = vector.load %arg8[%c0_23, %c0_24] : memref<16x128xf32, #tpu.memory_space<vmem>>, vector<16x128xf32>
    tpu.vector_store %arg8[%c0_23, %c0_24], %26 {strides = array<i32>} : memref<16x128xf32, #tpu.memory_space<vmem>>, vector<16x128xf32>,
    return
  }
}

module attributes {stable_mosaic.version = 11 : i64} {
  func.func @_encoder_layer_kernel(%arg0: i32, %arg1: i32, %arg2: memref<1x16x384xf32, #tpu.memory_space<vmem>>, %arg3: memref<1x384x128xf32, #tpu.memory_space<vmem>>, %arg4: memref<1x1x128x384xbf16, #tpu.memory_space<vmem>>, %arg5: memref<1x1x1x384xf32, #tpu.memory_space<vmem>>, %arg6: memref<1x1x128x128xbf16, #tpu.memory_space<vmem>>, %arg7: memref<1x1x1x128xf32, #tpu.memory_space<vmem>>, %arg8: memref<1x1x1x128xf32, #tpu.memory_space<vmem>>, %arg9: memref<1x1x1x128xf32, #tpu.memory_space<vmem>>, %arg10: memref<1x1x128x2048xbf16, #tpu.memory_space<vmem>>, %arg11: memref<1x1x1x2048xf32, #tpu.memory_space<vmem>>, %arg12: memref<1x1x2048x128xbf16, #tpu.memory_space<vmem>>, %arg13: memref<1x1x1x128xf32, #tpu.memory_space<vmem>>, %arg14: memref<1x1x1x128xf32, #tpu.memory_space<vmem>>, %arg15: memref<1x1x1x128xf32, #tpu.memory_space<vmem>>, %arg16: memref<1x16x128xf32, #tpu.memory_space<vmem>>) attributes {dimension_semantics = [#tpu.dimension_semantics<parallel>, #tpu.dimension_semantics<arbitrary>], iteration_bounds = array<i64: 2, 6>, scalar_prefetch = 0 : i64, scratch_operands = 0 : i64, tpu.core_type = #tpu.core_type<tc>, window_params = [{transform_indices = @transform_0, window_bounds = array<i64: 1, 16, 384>}, {transform_indices = @transform_1, window_bounds = array<i64: 1, 384, 128>}, {transform_indices = @transform_2, window_bounds = array<i64: 1, 1, 128, 384>}, {transform_indices = @transform_3, window_bounds = array<i64: 1, 1, 1, 384>}, {transform_indices = @transform_4, window_bounds = array<i64: 1, 1, 128, 128>}, {transform_indices = @transform_5, window_bounds = array<i64: 1, 1, 1, 128>}, {transform_indices = @transform_6, window_bounds = array<i64: 1, 1, 1, 128>}, {transform_indices = @transform_7, window_bounds = array<i64: 1, 1, 1, 128>}, {transform_indices = @transform_8, window_bounds = array<i64: 1, 1, 128, 2048>}, {transform_indices = @transform_9, window_bounds = array<i64: 1, 1, 1, 2048>}, {transform_indices = @transform_10, window_bounds = array<i64: 1, 1, 2048, 128>}, {transform_indices = @transform_11, window_bounds = array<i64: 1, 1, 1, 128>}, {transform_indices = @transform_12, window_bounds = array<i64: 1, 1, 1, 128>}, {transform_indices = @transform_13, window_bounds = array<i64: 1, 1, 1, 128>}, {transform_indices = @transform_14, window_bounds = array<i64: 1, 16, 128>}]} {
    %c0_i32 = arith.constant 0 : i32
    %0 = arith.cmpi eq, %arg1, %c0_i32 : i32
    %1 = arith.extui %0 : i1 to i32
    %c0_i32_0 = arith.constant 0 : i32
    %2 = arith.cmpi ne, %1, %c0_i32_0 : i32
    scf.if %2 {
      %c0_75 = arith.constant 0 : index
      %c0_76 = arith.constant 0 : index
      %c0_77 = arith.constant 0 : index
      %157 = vector.load %arg2[%c0_75, %c0_76, %c0_77] : memref<1x16x384xf32, #tpu.memory_space<vmem>>, vector<1x16x384xf32>
      %158 = vector.shape_cast %157 : vector<1x16x384xf32> to vector<16x384xf32>
      %c0_78 = arith.constant 0 : index
      %c0_79 = arith.constant 0 : index
      %c0_80 = arith.constant 0 : index
      %159 = vector.load %arg3[%c0_78, %c0_79, %c0_80] : memref<1x384x128xf32, #tpu.memory_space<vmem>>, vector<1x384x128xf32>
      %160 = vector.shape_cast %159 : vector<1x384x128xf32> to vector<384x128xf32>
      %cst_81 = arith.constant dense<0.000000e+00> : vector<16x128xf32>
      %161 = tpu.matmul %158, %160, %cst_81 {dimension_numbers = #tpu.dot_dimension_numbers<[1], [0], [0], [1], [0, 0, 1, 1], [], []>} : vector<16x384xf32>, vector<384x128xf32>, vector<16x128xf32> -> vector<16x128xf32>
      %c0_82 = arith.constant 0 : index
      %c0_83 = arith.constant 0 : index
      %c0_84 = arith.constant 0 : index
      %162 = vector.load %arg16[%c0_82, %c0_83, %c0_84] : memref<1x16x128xf32, #tpu.memory_space<vmem>>, vector<1x16x128xf32>
      %163 = vector.shape_cast %162 : vector<1x16x128xf32> to vector<16x128xf32>
      %164 = vector.shape_cast %161 : vector<16x128xf32> to vector<1x16x128xf32>
      tpu.vector_store %arg16[%c0_82, %c0_83, %c0_84], %164 {strides = array<i32>} : memref<1x16x128xf32, #tpu.memory_space<vmem>>, vector<1x16x128xf32>,
    } else {
    }
    %c0 = arith.constant 0 : index
    %c0_1 = arith.constant 0 : index
    %c0_2 = arith.constant 0 : index
    %3 = vector.load %arg16[%c0, %c0_1, %c0_2] : memref<1x16x128xf32, #tpu.memory_space<vmem>>, vector<1x16x128xf32>
    %4 = vector.shape_cast %3 : vector<1x16x128xf32> to vector<16x128xf32>
    %5 = arith.truncf %4 : vector<16x128xf32> to vector<16x128xbf16>
    %c0_3 = arith.constant 0 : index
    %c0_4 = arith.constant 0 : index
    %c0_5 = arith.constant 0 : index
    %c0_6 = arith.constant 0 : index
    %6 = vector.load %arg4[%c0_3, %c0_4, %c0_5, %c0_6] : memref<1x1x128x384xbf16, #tpu.memory_space<vmem>>, vector<1x1x128x384xbf16>
    %7 = vector.shape_cast %6 : vector<1x1x128x384xbf16> to vector<128x384xbf16>
    %cst = arith.constant dense<0.000000e+00> : vector<16x384xf32>
    %8 = tpu.matmul %5, %7, %cst {dimension_numbers = #tpu.dot_dimension_numbers<[1], [0], [0], [1], [0, 0, 1, 1], [], []>} : vector<16x128xbf16>, vector<128x384xbf16>, vector<16x384xf32> -> vector<16x384xf32>
    %c0_7 = arith.constant 0 : index
    %c0_8 = arith.constant 0 : index
    %c0_9 = arith.constant 0 : index
    %c0_10 = arith.constant 0 : index
    %9 = vector.load %arg5[%c0_7, %c0_8, %c0_9, %c0_10] : memref<1x1x1x384xf32, #tpu.memory_space<vmem>>, vector<1x1x1x384xf32>
    %10 = vector.shape_cast %9 : vector<1x1x1x384xf32> to vector<1x384xf32>
    %11 = vector.broadcast %10 : vector<1x384xf32> to vector<16x384xf32>
    %12 = arith.addf %8, %11 : vector<16x384xf32>
    %13 = vector.extract_strided_slice %12 {offsets = [0, 0], sizes = [16, 128], strides = [1, 1]} : vector<16x384xf32> to vector<16x128xf32>
    %14 = vector.shape_cast %13 : vector<16x128xf32> to vector<2x1x8x128xf32>
    %15 = vector.extract_strided_slice %12 {offsets = [0, 128], sizes = [16, 128], strides = [1, 1]} : vector<16x384xf32> to vector<16x128xf32>
    %16 = vector.shape_cast %15 : vector<16x128xf32> to vector<2x1x8x128xf32>
    %17 = vector.extract_strided_slice %12 {offsets = [0, 256], sizes = [16, 128], strides = [1, 1]} : vector<16x384xf32> to vector<16x128xf32>
    %18 = vector.shape_cast %17 : vector<16x128xf32> to vector<2x1x8x128xf32>
    %19 = tpu.iota {dimensions = array<i32: 1>} : vector<5x128xi32>
    %20 = tpu.iota {dimensions = array<i32: 0>} : vector<5x128xi32>
    %c12_i32 = arith.constant 12 : i32
    %21 = vector.broadcast %c12_i32 : i32 to vector<5x128xi32>
    %22 = arith.muli %20, %21 : vector<5x128xi32>
    %23 = arith.cmpi sge, %19, %22 : vector<5x128xi32>
    %c1_i32 = arith.constant 1 : i32
    %24 = vector.broadcast %c1_i32 : i32 to vector<5x128xi32>
    %25 = arith.addi %20, %24 : vector<5x128xi32>
    %c12_i32_11 = arith.constant 12 : i32
    %26 = vector.broadcast %c12_i32_11 : i32 to vector<5x128xi32>
    %27 = arith.muli %25, %26 : vector<5x128xi32>
    %28 = arith.cmpi slt, %19, %27 : vector<5x128xi32>
    %29 = arith.andi %23, %28 : vector<5x128xi1>
    %30 = arith.extui %29 : vector<5x128xi1> to vector<5x128xi32>
    %31 = arith.sitofp %30 : vector<5x128xi32> to vector<5x128xf32>
    %32 = vector.shape_cast %31 : vector<5x128xf32> to vector<1x5x1x128xf32>
    %33 = vector.broadcast %14 : vector<2x1x8x128xf32> to vector<2x5x8x128xf32>
    %34 = vector.broadcast %32 : vector<1x5x1x128xf32> to vector<2x5x8x128xf32>
    %35 = arith.mulf %33, %34 : vector<2x5x8x128xf32>
    %36 = vector.shape_cast %35 : vector<2x5x8x128xf32> to vector<10x8x128xf32>
    %37 = vector.broadcast %16 : vector<2x1x8x128xf32> to vector<2x5x8x128xf32>
    %38 = vector.broadcast %32 : vector<1x5x1x128xf32> to vector<2x5x8x128xf32>
    %39 = arith.mulf %37, %38 : vector<2x5x8x128xf32>
    %40 = vector.shape_cast %39 : vector<2x5x8x128xf32> to vector<10x8x128xf32>
    %41 = vector.broadcast %18 : vector<2x1x8x128xf32> to vector<2x5x8x128xf32>
    %42 = vector.broadcast %32 : vector<1x5x1x128xf32> to vector<2x5x8x128xf32>
    %43 = arith.mulf %41, %42 : vector<2x5x8x128xf32>
    %44 = vector.shape_cast %43 : vector<2x5x8x128xf32> to vector<10x8x128xf32>
    "tpu.trace_start"() <{level = 10 : i32, message = "zqd,zkd->zqk"}> : () -> ()
    %cst_12 = arith.constant dense<0.000000e+00> : vector<10x8x8xf32>
    %45 = tpu.matmul %36, %40, %cst_12 {dimension_numbers = #tpu.dot_dimension_numbers<[2], [2], [1], [1], [0, 0, 0, 1, 1, 1], [0], [0]>} : vector<10x8x128xf32>, vector<10x8x128xf32>, vector<10x8x8xf32> -> vector<10x8x8xf32>
    "tpu.trace_stop"() : () -> ()
    %cst_13 = arith.constant 0.288675129 : f32
    %46 = vector.broadcast %cst_13 : f32 to vector<10x8x8xf32>
    %47 = arith.mulf %45, %46 : vector<10x8x8xf32>
    %cst_14 = arith.constant dense<0xFF800000> : vector<10x8xf32>
    %48 = vector.multi_reduction <maximumf>, %47, %cst_14 [2] : vector<10x8x8xf32> to vector<10x8xf32>
    %49 = vector.shape_cast %48 : vector<10x8xf32> to vector<10x8x1xf32>
    %50 = vector.broadcast %49 : vector<10x8x1xf32> to vector<10x8x8xf32>
    %51 = arith.subf %47, %50 : vector<10x8x8xf32>
    %52 = math.exp %51 : vector<10x8x8xf32>
    %cst_15 = arith.constant dense<0.000000e+00> : vector<10x8xf32>
    %53 = vector.multi_reduction <add>, %52, %cst_15 [2] : vector<10x8x8xf32> to vector<10x8xf32>
    %54 = vector.shape_cast %53 : vector<10x8xf32> to vector<10x8x1xf32>
    %55 = vector.broadcast %54 : vector<10x8x1xf32> to vector<10x8x8xf32>
    %56 = arith.divf %52, %55 : vector<10x8x8xf32>
    "tpu.trace_start"() <{level = 10 : i32, message = "zqk,zkd->zqd"}> : () -> ()
    %cst_16 = arith.constant dense<0.000000e+00> : vector<10x8x128xf32>
    %57 = tpu.matmul %56, %44, %cst_16 {dimension_numbers = #tpu.dot_dimension_numbers<[2], [1], [1], [2], [0, 0, 0, 1, 1, 2], [0], [0]>} : vector<10x8x8xf32>, vector<10x8x128xf32>, vector<10x8x128xf32> -> vector<10x8x128xf32>
    "tpu.trace_stop"() : () -> ()
    %58 = vector.shape_cast %57 : vector<10x8x128xf32> to vector<2x5x8x128xf32>
    %cst_17 = arith.constant dense<0.000000e+00> : vector<2x8x128xf32>
    %59 = vector.multi_reduction <add>, %58, %cst_17 [1] : vector<2x5x8x128xf32> to vector<2x8x128xf32>
    %60 = vector.shape_cast %59 : vector<2x8x128xf32> to vector<16x128xf32>
    %61 = arith.truncf %60 : vector<16x128xf32> to vector<16x128xbf16>
    %c0_18 = arith.constant 0 : index
    %c0_19 = arith.constant 0 : index
    %c0_20 = arith.constant 0 : index
    %c0_21 = arith.constant 0 : index
    %62 = vector.load %arg6[%c0_18, %c0_19, %c0_20, %c0_21] : memref<1x1x128x128xbf16, #tpu.memory_space<vmem>>, vector<1x1x128x128xbf16>
    %63 = vector.shape_cast %62 : vector<1x1x128x128xbf16> to vector<128x128xbf16>
    %cst_22 = arith.constant dense<0.000000e+00> : vector<16x128xf32>
    %64 = tpu.matmul %61, %63, %cst_22 {dimension_numbers = #tpu.dot_dimension_numbers<[1], [0], [0], [1], [0, 0, 1, 1], [], []>} : vector<16x128xbf16>, vector<128x128xbf16>, vector<16x128xf32> -> vector<16x128xf32>
    %c0_23 = arith.constant 0 : index
    %c0_24 = arith.constant 0 : index
    %c0_25 = arith.constant 0 : index
    %c0_26 = arith.constant 0 : index
    %65 = vector.load %arg7[%c0_23, %c0_24, %c0_25, %c0_26] : memref<1x1x1x128xf32, #tpu.memory_space<vmem>>, vector<1x1x1x128xf32>
    %66 = vector.shape_cast %65 : vector<1x1x1x128xf32> to vector<1x128xf32>
    %67 = vector.broadcast %66 : vector<1x128xf32> to vector<16x128xf32>
    %68 = arith.addf %64, %67 : vector<16x128xf32>
    %69 = tpu.iota {dimensions = array<i32: 1>} : vector<1x128xi32>
    %c60_i32 = arith.constant 60 : i32
    %70 = vector.broadcast %c60_i32 : i32 to vector<1x128xi32>
    %71 = arith.cmpi slt, %69, %70 : vector<1x128xi32>
    %72 = arith.extui %71 : vector<1x128xi1> to vector<1x128xi32>
    %73 = arith.sitofp %72 : vector<1x128xi32> to vector<1x128xf32>
    %74 = arith.addf %4, %68 : vector<16x128xf32>
    %c0_27 = arith.constant 0 : index
    %c0_28 = arith.constant 0 : index
    %c0_29 = arith.constant 0 : index
    %c0_30 = arith.constant 0 : index
    %75 = vector.load %arg8[%c0_27, %c0_28, %c0_29, %c0_30] : memref<1x1x1x128xf32, #tpu.memory_space<vmem>>, vector<1x1x1x128xf32>
    %76 = vector.shape_cast %75 : vector<1x1x1x128xf32> to vector<1x128xf32>
    %c0_31 = arith.constant 0 : index
    %c0_32 = arith.constant 0 : index
    %c0_33 = arith.constant 0 : index
    %c0_34 = arith.constant 0 : index
    %77 = vector.load %arg9[%c0_31, %c0_32, %c0_33, %c0_34] : memref<1x1x1x128xf32, #tpu.memory_space<vmem>>, vector<1x1x1x128xf32>
    %78 = vector.shape_cast %77 : vector<1x1x1x128xf32> to vector<1x128xf32>
    %79 = vector.broadcast %73 : vector<1x128xf32> to vector<16x128xf32>
    %80 = arith.mulf %74, %79 : vector<16x128xf32>
    %cst_35 = arith.constant dense<0.000000e+00> : vector<16xf32>
    %81 = vector.multi_reduction <add>, %80, %cst_35 [1] : vector<16x128xf32> to vector<16xf32>
    %82 = vector.shape_cast %81 : vector<16xf32> to vector<16x1xf32>
    %cst_36 = arith.constant 0.0166666675 : f32
    %83 = vector.broadcast %cst_36 : f32 to vector<16x1xf32>
    %84 = arith.mulf %82, %83 : vector<16x1xf32>
    %85 = vector.broadcast %84 : vector<16x1xf32> to vector<16x128xf32>
    %86 = arith.subf %80, %85 : vector<16x128xf32>
    %87 = vector.broadcast %73 : vector<1x128xf32> to vector<16x128xf32>
    %88 = arith.mulf %86, %87 : vector<16x128xf32>
    %89 = arith.mulf %88, %88 : vector<16x128xf32>
    %cst_37 = arith.constant dense<0.000000e+00> : vector<16xf32>
    %90 = vector.multi_reduction <add>, %89, %cst_37 [1] : vector<16x128xf32> to vector<16xf32>
    %91 = vector.shape_cast %90 : vector<16xf32> to vector<16x1xf32>
    %cst_38 = arith.constant 0.0166666675 : f32
    %92 = vector.broadcast %cst_38 : f32 to vector<16x1xf32>
    %93 = arith.mulf %91, %92 : vector<16x1xf32>
    %94 = vector.broadcast %84 : vector<16x1xf32> to vector<16x128xf32>
    %95 = arith.subf %74, %94 : vector<16x128xf32>
    %cst_39 = arith.constant 9.99999974E-6 : f32
    %96 = vector.broadcast %cst_39 : f32 to vector<16x1xf32>
    %97 = arith.addf %93, %96 : vector<16x1xf32>
    %98 = math.rsqrt %97 : vector<16x1xf32>
    %99 = vector.broadcast %98 : vector<16x1xf32> to vector<16x128xf32>
    %100 = arith.mulf %95, %99 : vector<16x128xf32>
    %101 = vector.broadcast %76 : vector<1x128xf32> to vector<16x128xf32>
    %102 = arith.mulf %100, %101 : vector<16x128xf32>
    %103 = vector.broadcast %78 : vector<1x128xf32> to vector<16x128xf32>
    %104 = arith.addf %102, %103 : vector<16x128xf32>
    %105 = arith.truncf %104 : vector<16x128xf32> to vector<16x128xbf16>
    %c0_40 = arith.constant 0 : index
    %c0_41 = arith.constant 0 : index
    %c0_42 = arith.constant 0 : index
    %c0_43 = arith.constant 0 : index
    %106 = vector.load %arg10[%c0_40, %c0_41, %c0_42, %c0_43] : memref<1x1x128x2048xbf16, #tpu.memory_space<vmem>>, vector<1x1x128x2048xbf16>
    %107 = vector.shape_cast %106 : vector<1x1x128x2048xbf16> to vector<128x2048xbf16>
    %cst_44 = arith.constant dense<0.000000e+00> : vector<16x2048xf32>
    %108 = tpu.matmul %105, %107, %cst_44 {dimension_numbers = #tpu.dot_dimension_numbers<[1], [0], [0], [1], [0, 0, 1, 1], [], []>} : vector<16x128xbf16>, vector<128x2048xbf16>, vector<16x2048xf32> -> vector<16x2048xf32>
    %c0_45 = arith.constant 0 : index
    %c0_46 = arith.constant 0 : index
    %c0_47 = arith.constant 0 : index
    %c0_48 = arith.constant 0 : index
    %109 = vector.load %arg11[%c0_45, %c0_46, %c0_47, %c0_48] : memref<1x1x1x2048xf32, #tpu.memory_space<vmem>>, vector<1x1x1x2048xf32>
    %110 = vector.shape_cast %109 : vector<1x1x1x2048xf32> to vector<1x2048xf32>
    %111 = vector.broadcast %110 : vector<1x2048xf32> to vector<16x2048xf32>
    %112 = arith.addf %108, %111 : vector<16x2048xf32>
    %cst_49 = arith.constant 0.000000e+00 : f32
    %113 = vector.broadcast %cst_49 : f32 to vector<16x2048xf32>
    %114 = arith.maximumf %112, %113 : vector<16x2048xf32>
    %115 = arith.truncf %114 : vector<16x2048xf32> to vector<16x2048xbf16>
    %c0_50 = arith.constant 0 : index
    %c0_51 = arith.constant 0 : index
    %c0_52 = arith.constant 0 : index
    %c0_53 = arith.constant 0 : index
    %116 = vector.load %arg12[%c0_50, %c0_51, %c0_52, %c0_53] : memref<1x1x2048x128xbf16, #tpu.memory_space<vmem>>, vector<1x1x2048x128xbf16>
    %117 = vector.shape_cast %116 : vector<1x1x2048x128xbf16> to vector<2048x128xbf16>
    %cst_54 = arith.constant dense<0.000000e+00> : vector<16x128xf32>
    %118 = tpu.matmul %115, %117, %cst_54 {dimension_numbers = #tpu.dot_dimension_numbers<[1], [0], [0], [1], [0, 0, 1, 1], [], []>} : vector<16x2048xbf16>, vector<2048x128xbf16>, vector<16x128xf32> -> vector<16x128xf32>
    %c0_55 = arith.constant 0 : index
    %c0_56 = arith.constant 0 : index
    %c0_57 = arith.constant 0 : index
    %c0_58 = arith.constant 0 : index
    %119 = vector.load %arg13[%c0_55, %c0_56, %c0_57, %c0_58] : memref<1x1x1x128xf32, #tpu.memory_space<vmem>>, vector<1x1x1x128xf32>
    %120 = vector.shape_cast %119 : vector<1x1x1x128xf32> to vector<1x128xf32>
    %121 = vector.broadcast %120 : vector<1x128xf32> to vector<16x128xf32>
    %122 = arith.addf %118, %121 : vector<16x128xf32>
    %123 = arith.addf %104, %122 : vector<16x128xf32>
    %c0_59 = arith.constant 0 : index
    %c0_60 = arith.constant 0 : index
    %c0_61 = arith.constant 0 : index
    %c0_62 = arith.constant 0 : index
    %124 = vector.load %arg14[%c0_59, %c0_60, %c0_61, %c0_62] : memref<1x1x1x128xf32, #tpu.memory_space<vmem>>, vector<1x1x1x128xf32>
    %125 = vector.shape_cast %124 : vector<1x1x1x128xf32> to vector<1x128xf32>
    %c0_63 = arith.constant 0 : index
    %c0_64 = arith.constant 0 : index
    %c0_65 = arith.constant 0 : index
    %c0_66 = arith.constant 0 : index
    %126 = vector.load %arg15[%c0_63, %c0_64, %c0_65, %c0_66] : memref<1x1x1x128xf32, #tpu.memory_space<vmem>>, vector<1x1x1x128xf32>
    %127 = vector.shape_cast %126 : vector<1x1x1x128xf32> to vector<1x128xf32>
    %128 = vector.broadcast %73 : vector<1x128xf32> to vector<16x128xf32>
    %129 = arith.mulf %123, %128 : vector<16x128xf32>
    %cst_67 = arith.constant dense<0.000000e+00> : vector<16xf32>
    %130 = vector.multi_reduction <add>, %129, %cst_67 [1] : vector<16x128xf32> to vector<16xf32>
    %131 = vector.shape_cast %130 : vector<16xf32> to vector<16x1xf32>
    %cst_68 = arith.constant 0.0166666675 : f32
    %132 = vector.broadcast %cst_68 : f32 to vector<16x1xf32>
    %133 = arith.mulf %131, %132 : vector<16x1xf32>
    %134 = vector.broadcast %133 : vector<16x1xf32> to vector<16x128xf32>
    %135 = arith.subf %129, %134 : vector<16x128xf32>
    %136 = vector.broadcast %73 : vector<1x128xf32> to vector<16x128xf32>
    %137 = arith.mulf %135, %136 : vector<16x128xf32>
    %138 = arith.mulf %137, %137 : vector<16x128xf32>
    %cst_69 = arith.constant dense<0.000000e+00> : vector<16xf32>
    %139 = vector.multi_reduction <add>, %138, %cst_69 [1] : vector<16x128xf32> to vector<16xf32>
    %140 = vector.shape_cast %139 : vector<16xf32> to vector<16x1xf32>
    %cst_70 = arith.constant 0.0166666675 : f32
    %141 = vector.broadcast %cst_70 : f32 to vector<16x1xf32>
    %142 = arith.mulf %140, %141 : vector<16x1xf32>
    %143 = vector.broadcast %133 : vector<16x1xf32> to vector<16x128xf32>
    %144 = arith.subf %123, %143 : vector<16x128xf32>
    %cst_71 = arith.constant 9.99999974E-6 : f32
    %145 = vector.broadcast %cst_71 : f32 to vector<16x1xf32>
    %146 = arith.addf %142, %145 : vector<16x1xf32>
    %147 = math.rsqrt %146 : vector<16x1xf32>
    %148 = vector.broadcast %147 : vector<16x1xf32> to vector<16x128xf32>
    %149 = arith.mulf %144, %148 : vector<16x128xf32>
    %150 = vector.broadcast %125 : vector<1x128xf32> to vector<16x128xf32>
    %151 = arith.mulf %149, %150 : vector<16x128xf32>
    %152 = vector.broadcast %127 : vector<1x128xf32> to vector<16x128xf32>
    %153 = arith.addf %151, %152 : vector<16x128xf32>
    %c0_72 = arith.constant 0 : index
    %c0_73 = arith.constant 0 : index
    %c0_74 = arith.constant 0 : index
    %154 = vector.load %arg16[%c0_72, %c0_73, %c0_74] : memref<1x16x128xf32, #tpu.memory_space<vmem>>, vector<1x16x128xf32>
    %155 = vector.shape_cast %154 : vector<1x16x128xf32> to vector<16x128xf32>
    %156 = vector.shape_cast %153 : vector<16x128xf32> to vector<1x16x128xf32>
    tpu.vector_store %arg16[%c0_72, %c0_73, %c0_74], %156 {strides = array<i32>} : memref<1x16x128xf32, #tpu.memory_space<vmem>>, vector<1x16x128xf32>,
    return
  }
  func.func @transform_0(%arg0: i32, %arg1: i32) -> (i32, i32, i32) {
    %c0_i32 = arith.constant 0 : i32
    %c0_i32_0 = arith.constant 0 : i32
    %c0_i32_1 = arith.constant 0 : i32
    return %arg0, %c0_i32, %c0_i32_0 : i32, i32, i32
  }
  func.func @transform_1(%arg0: i32, %arg1: i32) -> (i32, i32, i32) {
    %c0_i32 = arith.constant 0 : i32
    %c0_i32_0 = arith.constant 0 : i32
    %c0_i32_1 = arith.constant 0 : i32
    return %arg0, %c0_i32, %c0_i32_0 : i32, i32, i32
  }
  func.func @transform_2(%arg0: i32, %arg1: i32) -> (i32, i32, i32, i32) {
    %c0_i32 = arith.constant 0 : i32
    %c0_i32_0 = arith.constant 0 : i32
    %c0_i32_1 = arith.constant 0 : i32
    return %arg0, %arg1, %c0_i32, %c0_i32_0 : i32, i32, i32, i32
  }
  func.func @transform_3(%arg0: i32, %arg1: i32) -> (i32, i32, i32, i32) {
    %c0_i32 = arith.constant 0 : i32
    %c0_i32_0 = arith.constant 0 : i32
    %c0_i32_1 = arith.constant 0 : i32
    return %arg0, %arg1, %c0_i32, %c0_i32_0 : i32, i32, i32, i32
  }
  func.func @transform_4(%arg0: i32, %arg1: i32) -> (i32, i32, i32, i32) {
    %c0_i32 = arith.constant 0 : i32
    %c0_i32_0 = arith.constant 0 : i32
    %c0_i32_1 = arith.constant 0 : i32
    return %arg0, %arg1, %c0_i32, %c0_i32_0 : i32, i32, i32, i32
  }
  func.func @transform_5(%arg0: i32, %arg1: i32) -> (i32, i32, i32, i32) {
    %c0_i32 = arith.constant 0 : i32
    %c0_i32_0 = arith.constant 0 : i32
    %c0_i32_1 = arith.constant 0 : i32
    return %arg0, %arg1, %c0_i32, %c0_i32_0 : i32, i32, i32, i32
  }
  func.func @transform_6(%arg0: i32, %arg1: i32) -> (i32, i32, i32, i32) {
    %c0_i32 = arith.constant 0 : i32
    %c0_i32_0 = arith.constant 0 : i32
    %c0_i32_1 = arith.constant 0 : i32
    return %arg0, %arg1, %c0_i32, %c0_i32_0 : i32, i32, i32, i32
  }
  func.func @transform_7(%arg0: i32, %arg1: i32) -> (i32, i32, i32, i32) {
    %c0_i32 = arith.constant 0 : i32
    %c0_i32_0 = arith.constant 0 : i32
    %c0_i32_1 = arith.constant 0 : i32
    return %arg0, %arg1, %c0_i32, %c0_i32_0 : i32, i32, i32, i32
  }
  func.func @transform_8(%arg0: i32, %arg1: i32) -> (i32, i32, i32, i32) {
    %c0_i32 = arith.constant 0 : i32
    %c0_i32_0 = arith.constant 0 : i32
    %c0_i32_1 = arith.constant 0 : i32
    return %arg0, %arg1, %c0_i32, %c0_i32_0 : i32, i32, i32, i32
  }
  func.func @transform_9(%arg0: i32, %arg1: i32) -> (i32, i32, i32, i32) {
    %c0_i32 = arith.constant 0 : i32
    %c0_i32_0 = arith.constant 0 : i32
    %c0_i32_1 = arith.constant 0 : i32
    return %arg0, %arg1, %c0_i32, %c0_i32_0 : i32, i32, i32, i32
  }
  func.func @transform_10(%arg0: i32, %arg1: i32) -> (i32, i32, i32, i32) {
    %c0_i32 = arith.constant 0 : i32
    %c0_i32_0 = arith.constant 0 : i32
    %c0_i32_1 = arith.constant 0 : i32
    return %arg0, %arg1, %c0_i32, %c0_i32_0 : i32, i32, i32, i32
  }
  func.func @transform_11(%arg0: i32, %arg1: i32) -> (i32, i32, i32, i32) {
    %c0_i32 = arith.constant 0 : i32
    %c0_i32_0 = arith.constant 0 : i32
    %c0_i32_1 = arith.constant 0 : i32
    return %arg0, %arg1, %c0_i32, %c0_i32_0 : i32, i32, i32, i32
  }
  func.func @transform_12(%arg0: i32, %arg1: i32) -> (i32, i32, i32, i32) {
    %c0_i32 = arith.constant 0 : i32
    %c0_i32_0 = arith.constant 0 : i32
    %c0_i32_1 = arith.constant 0 : i32
    return %arg0, %arg1, %c0_i32, %c0_i32_0 : i32, i32, i32, i32
  }
  func.func @transform_13(%arg0: i32, %arg1: i32) -> (i32, i32, i32, i32) {
    %c0_i32 = arith.constant 0 : i32
    %c0_i32_0 = arith.constant 0 : i32
    %c0_i32_1 = arith.constant 0 : i32
    return %arg0, %arg1, %c0_i32, %c0_i32_0 : i32, i32, i32, i32
  }
  func.func @transform_14(%arg0: i32, %arg1: i32) -> (i32, i32, i32) {
    %c0_i32 = arith.constant 0 : i32
    %c0_i32_0 = arith.constant 0 : i32
    %c0_i32_1 = arith.constant 0 : i32
    return %arg0, %c0_i32, %c0_i32_0 : i32, i32, i32
  }
}

</mosaic_0001>

<llo_original>
// kernel: trans_mm_fc_forward.3
$region0: #{trans_mm_fc_forward.3}
  #allocation0 [shape = 'u32[]', space=smem, size = 0x4, offset = 0x4, fixed_abs, tag = 'smem constant byte address 0x4 - core index']
  #allocation1 [shape = 'u32[72,128]{1,0:T(1,128)}', space=vmem, size = 0x9000, scoped, tag = 'internal scratch']
  %s0 = inlined_call_operand.vmem [shape: f32[2,16,128], index: 0, kind: input, shape index: {}]
  %s1 = inlined_call_operand.hbm [shape: f32[128,128], index: 1, kind: input, shape index: {}]
  %s2 = inlined_call_operand.hbm [shape: f32[128,128], index: 2, kind: input, shape index: {}]
  %s3 = inlined_call_operand.hbm [shape: f32[1,128], index: 3, kind: input, shape index: {}]
  %s4 = inlined_call_operand.hbm [shape: f32[128,128], index: 4, kind: input, shape index: {}]
  %s5 = inlined_call_operand.hbm [shape: f32[1,128], index: 5, kind: input, shape index: {}]
  %s6 = inlined_call_operand.hbm [shape: f32[128,128], index: 6, kind: input, shape index: {}]
  %s7 = inlined_call_operand.hbm [shape: f32[1,128], index: 7, kind: input, shape index: {}]
  %s8 = inlined_call_operand.vmem [shape: f32[16,128], index: 8, kind: output, shape index: {}]
  %s9 = sld [smem:[#allocation0]]
  $region70: #{trans_mm_fc_forward.3} parent=0
    _
  %s11 = ssub.s32 1, %s9
  %s12 = scalar_select 0, %s11, %s9
  $region1: #{trans_mm_fc_forward.3} parent=0
    #allocation2 [shape = 'u8[65536]{0}', space=vmem, size = 0x10000, scoped, tag = 'input window, operand 1, single buffered']
    #allocation3 [shape = 's32[1]{0}', space=sflag, size = 0x4, scoped, tag = 'scoped memory for trans_mm_fc_forward.3']
    #allocation4 [shape = 'u8[65536]{0}', space=vmem, size = 0x10000, scoped, tag = 'input window, operand 2, single buffered']
    #allocation5 [shape = 's32[1]{0}', space=sflag, size = 0x4, scoped, tag = 'scoped memory for trans_mm_fc_forward.3']
    #allocation6 [shape = 'u8[512]{0}', space=vmem, size = 0x400, scoped, tag = 'input window, operand 3, single buffered']
    #allocation7 [shape = 'u8[65536]{0}', space=vmem, size = 0x10000, scoped, tag = 'input window, operand 4, single buffered']
    #allocation8 [shape = 's32[1]{0}', space=sflag, size = 0x4, scoped, tag = 'scoped memory for trans_mm_fc_forward.3']
    #allocation9 [shape = 'u8[512]{0}', space=vmem, size = 0x400, scoped, tag = 'input window, operand 5, single buffered']
    #allocation10 [shape = 'u8[65536]{0}', space=vmem, size = 0x10000, scoped, tag = 'input window, operand 6, single buffered']
    #allocation11 [shape = 's32[1]{0}', space=sflag, size = 0x4, scoped, tag = 'scoped memory for trans_mm_fc_forward.3']
    #allocation12 [shape = 'u8[512]{0}', space=vmem, size = 0x400, scoped, tag = 'input window, operand 7, single buffered']
    %13 = vsyncpa [#allocation3], 0
    %14 = vsyncpa [#allocation5], 0
    %15 = vsyncpa [#allocation8], 0
    %16 = vsyncpa [#allocation11], 0
    // Predicated region
    $region2: #{trans_mm_fc_forward.3} parent=1 // pred_check
      _
    $region3: #{trans_mm_fc_forward.3} parent=1 // pred_check_branch
      %18 = sbr.rel (0) target = $region5
    $region4: #{trans_mm_fc_forward.3} parent=1 // pred_region
      _
    $region5: #{trans_mm_fc_forward.3} parent=1 // pred_fallthru
      _
    // Predicated region
    $region6: #{trans_mm_fc_forward.3} parent=1 // pred_check
      _
    $region7: #{trans_mm_fc_forward.3} parent=1 // pred_check_branch
      %20 = sbr.rel (0) target = $region9
    $region8: #{trans_mm_fc_forward.3} parent=1 // pred_region
      %22 = vsyncadd [#allocation3], 0
      %s23 = sshll.u32 %s1, 4
      %s24 = int_to_ptr.hbm [resolvable:$true] %s23
      %s25 = sshll.u32 [#allocation2], 4
      %s26 = int_to_ptr.vmem [resolvable:$true] %s25
      %31 = dma.hbm_to_vmem [thread:$0]  %s24, 2048, %s26, [#allocation3], 128, 128, 8
    $region9: #{trans_mm_fc_forward.3} parent=1 // pred_fallthru
      _
    // Predicated region
    $region10: #{trans_mm_fc_forward.3} parent=1 // pred_check
      _
    $region11: #{trans_mm_fc_forward.3} parent=1 // pred_check_branch
      %33 = sbr.rel (0) target = $region13
    $region12: #{trans_mm_fc_forward.3} parent=1 // pred_region
      %35 = vsyncadd [#allocation5], 0
      %s36 = sshll.u32 %s2, 4
      %s37 = int_to_ptr.hbm [resolvable:$true] %s36
      %s38 = sshll.u32 [#allocation4], 4
      %s39 = int_to_ptr.vmem [resolvable:$true] %s38
      %44 = dma.hbm_to_vmem [thread:$0]  %s37, 2048, %s39, [#allocation5], 128, 128, 8
    $region13: #{trans_mm_fc_forward.3} parent=1 // pred_fallthru
      _
    // Predicated region
    $region14: #{trans_mm_fc_forward.3} parent=1 // pred_check
      _
    $region15: #{trans_mm_fc_forward.3} parent=1 // pred_check_branch
      %46 = sbr.rel (0) target = $region17
    $region16: #{trans_mm_fc_forward.3} parent=1 // pred_region
      %48 = vsyncadd [#allocation5], 0
      %s50 = sshll.u32 %s3, 4
      %s51 = int_to_ptr.hbm [resolvable:$true] %s50
      %s52 = sshll.u32 [#allocation6], 4
      %s53 = int_to_ptr.vmem [resolvable:$true] %s52
      %55 = dma.hbm_to_vmem [thread:$0]  %s51, 16, %s53, [#allocation5]
    $region17: #{trans_mm_fc_forward.3} parent=1 // pred_fallthru
      _
    // Predicated region
    $region18: #{trans_mm_fc_forward.3} parent=1 // pred_check
      _
    $region19: #{trans_mm_fc_forward.3} parent=1 // pred_check_branch
      %57 = sbr.rel (0) target = $region21
    $region20: #{trans_mm_fc_forward.3} parent=1 // pred_region
      %59 = vsyncadd [#allocation8], 0
      %s60 = sshll.u32 %s4, 4
      %s61 = int_to_ptr.hbm [resolvable:$true] %s60
      %s62 = sshll.u32 [#allocation7], 4
      %s63 = int_to_ptr.vmem [resolvable:$true] %s62
      %68 = dma.hbm_to_vmem [thread:$0]  %s61, 2048, %s63, [#allocation8], 128, 128, 8
    $region21: #{trans_mm_fc_forward.3} parent=1 // pred_fallthru
      _
    // Predicated region
    $region22: #{trans_mm_fc_forward.3} parent=1 // pred_check
      _
    $region23: #{trans_mm_fc_forward.3} parent=1 // pred_check_branch
      %70 = sbr.rel (0) target = $region25
    $region24: #{trans_mm_fc_forward.3} parent=1 // pred_region
      %72 = vsyncadd [#allocation8], 0
      %s74 = sshll.u32 %s5, 4
      %s75 = int_to_ptr.hbm [resolvable:$true] %s74
      %s76 = sshll.u32 [#allocation9], 4
      %s77 = int_to_ptr.vmem [resolvable:$true] %s76
      %79 = dma.hbm_to_vmem [thread:$0]  %s75, 16, %s77, [#allocation8]
    $region25: #{trans_mm_fc_forward.3} parent=1 // pred_fallthru
      _
    // Predicated region
    $region26: #{trans_mm_fc_forward.3} parent=1 // pred_check
      _
    $region27: #{trans_mm_fc_forward.3} parent=1 // pred_check_branch
      %81 = sbr.rel (0) target = $region29
    $region28: #{trans_mm_fc_forward.3} parent=1 // pred_region
      %83 = vsyncadd [#allocation11], 0
      %s84 = sshll.u32 %s6, 4
      %s85 = int_to_ptr.hbm [resolvable:$true] %s84
      %s86 = sshll.u32 [#allocation10], 4
      %s87 = int_to_ptr.vmem [resolvable:$true] %s86
      %92 = dma.hbm_to_vmem [thread:$0]  %s85, 2048, %s87, [#allocation11], 128, 128, 8
    $region29: #{trans_mm_fc_forward.3} parent=1 // pred_fallthru
      _
    // Predicated region
    $region30: #{trans_mm_fc_forward.3} parent=1 // pred_check
      _
    $region31: #{trans_mm_fc_forward.3} parent=1 // pred_check_branch
      %94 = sbr.rel (0) target = $region33
    $region32: #{trans_mm_fc_forward.3} parent=1 // pred_region
      %96 = vsyncadd [#allocation11], 0
      %s98 = sshll.u32 %s7, 4
      %s99 = int_to_ptr.hbm [resolvable:$true] %s98
      %s100 = sshll.u32 [#allocation12], 4
      %s101 = int_to_ptr.vmem [resolvable:$true] %s100
      %103 = dma.hbm_to_vmem [thread:$0]  %s99, 16, %s101, [#allocation11]
    $region33: #{trans_mm_fc_forward.3} parent=1 // pred_fallthru
      _
    // Predicated region
    $region34: #{trans_mm_fc_forward.3} parent=1 // pred_check
      _
    $region35: #{trans_mm_fc_forward.3} parent=1 // pred_check_branch
      %105 = sbr.rel (0) target = $region37
    $region36: #{trans_mm_fc_forward.3} parent=1 // pred_region
      %107 = dma.done [#allocation3], 2048
    $region37: #{trans_mm_fc_forward.3} parent=1 // pred_fallthru
      _
    // Predicated region
    $region38: #{trans_mm_fc_forward.3} parent=1 // pred_check
      _
    $region39: #{trans_mm_fc_forward.3} parent=1 // pred_check_branch
      %109 = sbr.rel (0) target = $region41
    $region40: #{trans_mm_fc_forward.3} parent=1 // pred_region
      %111 = dma.done [#allocation5], 2048
    $region41: #{trans_mm_fc_forward.3} parent=1 // pred_fallthru
      _
    // Predicated region
    $region42: #{trans_mm_fc_forward.3} parent=1 // pred_check
      _
    $region43: #{trans_mm_fc_forward.3} parent=1 // pred_check_branch
      %113 = sbr.rel (0) target = $region45
    $region44: #{trans_mm_fc_forward.3} parent=1 // pred_region
      %115 = dma.done [#allocation5], 16
    $region45: #{trans_mm_fc_forward.3} parent=1 // pred_fallthru
      _
    // Predicated region
    $region46: #{trans_mm_fc_forward.3} parent=1 // pred_check
      _
    $region47: #{trans_mm_fc_forward.3} parent=1 // pred_check_branch
      %117 = sbr.rel (0) target = $region49
    $region48: #{trans_mm_fc_forward.3} parent=1 // pred_region
      %119 = dma.done [#allocation8], 2048
    $region49: #{trans_mm_fc_forward.3} parent=1 // pred_fallthru
      _
    // Predicated region
    $region50: #{trans_mm_fc_forward.3} parent=1 // pred_check
      _
    $region51: #{trans_mm_fc_forward.3} parent=1 // pred_check_branch
      %121 = sbr.rel (0) target = $region53
    $region52: #{trans_mm_fc_forward.3} parent=1 // pred_region
      %123 = dma.done [#allocation8], 16
    $region53: #{trans_mm_fc_forward.3} parent=1 // pred_fallthru
      _
    // Predicated region
    $region54: #{trans_mm_fc_forward.3} parent=1 // pred_check
      _
    $region55: #{trans_mm_fc_forward.3} parent=1 // pred_check_branch
      %125 = sbr.rel (0) target = $region57
    $region56: #{trans_mm_fc_forward.3} parent=1 // pred_region
      %127 = dma.done [#allocation11], 2048
    $region57: #{trans_mm_fc_forward.3} parent=1 // pred_fallthru
      _
    // Predicated region
    $region58: #{trans_mm_fc_forward.3} parent=1 // pred_check
      _
    $region59: #{trans_mm_fc_forward.3} parent=1 // pred_check_branch
      %129 = sbr.rel (0) target = $region61
    $region60: #{trans_mm_fc_forward.3} parent=1 // pred_region
      %131 = dma.done [#allocation11], 16
    $region61: #{trans_mm_fc_forward.3} parent=1 // pred_fallthru
      _
    %v132 = vld [vmem:[%s0] sm:$0xff]
    %v133 = vld [vmem:[%s0 + $0x8] sm:$0xff]
    %v134 = vld [vmem:[#allocation2] sm:$0xff]
    %v135 = vld [vmem:[#allocation2 + $0x8] sm:$0xff]
    %v136 = vld [vmem:[#allocation2 + $0x10] sm:$0xff]
    %v137 = vld [vmem:[#allocation2 + $0x18] sm:$0xff]
    %v138 = vld [vmem:[#allocation2 + $0x20] sm:$0xff]
    %v139 = vld [vmem:[#allocation2 + $0x28] sm:$0xff]
    %v140 = vld [vmem:[#allocation2 + $0x30] sm:$0xff]
    %v141 = vld [vmem:[#allocation2 + $0x38] sm:$0xff]
    %v142 = vld [vmem:[#allocation2 + $0x40] sm:$0xff]
    %v143 = vld [vmem:[#allocation2 + $0x48] sm:$0xff]
    %v144 = vld [vmem:[#allocation2 + $0x50] sm:$0xff]
    %v145 = vld [vmem:[#allocation2 + $0x58] sm:$0xff]
    %v146 = vld [vmem:[#allocation2 + $0x60] sm:$0xff]
    %v147 = vld [vmem:[#allocation2 + $0x68] sm:$0xff]
    %v148 = vld [vmem:[#allocation2 + $0x70] sm:$0xff]
    %v149 = vld [vmem:[#allocation2 + $0x78] sm:$0xff]
    %s150 = scalar_lea.vmem %s0, 16
    %v151 = vld [vmem:[%s150] sm:$0xff]
    %v152 = vld [vmem:[%s150 + $0x8] sm:$0xff]
    %v153 = vld [vmem:[#allocation4] sm:$0xff]
    %v154 = vld [vmem:[#allocation4 + $0x8] sm:$0xff]
    %v155 = vld [vmem:[#allocation4 + $0x10] sm:$0xff]
    %v156 = vld [vmem:[#allocation4 + $0x18] sm:$0xff]
    %v157 = vld [vmem:[#allocation4 + $0x20] sm:$0xff]
    %v158 = vld [vmem:[#allocation4 + $0x28] sm:$0xff]
    %v159 = vld [vmem:[#allocation4 + $0x30] sm:$0xff]
    %v160 = vld [vmem:[#allocation4 + $0x38] sm:$0xff]
    %v161 = vld [vmem:[#allocation4 + $0x40] sm:$0xff]
    %v162 = vld [vmem:[#allocation4 + $0x48] sm:$0xff]
    %v163 = vld [vmem:[#allocation4 + $0x50] sm:$0xff]
    %v164 = vld [vmem:[#allocation4 + $0x58] sm:$0xff]
    %v165 = vld [vmem:[#allocation4 + $0x60] sm:$0xff]
    %v166 = vld [vmem:[#allocation4 + $0x68] sm:$0xff]
    %v167 = vld [vmem:[#allocation4 + $0x70] sm:$0xff]
    %v168 = vld [vmem:[#allocation4 + $0x78] sm:$0xff]
    %169 = vmatpush.msra.mxu0 %v168
    %170 = vmatpush.msra.mxu0 %v167
    %171 = vmatpush.msra.mxu0 %v166
    %172 = vmatpush.msra.mxu0 %v165
    %173 = vmatpush.msra.mxu0 %v164
    %174 = vmatpush.msra.mxu0 %v163
    %175 = vmatpush.msra.mxu0 %v162
    %176 = vmatpush.msra.mxu0 %v161
    %177 = vmatpush.msra.mxu0 %v160
    %178 = vmatpush.msra.mxu0 %v159
    %179 = vmatpush.msra.mxu0 %v158
    %180 = vmatpush.msra.mxu0 %v157
    %181 = vmatpush.msra.mxu0 %v156
    %182 = vmatpush.msra.mxu0 %v155
    %183 = vmatpush.msra.mxu0 %v154
    %184 = vmatpush.msra.mxu0 %v153
    %185 = vmatmul.f32.gmra.mxu0 %v151
    %v186 = vpop.f32.mrf.mxu0
    %v187 = vadd.f32 0.0, %v186
    %188 = vmatmul.f32.gmra.mxu0 %v152
    %v189 = vpop.f32.mrf.mxu0
    %v190 = vadd.f32 0.0, %v189
    %191 = vdwg.mxu0
    %192 = vmatpush.msra.mxu0 %v149
    %193 = vmatpush.msra.mxu0 %v148
    %194 = vmatpush.msra.mxu0 %v147
    %195 = vmatpush.msra.mxu0 %v146
    %196 = vmatpush.msra.mxu0 %v145
    %197 = vmatpush.msra.mxu0 %v144
    %198 = vmatpush.msra.mxu0 %v143
    %199 = vmatpush.msra.mxu0 %v142
    %200 = vmatpush.msra.mxu0 %v141
    %201 = vmatpush.msra.mxu0 %v140
    %202 = vmatpush.msra.mxu0 %v139
    %203 = vmatpush.msra.mxu0 %v138
    %204 = vmatpush.msra.mxu0 %v137
    %205 = vmatpush.msra.mxu0 %v136
    %206 = vmatpush.msra.mxu0 %v135
    %207 = vmatpush.msra.mxu0 %v134
    %208 = vmatmul.f32.gmra.mxu0 %v132
    %v209 = vpop.f32.mrf.mxu0
    %v210 = vadd.f32 %v187, %v209
    %211 = vmatmul.f32.gmra.mxu0 %v133
    %v212 = vpop.f32.mrf.mxu0
    %v213 = vadd.f32 %v190, %v212
    %214 = vdwg.mxu0
    %v215 = vld [vmem:[#allocation6] sm:$0x1]
    %v217 = vperm.slane %v215, 0
    %v219 = vadd.f32 %v210, %v217
    %v220 = vadd.f32 %v213, %v217
    %vm221 = vcmp.gt.f32.partialorder %v219, 0.0
    %vm222 = vcmp.gt.f32.partialorder %v220, 0.0
    %v223 = vmul.f32 %v219, 0.01
    %v224 = vmul.f32 %v220, 0.01
    %v225 = vsel %vm221, %v219, %v223
    %v226 = vsel %vm222, %v220, %v224
    %v227 = vld [vmem:[#allocation7] sm:$0xff]
    %v228 = vld [vmem:[#allocation7 + $0x8] sm:$0xff]
    %v229 = vld [vmem:[#allocation7 + $0x10] sm:$0xff]
    %v230 = vld [vmem:[#allocation7 + $0x18] sm:$0xff]
    %v231 = vld [vmem:[#allocation7 + $0x20] sm:$0xff]
    %v232 = vld [vmem:[#allocation7 + $0x28] sm:$0xff]
    %v233 = vld [vmem:[#allocation7 + $0x30] sm:$0xff]
    %v234 = vld [vmem:[#allocation7 + $0x38] sm:$0xff]
    %v235 = vld [vmem:[#allocation7 + $0x40] sm:$0xff]
    %v236 = vld [vmem:[#allocation7 + $0x48] sm:$0xff]
    %v237 = vld [vmem:[#allocation7 + $0x50] sm:$0xff]
    %v238 = vld [vmem:[#allocation7 + $0x58] sm:$0xff]
    %v239 = vld [vmem:[#allocation7 + $0x60] sm:$0xff]
    %v240 = vld [vmem:[#allocation7 + $0x68] sm:$0xff]
    %v241 = vld [vmem:[#allocation7 + $0x70] sm:$0xff]
    %v242 = vld [vmem:[#allocation7 + $0x78] sm:$0xff]
    %v243 = vld [vmem:[#allocation9] sm:$0x1]
    %v245 = vperm.slane %v243, 0
    %247 = vmatpush.msra.mxu0 %v242
    %248 = vmatpush.msra.mxu0 %v241
    %249 = vmatpush.msra.mxu0 %v240
    %250 = vmatpush.msra.mxu0 %v239
    %251 = vmatpush.msra.mxu0 %v238
    %252 = vmatpush.msra.mxu0 %v237
    %253 = vmatpush.msra.mxu0 %v236
    %254 = vmatpush.msra.mxu0 %v235
    %255 = vmatpush.msra.mxu0 %v234
    %256 = vmatpush.msra.mxu0 %v233
    %257 = vmatpush.msra.mxu0 %v232
    %258 = vmatpush.msra.mxu0 %v231
    %259 = vmatpush.msra.mxu0 %v230
    %260 = vmatpush.msra.mxu0 %v229
    %261 = vmatpush.msra.mxu0 %v228
    %262 = vmatpush.msra.mxu0 %v227
    %263 = vmatmul.f32.gmra.mxu0 %v225
    %v264 = vpop.f32.mrf.mxu0
    %v265 = vadd.f32 %v245, %v264
    %266 = vmatmul.f32.gmra.mxu0 %v226
    %v267 = vpop.f32.mrf.mxu0
    %v268 = vadd.f32 %v245, %v267
    %269 = vdwg.mxu0
    %v270 = vld [vmem:[#allocation10] sm:$0xff]
    %v271 = vld [vmem:[#allocation10 + $0x8] sm:$0xff]
    %v272 = vld [vmem:[#allocation10 + $0x10] sm:$0xff]
    %v273 = vld [vmem:[#allocation10 + $0x18] sm:$0xff]
    %v274 = vld [vmem:[#allocation10 + $0x20] sm:$0xff]
    %v275 = vld [vmem:[#allocation10 + $0x28] sm:$0xff]
    %v276 = vld [vmem:[#allocation10 + $0x30] sm:$0xff]
    %v277 = vld [vmem:[#allocation10 + $0x38] sm:$0xff]
    %v278 = vld [vmem:[#allocation10 + $0x40] sm:$0xff]
    %v279 = vld [vmem:[#allocation10 + $0x48] sm:$0xff]
    %v280 = vld [vmem:[#allocation10 + $0x50] sm:$0xff]
    %v281 = vld [vmem:[#allocation10 + $0x58] sm:$0xff]
    %v282 = vld [vmem:[#allocation10 + $0x60] sm:$0xff]
    %v283 = vld [vmem:[#allocation10 + $0x68] sm:$0xff]
    %v284 = vld [vmem:[#allocation10 + $0x70] sm:$0xff]
    %v285 = vld [vmem:[#allocation10 + $0x78] sm:$0xff]
    %v286 = vld [vmem:[#allocation12] sm:$0x1]
    %v288 = vperm.slane %v286, 0
    %290 = vmatpush.msra.mxu0 %v285
    %291 = vmatpush.msra.mxu0 %v284
    %292 = vmatpush.msra.mxu0 %v283
    %293 = vmatpush.msra.mxu0 %v282
    %294 = vmatpush.msra.mxu0 %v281
    %295 = vmatpush.msra.mxu0 %v280
    %296 = vmatpush.msra.mxu0 %v279
    %297 = vmatpush.msra.mxu0 %v278
    %298 = vmatpush.msra.mxu0 %v277
    %299 = vmatpush.msra.mxu0 %v276
    %300 = vmatpush.msra.mxu0 %v275
    %301 = vmatpush.msra.mxu0 %v274
    %302 = vmatpush.msra.mxu0 %v273
    %303 = vmatpush.msra.mxu0 %v272
    %304 = vmatpush.msra.mxu0 %v271
    %305 = vmatpush.msra.mxu0 %v270
    %306 = vmatmul.f32.gmra.mxu0 %v265
    %v307 = vpop.f32.mrf.mxu0
    %v308 = vadd.f32 %v288, %v307
    %309 = vmatmul.f32.gmra.mxu0 %v268
    %v310 = vpop.f32.mrf.mxu0
    %v311 = vadd.f32 %v288, %v310
    %312 = vdwg.mxu0
    %313 = vst [vmem:[%s8] sm:$0xff] %v308
    %314 = vst [vmem:[%s8 + $0x8] sm:$0xff] %v311
    // Predicated region
    $region62: #{trans_mm_fc_forward.3} parent=1 // pred_check
      _
    $region63: #{trans_mm_fc_forward.3} parent=1 // pred_check_branch
      %316 = sbr.rel (0) target = $region65
    $region64: #{trans_mm_fc_forward.3} parent=1 // pred_region
      _
    $region65: #{trans_mm_fc_forward.3} parent=1 // pred_fallthru
      _
    // Predicated region
    $region66: #{trans_mm_fc_forward.3} parent=1 // pred_check
      _
    $region67: #{trans_mm_fc_forward.3} parent=1 // pred_check_branch
      %318 = sbr.rel (0) target = $region69
    $region68: #{trans_mm_fc_forward.3} parent=1 // pred_region
      _
    $region69: #{trans_mm_fc_forward.3} parent=1 // pred_fallthru
      _
    %319 = vsyncpa [#allocation3], 1
    %320 = vsyncpa [#allocation5], 1
    %321 = vsyncpa [#allocation8], 1
    %322 = vsyncpa [#allocation11], 1

// kernel: trans_mm_fc_forward.2
$region0: #{trans_mm_fc_forward.2}
  #allocation0 [shape = 'u32[]', space=smem, size = 0x4, offset = 0x4, fixed_abs, tag = 'smem constant byte address 0x4 - core index']
  #allocation1 [shape = 'u32[72,128]{1,0:T(1,128)}', space=vmem, size = 0x9000, scoped, tag = 'internal scratch']
  %s0 = inlined_call_operand.vmem [shape: f32[2,16,384], index: 0, kind: input, shape index: {}]
  %s1 = inlined_call_operand.hbm [shape: f32[2,384,128], index: 1, kind: input, shape index: {}]
  %s2 = inlined_call_operand.hbm [shape: bf16[2,6,128,384], index: 2, kind: input, shape index: {}]
  %s3 = inlined_call_operand.hbm [shape: f32[2,6,1,384], index: 3, kind: input, shape index: {}]
  %s4 = inlined_call_operand.hbm [shape: bf16[2,6,128,128], index: 4, kind: input, shape index: {}]
  %s5 = inlined_call_operand.hbm [shape: f32[2,6,1,128], index: 5, kind: input, shape index: {}]
  %s6 = inlined_call_operand.hbm [shape: f32[2,6,1,128], index: 6, kind: input, shape index: {}]
  %s7 = inlined_call_operand.hbm [shape: f32[2,6,1,128], index: 7, kind: input, shape index: {}]
  %s8 = inlined_call_operand.hbm [shape: bf16[2,6,128,2048], index: 8, kind: input, shape index: {}]
  %s9 = inlined_call_operand.hbm [shape: f32[2,6,1,2048], index: 9, kind: input, shape index: {}]
  %s10 = inlined_call_operand.hbm [shape: bf16[2,6,2048,128], index: 10, kind: input, shape index: {}]
  %s11 = inlined_call_operand.hbm [shape: f32[2,6,1,128], index: 11, kind: input, shape index: {}]
  %s12 = inlined_call_operand.hbm [shape: f32[2,6,1,128], index: 12, kind: input, shape index: {}]
  %s13 = inlined_call_operand.hbm [shape: f32[2,6,1,128], index: 13, kind: input, shape index: {}]
  %s14 = inlined_call_operand.vmem [shape: f32[2,16,128], index: 14, kind: output, shape index: {}]
  %s15 = sld [smem:[#allocation0]]
  $region145: #{trans_mm_fc_forward.2} parent=0
    _
  %s17 = ssub.s32 1, %s15
  %s18 = scalar_select 0, %s17, %s15
  $region1: #{trans_mm_fc_forward.2} parent=0
    #allocation2 [shape = 'u8[393216]{0}', space=vmem, size = 0x60000, scoped, tag = 'input window, operand 1']
    #allocation3 [shape = 's32[2]{0}', space=sflag, size = 0x8, scoped, tag = 'scoped memory for trans_mm_fc_forward.2']
    #allocation4 [shape = 'u8[196608]{0}', space=vmem, size = 0x30000, scoped, tag = 'input window, operand 2']
    #allocation5 [shape = 's32[2]{0}', space=sflag, size = 0x8, scoped, tag = 'scoped memory for trans_mm_fc_forward.2']
    #allocation6 [shape = 'u8[3072]{0}', space=vmem, size = 0xc00, scoped, tag = 'input window, operand 3']
    #allocation7 [shape = 'u8[65536]{0}', space=vmem, size = 0x10000, scoped, tag = 'input window, operand 4']
    #allocation8 [shape = 's32[2]{0}', space=sflag, size = 0x8, scoped, tag = 'scoped memory for trans_mm_fc_forward.2']
    #allocation9 [shape = 'u8[1024]{0}', space=vmem, size = 0x400, scoped, tag = 'input window, operand 5']
    #allocation10 [shape = 'u8[1024]{0}', space=vmem, size = 0x400, scoped, tag = 'input window, operand 6']
    #allocation11 [shape = 's32[2]{0}', space=sflag, size = 0x8, scoped, tag = 'scoped memory for trans_mm_fc_forward.2']
    #allocation12 [shape = 'u8[1024]{0}', space=vmem, size = 0x400, scoped, tag = 'input window, operand 7']
    #allocation13 [shape = 'u8[1048576]{0}', space=vmem, size = 0x100000, scoped, tag = 'input window, operand 8']
    #allocation14 [shape = 's32[2]{0}', space=sflag, size = 0x8, scoped, tag = 'scoped memory for trans_mm_fc_forward.2']
    #allocation15 [shape = 'u8[16384]{0}', space=vmem, size = 0x4000, scoped, tag = 'input window, operand 9']
    #allocation16 [shape = 'u8[1048576]{0}', space=vmem, size = 0x100000, scoped, tag = 'input window, operand 10']
    #allocation17 [shape = 's32[2]{0}', space=sflag, size = 0x8, scoped, tag = 'scoped memory for trans_mm_fc_forward.2']
    #allocation18 [shape = 'u8[1024]{0}', space=vmem, size = 0x400, scoped, tag = 'input window, operand 11']
    #allocation19 [shape = 'u8[1024]{0}', space=vmem, size = 0x400, scoped, tag = 'input window, operand 12']
    #allocation20 [shape = 's32[2]{0}', space=sflag, size = 0x8, scoped, tag = 'scoped memory for trans_mm_fc_forward.2']
    #allocation21 [shape = 'u8[1024]{0}', space=vmem, size = 0x400, scoped, tag = 'input window, operand 13']
    %19 = vsyncpa [#allocation3], 0
    %s20 = scalar_lea.sflag [#allocation3], 1
    %21 = vsyncpa %s20, 0
    %22 = vsyncpa [#allocation5], 0
    %s23 = scalar_lea.sflag [#allocation5], 1
    %24 = vsyncpa %s23, 0
    %25 = vsyncpa [#allocation8], 0
    %s26 = scalar_lea.sflag [#allocation8], 1
    %27 = vsyncpa %s26, 0
    %28 = vsyncpa [#allocation11], 0
    %s29 = scalar_lea.sflag [#allocation11], 1
    %30 = vsyncpa %s29, 0
    %31 = vsyncpa [#allocation14], 0
    %s32 = scalar_lea.sflag [#allocation14], 1
    %33 = vsyncpa %s32, 0
    %34 = vsyncpa [#allocation17], 0
    %s35 = scalar_lea.sflag [#allocation17], 1
    %36 = vsyncpa %s35, 0
    %37 = vsyncpa [#allocation20], 0
    %s38 = scalar_lea.sflag [#allocation20], 1
    %39 = vsyncpa %s38, 0
    loop: start=0, step=1, limit=14
    $region2: #{trans_mm_fc_forward.2} parent=1 // loop_pre_header
      _
    $region3: #{trans_mm_fc_forward.2} parent=1 // loop_header
      %s41 = sphi 0, %s45
      %p42 = scmp.ge.s32.totalorder %s41, 14
      %s48 = sphi 0, %s60
      %s49 = sphi 0, %s56
      %s50 = sphi 0, %s48
      %s51 = sphi 0, %s49
      %s52 = sphi 0, %s50
      %s53 = sphi 0, %s51
      %s63 = sphi 0, %s65
      %s66 = sphi 0, %s63
      %s67 = sphi 0, %s66
      %s83 = sphi 0, %s67
      %s89 = sphi 0, %s91
      %s92 = sphi 0, %s89
      %s93 = sphi 0, %s92
      %s109 = sphi 0, %s93
      %s117 = sphi 0, %s119
      %s120 = sphi 0, %s117
      %s121 = sphi 0, %s120
      %s137 = sphi 0, %s121
      %s145 = sphi 0, %s147
      %s148 = sphi 0, %s145
      %s149 = sphi 0, %s148
      %s165 = sphi 0, %s149
      %s173 = sphi 0, %s175
      %s176 = sphi 0, %s173
      %s177 = sphi 0, %s176
      %s193 = sphi 0, %s177
      %s201 = sphi 0, %s203
      %s204 = sphi 0, %s201
      %s205 = sphi 0, %s204
      %s221 = sphi 0, %s205
      %s229 = sphi 0, %s231
      %s232 = sphi 0, %s229
      %s233 = sphi 0, %s232
      %s249 = sphi 0, %s233
      %s257 = sphi 0, %s259
      %s260 = sphi 0, %s257
      %s261 = sphi 0, %s260
      %s277 = sphi 0, %s261
      %s285 = sphi 0, %s287
      %s288 = sphi 0, %s285
      %s289 = sphi 0, %s288
      %s305 = sphi 0, %s289
      %s313 = sphi 0, %s315
      %s316 = sphi 0, %s313
      %s317 = sphi 0, %s316
      %s333 = sphi 0, %s317
      %s341 = sphi 0, %s343
      %s344 = sphi 0, %s341
      %s345 = sphi 0, %s344
      %s361 = sphi 0, %s345
      %s369 = sphi 0, %s371
      %s372 = sphi 0, %s369
      %s373 = sphi 0, %s372
      %s389 = sphi 0, %s373
      %s397 = sphi 0, %s399
      %s400 = sphi 0, %s397
      %s401 = sphi 0, %s400
      %s417 = sphi 0, %s401
      %s425 = sphi 0, %s427
      %s428 = sphi 0, %s425
      %s429 = sphi 0, %s428
      %s445 = sphi 0, %s429
      %s451 = sphi 0, %s453
      %s454 = sphi 0, %s451
      %s455 = sphi 0, %s454
      %s471 = sphi 0, %s455
    $region4: #{trans_mm_fc_forward.2} parent=1 // loop_header_branch
      %44 = sbr.rel (%p42) target = $region8
    $region5: #{trans_mm_fc_forward.2} parent=1 // loop_body
      %s46 = ssub.s32 %s41, 1
      %s47 = ssub.s32 %s41, 2
      %s54 = sadd.s32 1, %s49
      %p55 = scmp.ge.s32.totalorder %s54, 6
      %s56 = scalar_select %p55, 0, %s54
      %s57 = sadd.s32 1, %s48
      %s58 = scalar_select %p55, %s57, %s48
      %p59 = scmp.ge.s32.totalorder %s58, 2
      %s60 = scalar_select %p59, 0, %s58
      %s61 = ssub.s32 %s48, %s60
      %p62 = scmp.eq.s32.totalorder %s61, 0
      %s64 = sadd.s32 %s63, 1
      %s65 = scalar_select %p62, %s63, %s64
      %p68 = pneg %p62
      %p69 = scmp.eq.s32.totalorder %s41, 11
      %p70 = por %p68, %p69
      %p71 = scmp.ne.s32.totalorder %s63, %s66
      %p72 = scmp.eq.s32.totalorder %s41, 0
      %p73 = por %p71, %p72
      %p74 = scmp.ne.s32.totalorder %s63, %s66
      %p75 = scmp.eq.s32.totalorder %s46, 11
      %p76 = por %p74, %p75
      %p77 = scmp.ne.s32.totalorder %s66, %s67
      %p78 = scmp.eq.s32.totalorder %s46, 0
      %p79 = por %p77, %p78
      %p80 = scmp.ne.s32.totalorder %s66, %s67
      %p81 = scmp.eq.s32.totalorder %s47, 11
      %p82 = por %p80, %p81
      %p84 = scmp.ne.s32.totalorder %s67, %s83
      %p85 = scmp.eq.s32.totalorder %s47, 0
      %p86 = por %p84, %p85
      %s87 = ssub.s32 %s48, %s60
      %p88 = scmp.eq.s32.totalorder %s87, 0
      %s90 = sadd.s32 %s89, 1
      %s91 = scalar_select %p88, %s89, %s90
      %p94 = pneg %p88
      %p95 = scmp.eq.s32.totalorder %s41, 11
      %p96 = por %p94, %p95
      %p97 = scmp.ne.s32.totalorder %s89, %s92
      %p98 = scmp.eq.s32.totalorder %s41, 0
      %p99 = por %p97, %p98
      %p100 = scmp.ne.s32.totalorder %s89, %s92
      %p101 = scmp.eq.s32.totalorder %s46, 11
      %p102 = por %p100, %p101
      %p103 = scmp.ne.s32.totalorder %s92, %s93
      %p104 = scmp.eq.s32.totalorder %s46, 0
      %p105 = por %p103, %p104
      %p106 = scmp.ne.s32.totalorder %s92, %s93
      %p107 = scmp.eq.s32.totalorder %s47, 11
      %p108 = por %p106, %p107
      %p110 = scmp.ne.s32.totalorder %s93, %s109
      %p111 = scmp.eq.s32.totalorder %s47, 0
      %p112 = por %p110, %p111
      %s113 = ssub.s32 %s48, %s60
      %s114 = ssub.s32 %s49, %s56
      %s115 = sor.u32 %s113, %s114
      %p116 = scmp.eq.s32.totalorder %s115, 0
      %s118 = sadd.s32 %s117, 1
      %s119 = scalar_select %p116, %s117, %s118
      %p122 = pneg %p116
      %p123 = scmp.eq.s32.totalorder %s41, 11
      %p124 = por %p122, %p123
      %p125 = scmp.ne.s32.totalorder %s117, %s120
      %p126 = scmp.eq.s32.totalorder %s41, 0
      %p127 = por %p125, %p126
      %p128 = scmp.ne.s32.totalorder %s117, %s120
      %p129 = scmp.eq.s32.totalorder %s46, 11
      %p130 = por %p128, %p129
      %p131 = scmp.ne.s32.totalorder %s120, %s121
      %p132 = scmp.eq.s32.totalorder %s46, 0
      %p133 = por %p131, %p132
      %p134 = scmp.ne.s32.totalorder %s120, %s121
      %p135 = scmp.eq.s32.totalorder %s47, 11
      %p136 = por %p134, %p135
      %p138 = scmp.ne.s32.totalorder %s121, %s137
      %p139 = scmp.eq.s32.totalorder %s47, 0
      %p140 = por %p138, %p139
      %s141 = ssub.s32 %s48, %s60
      %s142 = ssub.s32 %s49, %s56
      %s143 = sor.u32 %s141, %s142
      %p144 = scmp.eq.s32.totalorder %s143, 0
      %s146 = sadd.s32 %s145, 1
      %s147 = scalar_select %p144, %s145, %s146
      %p150 = pneg %p144
      %p151 = scmp.eq.s32.totalorder %s41, 11
      %p152 = por %p150, %p151
      %p153 = scmp.ne.s32.totalorder %s145, %s148
      %p154 = scmp.eq.s32.totalorder %s41, 0
      %p155 = por %p153, %p154
      %p156 = scmp.ne.s32.totalorder %s145, %s148
      %p157 = scmp.eq.s32.totalorder %s46, 11
      %p158 = por %p156, %p157
      %p159 = scmp.ne.s32.totalorder %s148, %s149
      %p160 = scmp.eq.s32.totalorder %s46, 0
      %p161 = por %p159, %p160
      %p162 = scmp.ne.s32.totalorder %s148, %s149
      %p163 = scmp.eq.s32.totalorder %s47, 11
      %p164 = por %p162, %p163
      %p166 = scmp.ne.s32.totalorder %s149, %s165
      %p167 = scmp.eq.s32.totalorder %s47, 0
      %p168 = por %p166, %p167
      %s169 = ssub.s32 %s48, %s60
      %s170 = ssub.s32 %s49, %s56
      %s171 = sor.u32 %s169, %s170
      %p172 = scmp.eq.s32.totalorder %s171, 0
      %s174 = sadd.s32 %s173, 1
      %s175 = scalar_select %p172, %s173, %s174
      %p178 = pneg %p172
      %p179 = scmp.eq.s32.totalorder %s41, 11
      %p180 = por %p178, %p179
      %p181 = scmp.ne.s32.totalorder %s173, %s176
      %p182 = scmp.eq.s32.totalorder %s41, 0
      %p183 = por %p181, %p182
      %p184 = scmp.ne.s32.totalorder %s173, %s176
      %p185 = scmp.eq.s32.totalorder %s46, 11
      %p186 = por %p184, %p185
      %p187 = scmp.ne.s32.totalorder %s176, %s177
      %p188 = scmp.eq.s32.totalorder %s46, 0
      %p189 = por %p187, %p188
      %p190 = scmp.ne.s32.totalorder %s176, %s177
      %p191 = scmp.eq.s32.totalorder %s47, 11
      %p192 = por %p190, %p191
      %p194 = scmp.ne.s32.totalorder %s177, %s193
      %p195 = scmp.eq.s32.totalorder %s47, 0
      %p196 = por %p194, %p195
      %s197 = ssub.s32 %s48, %s60
      %s198 = ssub.s32 %s49, %s56
      %s199 = sor.u32 %s197, %s198
      %p200 = scmp.eq.s32.totalorder %s199, 0
      %s202 = sadd.s32 %s201, 1
      %s203 = scalar_select %p200, %s201, %s202
      %p206 = pneg %p200
      %p207 = scmp.eq.s32.totalorder %s41, 11
      %p208 = por %p206, %p207
      %p209 = scmp.ne.s32.totalorder %s201, %s204
      %p210 = scmp.eq.s32.totalorder %s41, 0
      %p211 = por %p209, %p210
      %p212 = scmp.ne.s32.totalorder %s201, %s204
      %p213 = scmp.eq.s32.totalorder %s46, 11
      %p214 = por %p212, %p213
      %p215 = scmp.ne.s32.totalorder %s204, %s205
      %p216 = scmp.eq.s32.totalorder %s46, 0
      %p217 = por %p215, %p216
      %p218 = scmp.ne.s32.totalorder %s204, %s205
      %p219 = scmp.eq.s32.totalorder %s47, 11
      %p220 = por %p218, %p219
      %p222 = scmp.ne.s32.totalorder %s205, %s221
      %p223 = scmp.eq.s32.totalorder %s47, 0
      %p224 = por %p222, %p223
      %s225 = ssub.s32 %s48, %s60
      %s226 = ssub.s32 %s49, %s56
      %s227 = sor.u32 %s225, %s226
      %p228 = scmp.eq.s32.totalorder %s227, 0
      %s230 = sadd.s32 %s229, 1
      %s231 = scalar_select %p228, %s229, %s230
      %p234 = pneg %p228
      %p235 = scmp.eq.s32.totalorder %s41, 11
      %p236 = por %p234, %p235
      %p237 = scmp.ne.s32.totalorder %s229, %s232
      %p238 = scmp.eq.s32.totalorder %s41, 0
      %p239 = por %p237, %p238
      %p240 = scmp.ne.s32.totalorder %s229, %s232
      %p241 = scmp.eq.s32.totalorder %s46, 11
      %p242 = por %p240, %p241
      %p243 = scmp.ne.s32.totalorder %s232, %s233
      %p244 = scmp.eq.s32.totalorder %s46, 0
      %p245 = por %p243, %p244
      %p246 = scmp.ne.s32.totalorder %s232, %s233
      %p247 = scmp.eq.s32.totalorder %s47, 11
      %p248 = por %p246, %p247
      %p250 = scmp.ne.s32.totalorder %s233, %s249
      %p251 = scmp.eq.s32.totalorder %s47, 0
      %p252 = por %p250, %p251
      %s253 = ssub.s32 %s48, %s60
      %s254 = ssub.s32 %s49, %s56
      %s255 = sor.u32 %s253, %s254
      %p256 = scmp.eq.s32.totalorder %s255, 0
      %s258 = sadd.s32 %s257, 1
      %s259 = scalar_select %p256, %s257, %s258
      %p262 = pneg %p256
      %p263 = scmp.eq.s32.totalorder %s41, 11
      %p264 = por %p262, %p263
      %p265 = scmp.ne.s32.totalorder %s257, %s260
      %p266 = scmp.eq.s32.totalorder %s41, 0
      %p267 = por %p265, %p266
      %p268 = scmp.ne.s32.totalorder %s257, %s260
      %p269 = scmp.eq.s32.totalorder %s46, 11
      %p270 = por %p268, %p269
      %p271 = scmp.ne.s32.totalorder %s260, %s261
      %p272 = scmp.eq.s32.totalorder %s46, 0
      %p273 = por %p271, %p272
      %p274 = scmp.ne.s32.totalorder %s260, %s261
      %p275 = scmp.eq.s32.totalorder %s47, 11
      %p276 = por %p274, %p275
      %p278 = scmp.ne.s32.totalorder %s261, %s277
      %p279 = scmp.eq.s32.totalorder %s47, 0
      %p280 = por %p278, %p279
      %s281 = ssub.s32 %s48, %s60
      %s282 = ssub.s32 %s49, %s56
      %s283 = sor.u32 %s281, %s282
      %p284 = scmp.eq.s32.totalorder %s283, 0
      %s286 = sadd.s32 %s285, 1
      %s287 = scalar_select %p284, %s285, %s286
      %p290 = pneg %p284
      %p291 = scmp.eq.s32.totalorder %s41, 11
      %p292 = por %p290, %p291
      %p293 = scmp.ne.s32.totalorder %s285, %s288
      %p294 = scmp.eq.s32.totalorder %s41, 0
      %p295 = por %p293, %p294
      %p296 = scmp.ne.s32.totalorder %s285, %s288
      %p297 = scmp.eq.s32.totalorder %s46, 11
      %p298 = por %p296, %p297
      %p299 = scmp.ne.s32.totalorder %s288, %s289
      %p300 = scmp.eq.s32.totalorder %s46, 0
      %p301 = por %p299, %p300
      %p302 = scmp.ne.s32.totalorder %s288, %s289
      %p303 = scmp.eq.s32.totalorder %s47, 11
      %p304 = por %p302, %p303
      %p306 = scmp.ne.s32.totalorder %s289, %s305
      %p307 = scmp.eq.s32.totalorder %s47, 0
      %p308 = por %p306, %p307
      %s309 = ssub.s32 %s48, %s60
      %s310 = ssub.s32 %s49, %s56
      %s311 = sor.u32 %s309, %s310
      %p312 = scmp.eq.s32.totalorder %s311, 0
      %s314 = sadd.s32 %s313, 1
      %s315 = scalar_select %p312, %s313, %s314
      %p318 = pneg %p312
      %p319 = scmp.eq.s32.totalorder %s41, 11
      %p320 = por %p318, %p319
      %p321 = scmp.ne.s32.totalorder %s313, %s316
      %p322 = scmp.eq.s32.totalorder %s41, 0
      %p323 = por %p321, %p322
      %p324 = scmp.ne.s32.totalorder %s313, %s316
      %p325 = scmp.eq.s32.totalorder %s46, 11
      %p326 = por %p324, %p325
      %p327 = scmp.ne.s32.totalorder %s316, %s317
      %p328 = scmp.eq.s32.totalorder %s46, 0
      %p329 = por %p327, %p328
      %p330 = scmp.ne.s32.totalorder %s316, %s317
      %p331 = scmp.eq.s32.totalorder %s47, 11
      %p332 = por %p330, %p331
      %p334 = scmp.ne.s32.totalorder %s317, %s333
      %p335 = scmp.eq.s32.totalorder %s47, 0
      %p336 = por %p334, %p335
      %s337 = ssub.s32 %s48, %s60
      %s338 = ssub.s32 %s49, %s56
      %s339 = sor.u32 %s337, %s338
      %p340 = scmp.eq.s32.totalorder %s339, 0
      %s342 = sadd.s32 %s341, 1
      %s343 = scalar_select %p340, %s341, %s342
      %p346 = pneg %p340
      %p347 = scmp.eq.s32.totalorder %s41, 11
      %p348 = por %p346, %p347
      %p349 = scmp.ne.s32.totalorder %s341, %s344
      %p350 = scmp.eq.s32.totalorder %s41, 0
      %p351 = por %p349, %p350
      %p352 = scmp.ne.s32.totalorder %s341, %s344
      %p353 = scmp.eq.s32.totalorder %s46, 11
      %p354 = por %p352, %p353
      %p355 = scmp.ne.s32.totalorder %s344, %s345
      %p356 = scmp.eq.s32.totalorder %s46, 0
      %p357 = por %p355, %p356
      %p358 = scmp.ne.s32.totalorder %s344, %s345
      %p359 = scmp.eq.s32.totalorder %s47, 11
      %p360 = por %p358, %p359
      %p362 = scmp.ne.s32.totalorder %s345, %s361
      %p363 = scmp.eq.s32.totalorder %s47, 0
      %p364 = por %p362, %p363
      %s365 = ssub.s32 %s48, %s60
      %s366 = ssub.s32 %s49, %s56
      %s367 = sor.u32 %s365, %s366
      %p368 = scmp.eq.s32.totalorder %s367, 0
      %s370 = sadd.s32 %s369, 1
      %s371 = scalar_select %p368, %s369, %s370
      %p374 = pneg %p368
      %p375 = scmp.eq.s32.totalorder %s41, 11
      %p376 = por %p374, %p375
      %p377 = scmp.ne.s32.totalorder %s369, %s372
      %p378 = scmp.eq.s32.totalorder %s41, 0
      %p379 = por %p377, %p378
      %p380 = scmp.ne.s32.totalorder %s369, %s372
      %p381 = scmp.eq.s32.totalorder %s46, 11
      %p382 = por %p380, %p381
      %p383 = scmp.ne.s32.totalorder %s372, %s373
      %p384 = scmp.eq.s32.totalorder %s46, 0
      %p385 = por %p383, %p384
      %p386 = scmp.ne.s32.totalorder %s372, %s373
      %p387 = scmp.eq.s32.totalorder %s47, 11
      %p388 = por %p386, %p387
      %p390 = scmp.ne.s32.totalorder %s373, %s389
      %p391 = scmp.eq.s32.totalorder %s47, 0
      %p392 = por %p390, %p391
      %s393 = ssub.s32 %s48, %s60
      %s394 = ssub.s32 %s49, %s56
      %s395 = sor.u32 %s393, %s394
      %p396 = scmp.eq.s32.totalorder %s395, 0
      %s398 = sadd.s32 %s397, 1
      %s399 = scalar_select %p396, %s397, %s398
      %p402 = pneg %p396
      %p403 = scmp.eq.s32.totalorder %s41, 11
      %p404 = por %p402, %p403
      %p405 = scmp.ne.s32.totalorder %s397, %s400
      %p406 = scmp.eq.s32.totalorder %s41, 0
      %p407 = por %p405, %p406
      %p408 = scmp.ne.s32.totalorder %s397, %s400
      %p409 = scmp.eq.s32.totalorder %s46, 11
      %p410 = por %p408, %p409
      %p411 = scmp.ne.s32.totalorder %s400, %s401
      %p412 = scmp.eq.s32.totalorder %s46, 0
      %p413 = por %p411, %p412
      %p414 = scmp.ne.s32.totalorder %s400, %s401
      %p415 = scmp.eq.s32.totalorder %s47, 11
      %p416 = por %p414, %p415
      %p418 = scmp.ne.s32.totalorder %s401, %s417
      %p419 = scmp.eq.s32.totalorder %s47, 0
      %p420 = por %p418, %p419
      %s421 = ssub.s32 %s48, %s60
      %s422 = ssub.s32 %s49, %s56
      %s423 = sor.u32 %s421, %s422
      %p424 = scmp.eq.s32.totalorder %s423, 0
      %s426 = sadd.s32 %s425, 1
      %s427 = scalar_select %p424, %s425, %s426
      %p430 = pneg %p424
      %p431 = scmp.eq.s32.totalorder %s41, 11
      %p432 = por %p430, %p431
      %p433 = scmp.ne.s32.totalorder %s425, %s428
      %p434 = scmp.eq.s32.totalorder %s41, 0
      %p435 = por %p433, %p434
      %p436 = scmp.ne.s32.totalorder %s425, %s428
      %p437 = scmp.eq.s32.totalorder %s46, 11
      %p438 = por %p436, %p437
      %p439 = scmp.ne.s32.totalorder %s428, %s429
      %p440 = scmp.eq.s32.totalorder %s46, 0
      %p441 = por %p439, %p440
      %p442 = scmp.ne.s32.totalorder %s428, %s429
      %p443 = scmp.eq.s32.totalorder %s47, 11
      %p444 = por %p442, %p443
      %p446 = scmp.ne.s32.totalorder %s429, %s445
      %p447 = scmp.eq.s32.totalorder %s47, 0
      %p448 = por %p446, %p447
      %s449 = ssub.s32 %s48, %s60
      %p450 = scmp.eq.s32.totalorder %s449, 0
      %s452 = sadd.s32 %s451, 1
      %s453 = scalar_select %p450, %s451, %s452
      %p456 = pneg %p450
      %p457 = scmp.eq.s32.totalorder %s41, 11
      %p458 = por %p456, %p457
      %p459 = scmp.ne.s32.totalorder %s451, %s454
      %p460 = scmp.eq.s32.totalorder %s41, 0
      %p461 = por %p459, %p460
      %p462 = scmp.ne.s32.totalorder %s451, %s454
      %p463 = scmp.eq.s32.totalorder %s46, 11
      %p464 = por %p462, %p463
      %p465 = scmp.ne.s32.totalorder %s454, %s455
      %p466 = scmp.eq.s32.totalorder %s46, 0
      %p467 = por %p465, %p466
      %p468 = scmp.ne.s32.totalorder %s454, %s455
      %p469 = scmp.eq.s32.totalorder %s47, 11
      %p470 = por %p468, %p469
      %p472 = scmp.ne.s32.totalorder %s455, %s471
      %p473 = scmp.eq.s32.totalorder %s47, 0
      %p474 = por %p472, %p473
      %p475 = scmp.le.s32.totalorder 1, %s41
      %p476 = scmp.lt.s32.totalorder %s41, 13
      %p477 = pnand %p475, %p476
      %p478 = pneg %p477
      // Predicated region
      $region9: #{trans_mm_fc_forward.2} parent=5 // pred_check
        _
      $region10: #{trans_mm_fc_forward.2} parent=5 // pred_check_branch
        %480 = sbr.rel (%p477) target = $region12
      $region11: #{trans_mm_fc_forward.2} parent=5 // pred_region
        %s481 = ssub.s32 %s41, 1
      $region12: #{trans_mm_fc_forward.2} parent=5 // pred_fallthru
        _
      %p482 = scmp.lt.s32.totalorder %s41, 12
      // Predicated region
      $region13: #{trans_mm_fc_forward.2} parent=5 // pred_check
        %p483 = pneg %p482
      $region14: #{trans_mm_fc_forward.2} parent=5 // pred_check_branch
        %485 = sbr.rel (%p483) target = $region16
      $region15: #{trans_mm_fc_forward.2} parent=5 // pred_region
        // Predicated region
        $region17: #{trans_mm_fc_forward.2} parent=15 // pred_check
          %p486 = pneg %p73
        $region18: #{trans_mm_fc_forward.2} parent=15 // pred_check_branch
          %488 = sbr.rel (%p486) target = $region20
        $region19: #{trans_mm_fc_forward.2} parent=15 // pred_region
          %p489 = scmp.lt.s32.totalorder %s48, 1
          %s490 = scalar_select %p489, %s48, 1
          %s491 = smul.addr %s490, 6
          %s492 = smul.addr %s491, 8
          %s493 = scalar_lea.vmem %s0, %s492
        $region20: #{trans_mm_fc_forward.2} parent=15 // pred_fallthru
          _
        // Predicated region
        $region21: #{trans_mm_fc_forward.2} parent=15 // pred_check
          %p494 = pneg %p99
        $region22: #{trans_mm_fc_forward.2} parent=15 // pred_check_branch
          %496 = sbr.rel (%p494) target = $region24
        $region23: #{trans_mm_fc_forward.2} parent=15 // pred_region
          %s497 = sand.u32 %s89, 1
          %s498 = scalar_lea.sflag [#allocation3], %s497
          %s499 = sand.u32 %s89, 1
          %s500 = smul.addr %s499, 384
          %s501 = scalar_lea.vmem [#allocation2], %s500
          %503 = vsyncadd %s498, 0
          %s504 = smul.addr %s48, 48
          %s505 = smul.addr %s504, 8
          %s506 = scalar_lea.hbm %s1, %s505
          %s507 = sshll.u32 %s506, 4
          %s508 = int_to_ptr.hbm [resolvable:$true] %s507
          %s509 = sshll.u32 %s501, 4
          %s510 = int_to_ptr.vmem [resolvable:$true] %s509
          %515 = dma.hbm_to_vmem [thread:$0]  %s508, 6144, %s510, %s498, 128, 128, 8
        $region24: #{trans_mm_fc_forward.2} parent=15 // pred_fallthru
          _
        // Predicated region
        $region25: #{trans_mm_fc_forward.2} parent=15 // pred_check
          %p516 = pneg %p127
        $region26: #{trans_mm_fc_forward.2} parent=15 // pred_check_branch
          %518 = sbr.rel (%p516) target = $region28
        $region27: #{trans_mm_fc_forward.2} parent=15 // pred_region
          %s519 = sand.u32 %s41, 1
          %s520 = scalar_lea.sflag [#allocation5], %s519
          %s521 = sand.u32 %s117, 1
          %s522 = smul.addr %s521, 192
          %s523 = scalar_lea.vmem [#allocation4], %s522
          %525 = vsyncadd %s520, 0
          %s526 = smul.addr %s49, 48
          %s527 = smul.addr %s48, 288
          %s528 = sadd.s32 %s526, %s527
          %s529 = smul.addr %s528, 4
          %s530 = scalar_lea.hbm %s2, %s529
          %s531 = sshll.u32 %s530, 4
          %s532 = int_to_ptr.hbm [resolvable:$true] %s531
          %s533 = sshll.u32 %s523, 4
          %s534 = int_to_ptr.vmem [resolvable:$true] %s533
          %539 = dma.hbm_to_vmem [thread:$0]  %s532, 3072, %s534, %s520, 192, 192, 12
        $region28: #{trans_mm_fc_forward.2} parent=15 // pred_fallthru
          _
        // Predicated region
        $region29: #{trans_mm_fc_forward.2} parent=15 // pred_check
          %p540 = pneg %p155
        $region30: #{trans_mm_fc_forward.2} parent=15 // pred_check_branch
          %542 = sbr.rel (%p540) target = $region32
        $region31: #{trans_mm_fc_forward.2} parent=15 // pred_region
          %s543 = sand.u32 %s41, 1
          %s544 = scalar_lea.sflag [#allocation5], %s543
          %s545 = sand.u32 %s145, 1
          %s546 = smul.addr %s545, 3
          %s547 = scalar_lea.vmem [#allocation6], %s546
          %549 = vsyncadd %s544, 0
          %s550 = smul.addr %s49, 3
          %s551 = smul.addr %s48, 18
          %s552 = sadd.s32 %s550, %s551
          %s553 = scalar_lea.hbm %s3, %s552
          %s555 = sshll.u32 %s553, 4
          %s556 = int_to_ptr.hbm [resolvable:$true] %s555
          %s557 = sshll.u32 %s547, 4
          %s558 = int_to_ptr.vmem [resolvable:$true] %s557
          %560 = dma.hbm_to_vmem [thread:$0]  %s556, 48, %s558, %s544
        $region32: #{trans_mm_fc_forward.2} parent=15 // pred_fallthru
          _
        // Predicated region
        $region33: #{trans_mm_fc_forward.2} parent=15 // pred_check
          %p561 = pneg %p183
        $region34: #{trans_mm_fc_forward.2} parent=15 // pred_check_branch
          %563 = sbr.rel (%p561) target = $region36
        $region35: #{trans_mm_fc_forward.2} parent=15 // pred_region
          %s564 = sand.u32 %s41, 1
          %s565 = scalar_lea.sflag [#allocation8], %s564
          %s566 = sand.u32 %s173, 1
          %s567 = smul.addr %s566, 64
          %s568 = scalar_lea.vmem [#allocation7], %s567
          %570 = vsyncadd %s565, 0
          %s571 = smul.addr %s49, 16
          %s572 = smul.addr %s48, 96
          %s573 = sadd.s32 %s571, %s572
          %s574 = smul.addr %s573, 4
          %s575 = scalar_lea.hbm %s4, %s574
          %s576 = sshll.u32 %s575, 4
          %s577 = int_to_ptr.hbm [resolvable:$true] %s576
          %s578 = sshll.u32 %s568, 4
          %s579 = int_to_ptr.vmem [resolvable:$true] %s578
          %584 = dma.hbm_to_vmem [thread:$0]  %s577, 1024, %s579, %s565, 64, 64, 4
        $region36: #{trans_mm_fc_forward.2} parent=15 // pred_fallthru
          _
        // Predicated region
        $region37: #{trans_mm_fc_forward.2} parent=15 // pred_check
          %p585 = pneg %p211
        $region38: #{trans_mm_fc_forward.2} parent=15 // pred_check_branch
          %587 = sbr.rel (%p585) target = $region40
        $region39: #{trans_mm_fc_forward.2} parent=15 // pred_region
          %s588 = sand.u32 %s41, 1
          %s589 = scalar_lea.sflag [#allocation8], %s588
          %s590 = sand.u32 %s201, 1
          %s591 = scalar_lea.vmem [#allocation9], %s590
          %593 = vsyncadd %s589, 0
          %s594 = smul.addr %s48, 6
          %s595 = sadd.s32 %s49, %s594
          %s596 = scalar_lea.hbm %s5, %s595
          %s598 = sshll.u32 %s596, 4
          %s599 = int_to_ptr.hbm [resolvable:$true] %s598
          %s600 = sshll.u32 %s591, 4
          %s601 = int_to_ptr.vmem [resolvable:$true] %s600
          %603 = dma.hbm_to_vmem [thread:$0]  %s599, 16, %s601, %s589
        $region40: #{trans_mm_fc_forward.2} parent=15 // pred_fallthru
          _
        // Predicated region
        $region41: #{trans_mm_fc_forward.2} parent=15 // pred_check
          %p604 = pneg %p239
        $region42: #{trans_mm_fc_forward.2} parent=15 // pred_check_branch
          %606 = sbr.rel (%p604) target = $region44
        $region43: #{trans_mm_fc_forward.2} parent=15 // pred_region
          %s607 = sand.u32 %s41, 1
          %s608 = scalar_lea.sflag [#allocation11], %s607
          %s609 = sand.u32 %s229, 1
          %s610 = scalar_lea.vmem [#allocation10], %s609
          %612 = vsyncadd %s608, 0
          %s613 = smul.addr %s48, 6
          %s614 = sadd.s32 %s49, %s613
          %s615 = scalar_lea.hbm %s6, %s614
          %s617 = sshll.u32 %s615, 4
          %s618 = int_to_ptr.hbm [resolvable:$true] %s617
          %s619 = sshll.u32 %s610, 4
          %s620 = int_to_ptr.vmem [resolvable:$true] %s619
          %622 = dma.hbm_to_vmem [thread:$0]  %s618, 16, %s620, %s608
        $region44: #{trans_mm_fc_forward.2} parent=15 // pred_fallthru
          _
        // Predicated region
        $region45: #{trans_mm_fc_forward.2} parent=15 // pred_check
          %p623 = pneg %p267
        $region46: #{trans_mm_fc_forward.2} parent=15 // pred_check_branch
          %625 = sbr.rel (%p623) target = $region48
        $region47: #{trans_mm_fc_forward.2} parent=15 // pred_region
          %s626 = sand.u32 %s41, 1
          %s627 = scalar_lea.sflag [#allocation11], %s626
          %s628 = sand.u32 %s257, 1
          %s629 = scalar_lea.vmem [#allocation12], %s628
          %631 = vsyncadd %s627, 0
          %s632 = smul.addr %s48, 6
          %s633 = sadd.s32 %s49, %s632
          %s634 = scalar_lea.hbm %s7, %s633
          %s636 = sshll.u32 %s634, 4
          %s637 = int_to_ptr.hbm [resolvable:$true] %s636
          %s638 = sshll.u32 %s629, 4
          %s639 = int_to_ptr.vmem [resolvable:$true] %s638
          %641 = dma.hbm_to_vmem [thread:$0]  %s637, 16, %s639, %s627
        $region48: #{trans_mm_fc_forward.2} parent=15 // pred_fallthru
          _
        // Predicated region
        $region49: #{trans_mm_fc_forward.2} parent=15 // pred_check
          %p642 = pneg %p295
        $region50: #{trans_mm_fc_forward.2} parent=15 // pred_check_branch
          %644 = sbr.rel (%p642) target = $region52
        $region51: #{trans_mm_fc_forward.2} parent=15 // pred_region
          %s645 = sand.u32 %s41, 1
          %s646 = scalar_lea.sflag [#allocation14], %s645
          %s647 = sand.u32 %s285, 1
          %s648 = smul.addr %s647, 1024
          %s649 = scalar_lea.vmem [#allocation13], %s648
          %651 = vsyncadd %s646, 0
          %s652 = smul.addr %s49, 256
          %s653 = smul.addr %s48, 1536
          %s654 = sadd.s32 %s652, %s653
          %s655 = smul.addr %s654, 4
          %s656 = scalar_lea.hbm %s8, %s655
          %s657 = sshll.u32 %s656, 4
          %s658 = int_to_ptr.hbm [resolvable:$true] %s657
          %s659 = sshll.u32 %s649, 4
          %s660 = int_to_ptr.vmem [resolvable:$true] %s659
          %665 = dma.hbm_to_vmem [thread:$0]  %s658, 16384, %s660, %s646, 1024, 1024, 64
        $region52: #{trans_mm_fc_forward.2} parent=15 // pred_fallthru
          _
        // Predicated region
        $region53: #{trans_mm_fc_forward.2} parent=15 // pred_check
          %p666 = pneg %p323
        $region54: #{trans_mm_fc_forward.2} parent=15 // pred_check_branch
          %668 = sbr.rel (%p666) target = $region56
        $region55: #{trans_mm_fc_forward.2} parent=15 // pred_region
          %s669 = sand.u32 %s41, 1
          %s670 = scalar_lea.sflag [#allocation14], %s669
          %s671 = sand.u32 %s313, 1
          %s672 = smul.addr %s671, 16
          %s673 = scalar_lea.vmem [#allocation15], %s672
          %675 = vsyncadd %s670, 0
          %s676 = smul.addr %s49, 16
          %s677 = smul.addr %s48, 96
          %s678 = sadd.s32 %s676, %s677
          %s679 = scalar_lea.hbm %s9, %s678
          %s681 = sshll.u32 %s679, 4
          %s682 = int_to_ptr.hbm [resolvable:$true] %s681
          %s683 = sshll.u32 %s673, 4
          %s684 = int_to_ptr.vmem [resolvable:$true] %s683
          %686 = dma.hbm_to_vmem [thread:$0]  %s682, 256, %s684, %s670
        $region56: #{trans_mm_fc_forward.2} parent=15 // pred_fallthru
          _
        // Predicated region
        $region57: #{trans_mm_fc_forward.2} parent=15 // pred_check
          %p687 = pneg %p351
        $region58: #{trans_mm_fc_forward.2} parent=15 // pred_check_branch
          %689 = sbr.rel (%p687) target = $region60
        $region59: #{trans_mm_fc_forward.2} parent=15 // pred_region
          %s690 = sand.u32 %s41, 1
          %s691 = scalar_lea.sflag [#allocation17], %s690
          %s692 = sand.u32 %s341, 1
          %s693 = smul.addr %s692, 1024
          %s694 = scalar_lea.vmem [#allocation16], %s693
          %696 = vsyncadd %s691, 0
          %s697 = smul.addr %s49, 256
          %s698 = smul.addr %s48, 1536
          %s699 = sadd.s32 %s697, %s698
          %s700 = smul.addr %s699, 4
          %s701 = scalar_lea.hbm %s10, %s700
          %s702 = sshll.u32 %s701, 4
          %s703 = int_to_ptr.hbm [resolvable:$true] %s702
          %s704 = sshll.u32 %s694, 4
          %s705 = int_to_ptr.vmem [resolvable:$true] %s704
          %710 = dma.hbm_to_vmem [thread:$0]  %s703, 16384, %s705, %s691, 64, 64, 4
        $region60: #{trans_mm_fc_forward.2} parent=15 // pred_fallthru
          _
        // Predicated region
        $region61: #{trans_mm_fc_forward.2} parent=15 // pred_check
          %p711 = pneg %p379
        $region62: #{trans_mm_fc_forward.2} parent=15 // pred_check_branch
          %713 = sbr.rel (%p711) target = $region64
        $region63: #{trans_mm_fc_forward.2} parent=15 // pred_region
          %s714 = sand.u32 %s41, 1
          %s715 = scalar_lea.sflag [#allocation17], %s714
          %s716 = sand.u32 %s369, 1
          %s717 = scalar_lea.vmem [#allocation18], %s716
          %719 = vsyncadd %s715, 0
          %s720 = smul.addr %s48, 6
          %s721 = sadd.s32 %s49, %s720
          %s722 = scalar_lea.hbm %s11, %s721
          %s724 = sshll.u32 %s722, 4
          %s725 = int_to_ptr.hbm [resolvable:$true] %s724
          %s726 = sshll.u32 %s717, 4
          %s727 = int_to_ptr.vmem [resolvable:$true] %s726
          %729 = dma.hbm_to_vmem [thread:$0]  %s725, 16, %s727, %s715
        $region64: #{trans_mm_fc_forward.2} parent=15 // pred_fallthru
          _
        // Predicated region
        $region65: #{trans_mm_fc_forward.2} parent=15 // pred_check
          %p730 = pneg %p407
        $region66: #{trans_mm_fc_forward.2} parent=15 // pred_check_branch
          %732 = sbr.rel (%p730) target = $region68
        $region67: #{trans_mm_fc_forward.2} parent=15 // pred_region
          %s733 = sand.u32 %s41, 1
          %s734 = scalar_lea.sflag [#allocation20], %s733
          %s735 = sand.u32 %s397, 1
          %s736 = scalar_lea.vmem [#allocation19], %s735
          %738 = vsyncadd %s734, 0
          %s739 = smul.addr %s48, 6
          %s740 = sadd.s32 %s49, %s739
          %s741 = scalar_lea.hbm %s12, %s740
          %s743 = sshll.u32 %s741, 4
          %s744 = int_to_ptr.hbm [resolvable:$true] %s743
          %s745 = sshll.u32 %s736, 4
          %s746 = int_to_ptr.vmem [resolvable:$true] %s745
          %748 = dma.hbm_to_vmem [thread:$0]  %s744, 16, %s746, %s734
        $region68: #{trans_mm_fc_forward.2} parent=15 // pred_fallthru
          _
        // Predicated region
        $region69: #{trans_mm_fc_forward.2} parent=15 // pred_check
          %p749 = pneg %p435
        $region70: #{trans_mm_fc_forward.2} parent=15 // pred_check_branch
          %751 = sbr.rel (%p749) target = $region72
        $region71: #{trans_mm_fc_forward.2} parent=15 // pred_region
          %s752 = sand.u32 %s41, 1
          %s753 = scalar_lea.sflag [#allocation20], %s752
          %s754 = sand.u32 %s425, 1
          %s755 = scalar_lea.vmem [#allocation21], %s754
          %757 = vsyncadd %s753, 0
          %s758 = smul.addr %s48, 6
          %s759 = sadd.s32 %s49, %s758
          %s760 = scalar_lea.hbm %s13, %s759
          %s762 = sshll.u32 %s760, 4
          %s763 = int_to_ptr.hbm [resolvable:$true] %s762
          %s764 = sshll.u32 %s755, 4
          %s765 = int_to_ptr.vmem [resolvable:$true] %s764
          %767 = dma.hbm_to_vmem [thread:$0]  %s763, 16, %s765, %s753
        $region72: #{trans_mm_fc_forward.2} parent=15 // pred_fallthru
          _
      $region16: #{trans_mm_fc_forward.2} parent=5 // pred_fallthru
        _
      %p768 = scmp.le.s32.totalorder 1, %s41
      %p769 = scmp.lt.s32.totalorder %s41, 13
      %p770 = pnand %p768, %p769
      %p771 = pneg %p770
      // Predicated region
      $region73: #{trans_mm_fc_forward.2} parent=5 // pred_check
        _
      $region74: #{trans_mm_fc_forward.2} parent=5 // pred_check_branch
        %773 = sbr.rel (%p770) target = $region76
      $region75: #{trans_mm_fc_forward.2} parent=5 // pred_region
        %s774 = ssub.s32 %s41, 1
        %s775 = sand.u32 %s92, 1
        %s776 = scalar_lea.sflag [#allocation3], %s775
        %s777 = sand.u32 %s92, 1
        %s778 = smul.addr %s777, 384
        %s779 = scalar_lea.vmem [#allocation2], %s778
        // Predicated region
        $region77: #{trans_mm_fc_forward.2} parent=75 // pred_check
          %p780 = pneg %p105
        $region78: #{trans_mm_fc_forward.2} parent=75 // pred_check_branch
          %782 = sbr.rel (%p780) target = $region80
        $region79: #{trans_mm_fc_forward.2} parent=75 // pred_region
          %784 = dma.done %s776, 6144
        $region80: #{trans_mm_fc_forward.2} parent=75 // pred_fallthru
          _
        %s785 = sand.u32 %s46, 1
        %s786 = scalar_lea.sflag [#allocation5], %s785
        %s787 = sand.u32 %s120, 1
        %s788 = smul.addr %s787, 192
        %s789 = scalar_lea.vmem [#allocation4], %s788
        // Predicated region
        $region81: #{trans_mm_fc_forward.2} parent=75 // pred_check
          %p790 = pneg %p133
        $region82: #{trans_mm_fc_forward.2} parent=75 // pred_check_branch
          %792 = sbr.rel (%p790) target = $region84
        $region83: #{trans_mm_fc_forward.2} parent=75 // pred_region
          %794 = dma.done %s786, 3072
        $region84: #{trans_mm_fc_forward.2} parent=75 // pred_fallthru
          _
        %s795 = sand.u32 %s46, 1
        %s796 = scalar_lea.sflag [#allocation5], %s795
        %s797 = sand.u32 %s148, 1
        %s798 = smul.addr %s797, 3
        %s799 = scalar_lea.vmem [#allocation6], %s798
        // Predicated region
        $region85: #{trans_mm_fc_forward.2} parent=75 // pred_check
          %p800 = pneg %p161
        $region86: #{trans_mm_fc_forward.2} parent=75 // pred_check_branch
          %802 = sbr.rel (%p800) target = $region88
        $region87: #{trans_mm_fc_forward.2} parent=75 // pred_region
          %804 = dma.done %s796, 48
        $region88: #{trans_mm_fc_forward.2} parent=75 // pred_fallthru
          _
        %s805 = sand.u32 %s46, 1
        %s806 = scalar_lea.sflag [#allocation8], %s805
        %s807 = sand.u32 %s176, 1
        %s808 = smul.addr %s807, 64
        %s809 = scalar_lea.vmem [#allocation7], %s808
        // Predicated region
        $region89: #{trans_mm_fc_forward.2} parent=75 // pred_check
          %p810 = pneg %p189
        $region90: #{trans_mm_fc_forward.2} parent=75 // pred_check_branch
          %812 = sbr.rel (%p810) target = $region92
        $region91: #{trans_mm_fc_forward.2} parent=75 // pred_region
          %814 = dma.done %s806, 1024
        $region92: #{trans_mm_fc_forward.2} parent=75 // pred_fallthru
          _
        %s815 = sand.u32 %s46, 1
        %s816 = scalar_lea.sflag [#allocation8], %s815
        %s817 = sand.u32 %s204, 1
        %s818 = scalar_lea.vmem [#allocation9], %s817
        // Predicated region
        $region93: #{trans_mm_fc_forward.2} parent=75 // pred_check
          %p819 = pneg %p217
        $region94: #{trans_mm_fc_forward.2} parent=75 // pred_check_branch
          %821 = sbr.rel (%p819) target = $region96
        $region95: #{trans_mm_fc_forward.2} parent=75 // pred_region
          %823 = dma.done %s816, 16
        $region96: #{trans_mm_fc_forward.2} parent=75 // pred_fallthru
          _
        %s824 = sand.u32 %s46, 1
        %s825 = scalar_lea.sflag [#allocation11], %s824
        %s826 = sand.u32 %s232, 1
        %s827 = scalar_lea.vmem [#allocation10], %s826
        // Predicated region
        $region97: #{trans_mm_fc_forward.2} parent=75 // pred_check
          %p828 = pneg %p245
        $region98: #{trans_mm_fc_forward.2} parent=75 // pred_check_branch
          %830 = sbr.rel (%p828) target = $region100
        $region99: #{trans_mm_fc_forward.2} parent=75 // pred_region
          %832 = dma.done %s825, 16
        $region100: #{trans_mm_fc_forward.2} parent=75 // pred_fallthru
          _
        %s833 = sand.u32 %s46, 1
        %s834 = scalar_lea.sflag [#allocation11], %s833
        %s835 = sand.u32 %s260, 1
        %s836 = scalar_lea.vmem [#allocation12], %s835
        // Predicated region
        $region101: #{trans_mm_fc_forward.2} parent=75 // pred_check
          %p837 = pneg %p273
        $region102: #{trans_mm_fc_forward.2} parent=75 // pred_check_branch
          %839 = sbr.rel (%p837) target = $region104
        $region103: #{trans_mm_fc_forward.2} parent=75 // pred_region
          %841 = dma.done %s834, 16
        $region104: #{trans_mm_fc_forward.2} parent=75 // pred_fallthru
          _
        %s842 = sand.u32 %s46, 1
        %s843 = scalar_lea.sflag [#allocation14], %s842
        %s844 = sand.u32 %s288, 1
        %s845 = smul.addr %s844, 1024
        %s846 = scalar_lea.vmem [#allocation13], %s845
        // Predicated region
        $region105: #{trans_mm_fc_forward.2} parent=75 // pred_check
          %p847 = pneg %p301
        $region106: #{trans_mm_fc_forward.2} parent=75 // pred_check_branch
          %849 = sbr.rel (%p847) target = $region108
        $region107: #{trans_mm_fc_forward.2} parent=75 // pred_region
          %851 = dma.done %s843, 16384
        $region108: #{trans_mm_fc_forward.2} parent=75 // pred_fallthru
          _
        %s852 = sand.u32 %s46, 1
        %s853 = scalar_lea.sflag [#allocation14], %s852
        %s854 = sand.u32 %s316, 1
        %s855 = smul.addr %s854, 16
        %s856 = scalar_lea.vmem [#allocation15], %s855
        // Predicated region
        $region109: #{trans_mm_fc_forward.2} parent=75 // pred_check
          %p857 = pneg %p329
        $region110: #{trans_mm_fc_forward.2} parent=75 // pred_check_branch
          %859 = sbr.rel (%p857) target = $region112
        $region111: #{trans_mm_fc_forward.2} parent=75 // pred_region
          %861 = dma.done %s853, 256
        $region112: #{trans_mm_fc_forward.2} parent=75 // pred_fallthru
          _
        %s862 = sand.u32 %s46, 1
        %s863 = scalar_lea.sflag [#allocation17], %s862
        %s864 = sand.u32 %s344, 1
        %s865 = smul.addr %s864, 1024
        %s866 = scalar_lea.vmem [#allocation16], %s865
        // Predicated region
        $region113: #{trans_mm_fc_forward.2} parent=75 // pred_check
          %p867 = pneg %p357
        $region114: #{trans_mm_fc_forward.2} parent=75 // pred_check_branch
          %869 = sbr.rel (%p867) target = $region116
        $region115: #{trans_mm_fc_forward.2} parent=75 // pred_region
          %871 = dma.done %s863, 16384
        $region116: #{trans_mm_fc_forward.2} parent=75 // pred_fallthru
          _
        %s872 = sand.u32 %s46, 1
        %s873 = scalar_lea.sflag [#allocation17], %s872
        %s874 = sand.u32 %s372, 1
        %s875 = scalar_lea.vmem [#allocation18], %s874
        // Predicated region
        $region117: #{trans_mm_fc_forward.2} parent=75 // pred_check
          %p876 = pneg %p385
        $region118: #{trans_mm_fc_forward.2} parent=75 // pred_check_branch
          %878 = sbr.rel (%p876) target = $region120
        $region119: #{trans_mm_fc_forward.2} parent=75 // pred_region
          %880 = dma.done %s873, 16
        $region120: #{trans_mm_fc_forward.2} parent=75 // pred_fallthru
          _
        %s881 = sand.u32 %s46, 1
        %s882 = scalar_lea.sflag [#allocation20], %s881
        %s883 = sand.u32 %s400, 1
        %s884 = scalar_lea.vmem [#allocation19], %s883
        // Predicated region
        $region121: #{trans_mm_fc_forward.2} parent=75 // pred_check
          %p885 = pneg %p413
        $region122: #{trans_mm_fc_forward.2} parent=75 // pred_check_branch
          %887 = sbr.rel (%p885) target = $region124
        $region123: #{trans_mm_fc_forward.2} parent=75 // pred_region
          %889 = dma.done %s882, 16
        $region124: #{trans_mm_fc_forward.2} parent=75 // pred_fallthru
          _
        %s890 = sand.u32 %s46, 1
        %s891 = scalar_lea.sflag [#allocation20], %s890
        %s892 = sand.u32 %s428, 1
        %s893 = scalar_lea.vmem [#allocation21], %s892
        // Predicated region
        $region125: #{trans_mm_fc_forward.2} parent=75 // pred_check
          %p894 = pneg %p441
        $region126: #{trans_mm_fc_forward.2} parent=75 // pred_check_branch
          %896 = sbr.rel (%p894) target = $region128
        $region127: #{trans_mm_fc_forward.2} parent=75 // pred_region
          %898 = dma.done %s891, 16
        $region128: #{trans_mm_fc_forward.2} parent=75 // pred_fallthru
          _
        %p899 = scmp.lt.s32.totalorder %s50, 1
        %s900 = scalar_select %p899, %s50, 1
        %s901 = smul.addr %s900, 6
        %s902 = smul.addr %s901, 8
        %s903 = scalar_lea.vmem %s0, %s902
        %p904 = pneg %p79
        %p905 = pneg %p76
        %s906 = sand.u32 %s92, 1
        %s907 = scalar_lea.sflag [#allocation3], %s906
        %s908 = sand.u32 %s92, 1
        %s909 = smul.addr %s908, 384
        %s910 = scalar_lea.vmem [#allocation2], %s909
        %p911 = pneg %p105
        %p912 = pneg %p102
        %s913 = sand.u32 %s46, 1
        %s914 = scalar_lea.sflag [#allocation5], %s913
        %s915 = sand.u32 %s120, 1
        %s916 = smul.addr %s915, 192
        %s917 = scalar_lea.vmem [#allocation4], %s916
        %p918 = pneg %p133
        %p919 = pneg %p130
        %s920 = sand.u32 %s46, 1
        %s921 = scalar_lea.sflag [#allocation5], %s920
        %s922 = sand.u32 %s148, 1
        %s923 = smul.addr %s922, 3
        %s924 = scalar_lea.vmem [#allocation6], %s923
        %p925 = pneg %p161
        %p926 = pneg %p158
        %s927 = sand.u32 %s46, 1
        %s928 = scalar_lea.sflag [#allocation8], %s927
        %s929 = sand.u32 %s176, 1
        %s930 = smul.addr %s929, 64
        %s931 = scalar_lea.vmem [#allocation7], %s930
        %p932 = pneg %p189
        %p933 = pneg %p186
        %s934 = sand.u32 %s46, 1
        %s935 = scalar_lea.sflag [#allocation8], %s934
        %s936 = sand.u32 %s204, 1
        %s937 = scalar_lea.vmem [#allocation9], %s936
        %p938 = pneg %p217
        %p939 = pneg %p214
        %s940 = sand.u32 %s46, 1
        %s941 = scalar_lea.sflag [#allocation11], %s940
        %s942 = sand.u32 %s232, 1
        %s943 = scalar_lea.vmem [#allocation10], %s942
        %p944 = pneg %p245
        %p945 = pneg %p242
        %s946 = sand.u32 %s46, 1
        %s947 = scalar_lea.sflag [#allocation11], %s946
        %s948 = sand.u32 %s260, 1
        %s949 = scalar_lea.vmem [#allocation12], %s948
        %p950 = pneg %p273
        %p951 = pneg %p270
        %s952 = sand.u32 %s46, 1
        %s953 = scalar_lea.sflag [#allocation14], %s952
        %s954 = sand.u32 %s288, 1
        %s955 = smul.addr %s954, 1024
        %s956 = scalar_lea.vmem [#allocation13], %s955
        %p957 = pneg %p301
        %p958 = pneg %p298
        %s959 = sand.u32 %s46, 1
        %s960 = scalar_lea.sflag [#allocation14], %s959
        %s961 = sand.u32 %s316, 1
        %s962 = smul.addr %s961, 16
        %s963 = scalar_lea.vmem [#allocation15], %s962
        %p964 = pneg %p329
        %p965 = pneg %p326
        %s966 = sand.u32 %s46, 1
        %s967 = scalar_lea.sflag [#allocation17], %s966
        %s968 = sand.u32 %s344, 1
        %s969 = smul.addr %s968, 1024
        %s970 = scalar_lea.vmem [#allocation16], %s969
        %p971 = pneg %p357
        %p972 = pneg %p354
        %s973 = sand.u32 %s46, 1
        %s974 = scalar_lea.sflag [#allocation17], %s973
        %s975 = sand.u32 %s372, 1
        %s976 = scalar_lea.vmem [#allocation18], %s975
        %p977 = pneg %p385
        %p978 = pneg %p382
        %s979 = sand.u32 %s46, 1
        %s980 = scalar_lea.sflag [#allocation20], %s979
        %s981 = sand.u32 %s400, 1
        %s982 = scalar_lea.vmem [#allocation19], %s981
        %p983 = pneg %p413
        %p984 = pneg %p410
        %s985 = sand.u32 %s46, 1
        %s986 = scalar_lea.sflag [#allocation20], %s985
        %s987 = sand.u32 %s428, 1
        %s988 = scalar_lea.vmem [#allocation21], %s987
        %p989 = pneg %p441
        %p990 = pneg %p438
        %p991 = pneg %p467
        %p992 = pneg %p464
        %p993 = scmp.lt.s32.totalorder %s50, 1
        %s994 = scalar_select %p993, %s50, 1
        %s995 = smul.addr %s994, 2
        %s996 = smul.addr %s995, 8
        %s997 = scalar_lea.vmem %s14, %s996
        %p998 = scmp.lt.s32.totalorder %s50, 1
        %s999 = scalar_select %p998, %s50, 1
        %s1000 = smul.addr %s999, 6
        %s1001 = smul.addr %s1000, 8
        %s1002 = scalar_lea.vmem %s0, %s1001
        %p1003 = scmp.lt.s32.totalorder %s50, 1
        %s1004 = scalar_select %p1003, %s50, 1
        %s1005 = smul.addr %s1004, 2
        %s1006 = smul.addr %s1005, 8
        %s1007 = scalar_lea.vmem %s14, %s1006
        %p1008 = scmp.eq.s32.totalorder %s51, 0
        // Predicated region
        $region129: #{trans_mm_fc_forward.2} parent=75 // pred_check
          %p1009 = pneg %p1008
        $region130: #{trans_mm_fc_forward.2} parent=75 // pred_check_branch
          %1011 = sbr.rel (%p1009) target = $region132
        $region131: #{trans_mm_fc_forward.2} parent=75 // pred_region
          %v1012 = vld [vmem:[%s1002] sm:$0xff]
          %v1013 = vld [vmem:[%s1002 + $0x8] sm:$0xff]
          %v1014 = vld [vmem:[%s1002 + $0x10] sm:$0xff]
          %v1015 = vld [vmem:[%s1002 + $0x18] sm:$0xff]
          %v1016 = vld [vmem:[%s1002 + $0x20] sm:$0xff]
          %v1017 = vld [vmem:[%s1002 + $0x28] sm:$0xff]
          %v1018 = vld [vmem:[%s779] sm:$0xff]
          %v1019 = vld [vmem:[%s779 + $0x8] sm:$0xff]
          %v1020 = vld [vmem:[%s779 + $0x10] sm:$0xff]
          %v1021 = vld [vmem:[%s779 + $0x18] sm:$0xff]
          %v1022 = vld [vmem:[%s779 + $0x20] sm:$0xff]
          %v1023 = vld [vmem:[%s779 + $0x28] sm:$0xff]
          %v1024 = vld [vmem:[%s779 + $0x30] sm:$0xff]
          %v1025 = vld [vmem:[%s779 + $0x38] sm:$0xff]
          %v1026 = vld [vmem:[%s779 + $0x40] sm:$0xff]
          %v1027 = vld [vmem:[%s779 + $0x48] sm:$0xff]
          %v1028 = vld [vmem:[%s779 + $0x50] sm:$0xff]
          %v1029 = vld [vmem:[%s779 + $0x58] sm:$0xff]
          %v1030 = vld [vmem:[%s779 + $0x60] sm:$0xff]
          %v1031 = vld [vmem:[%s779 + $0x68] sm:$0xff]
          %v1032 = vld [vmem:[%s779 + $0x70] sm:$0xff]
          %v1033 = vld [vmem:[%s779 + $0x78] sm:$0xff]
          %v1034 = vld [vmem:[%s779 + $0x80] sm:$0xff]
          %v1035 = vld [vmem:[%s779 + $0x88] sm:$0xff]
          %v1036 = vld [vmem:[%s779 + $0x90] sm:$0xff]
          %v1037 = vld [vmem:[%s779 + $0x98] sm:$0xff]
          %v1038 = vld [vmem:[%s779 + $0xa0] sm:$0xff]
          %v1039 = vld [vmem:[%s779 + $0xa8] sm:$0xff]
          %v1040 = vld [vmem:[%s779 + $0xb0] sm:$0xff]
          %v1041 = vld [vmem:[%s779 + $0xb8] sm:$0xff]
          %v1042 = vld [vmem:[%s779 + $0xc0] sm:$0xff]
          %v1043 = vld [vmem:[%s779 + $0xc8] sm:$0xff]
          %v1044 = vld [vmem:[%s779 + $0xd0] sm:$0xff]
          %v1045 = vld [vmem:[%s779 + $0xd8] sm:$0xff]
          %v1046 = vld [vmem:[%s779 + $0xe0] sm:$0xff]
          %v1047 = vld [vmem:[%s779 + $0xe8] sm:$0xff]
          %v1048 = vld [vmem:[%s779 + $0xf0] sm:$0xff]
          %v1049 = vld [vmem:[%s779 + $0xf8] sm:$0xff]
          %v1050 = vld [vmem:[%s779 + $0x100] sm:$0xff]
          %v1051 = vld [vmem:[%s779 + $0x108] sm:$0xff]
          %v1052 = vld [vmem:[%s779 + $0x110] sm:$0xff]
          %v1053 = vld [vmem:[%s779 + $0x118] sm:$0xff]
          %v1054 = vld [vmem:[%s779 + $0x120] sm:$0xff]
          %v1055 = vld [vmem:[%s779 + $0x128] sm:$0xff]
          %v1056 = vld [vmem:[%s779 + $0x130] sm:$0xff]
          %v1057 = vld [vmem:[%s779 + $0x138] sm:$0xff]
          %v1058 = vld [vmem:[%s779 + $0x140] sm:$0xff]
          %v1059 = vld [vmem:[%s779 + $0x148] sm:$0xff]
          %v1060 = vld [vmem:[%s779 + $0x150] sm:$0xff]
          %v1061 = vld [vmem:[%s779 + $0x158] sm:$0xff]
          %v1062 = vld [vmem:[%s779 + $0x160] sm:$0xff]
          %v1063 = vld [vmem:[%s779 + $0x168] sm:$0xff]
          %v1064 = vld [vmem:[%s779 + $0x170] sm:$0xff]
          %v1065 = vld [vmem:[%s779 + $0x178] sm:$0xff]
          %1066 = vmatpush.msra.mxu0 %v1033
          %1067 = vmatpush.msra.mxu0 %v1032
          %1068 = vmatpush.msra.mxu0 %v1031
          %1069 = vmatpush.msra.mxu0 %v1030
          %1070 = vmatpush.msra.mxu0 %v1029
          %1071 = vmatpush.msra.mxu0 %v1028
          %1072 = vmatpush.msra.mxu0 %v1027
          %1073 = vmatpush.msra.mxu0 %v1026
          %1074 = vmatpush.msra.mxu0 %v1025
          %1075 = vmatpush.msra.mxu0 %v1024
          %1076 = vmatpush.msra.mxu0 %v1023
          %1077 = vmatpush.msra.mxu0 %v1022
          %1078 = vmatpush.msra.mxu0 %v1021
          %1079 = vmatpush.msra.mxu0 %v1020
          %1080 = vmatpush.msra.mxu0 %v1019
          %1081 = vmatpush.msra.mxu0 %v1018
          %1082 = vmatmul.f32.gmra.mxu0 %v1012
          %v1083 = vpop.f32.mrf.mxu0
          %v1084 = vadd.f32 0.0, %v1083
          %1085 = vmatmul.f32.gmra.mxu0 %v1015
          %v1086 = vpop.f32.mrf.mxu0
          %v1087 = vadd.f32 0.0, %v1086
          %1088 = vdwg.mxu0
          %1089 = vmatpush.msra.mxu0 %v1049
          %1090 = vmatpush.msra.mxu0 %v1048
          %1091 = vmatpush.msra.mxu0 %v1047
          %1092 = vmatpush.msra.mxu0 %v1046
          %1093 = vmatpush.msra.mxu0 %v1045
          %1094 = vmatpush.msra.mxu0 %v1044
          %1095 = vmatpush.msra.mxu0 %v1043
          %1096 = vmatpush.msra.mxu0 %v1042
          %1097 = vmatpush.msra.mxu0 %v1041
          %1098 = vmatpush.msra.mxu0 %v1040
          %1099 = vmatpush.msra.mxu0 %v1039
          %1100 = vmatpush.msra.mxu0 %v1038
          %1101 = vmatpush.msra.mxu0 %v1037
          %1102 = vmatpush.msra.mxu0 %v1036
          %1103 = vmatpush.msra.mxu0 %v1035
          %1104 = vmatpush.msra.mxu0 %v1034
          %1105 = vmatmul.f32.gmra.mxu0 %v1013
          %v1106 = vpop.f32.mrf.mxu0
          %v1107 = vadd.f32 %v1084, %v1106
          %1108 = vmatmul.f32.gmra.mxu0 %v1016
          %v1109 = vpop.f32.mrf.mxu0
          %v1110 = vadd.f32 %v1087, %v1109
          %1111 = vdwg.mxu0
          %1112 = vmatpush.msra.mxu0 %v1065
          %1113 = vmatpush.msra.mxu0 %v1064
          %1114 = vmatpush.msra.mxu0 %v1063
          %1115 = vmatpush.msra.mxu0 %v1062
          %1116 = vmatpush.msra.mxu0 %v1061
          %1117 = vmatpush.msra.mxu0 %v1060
          %1118 = vmatpush.msra.mxu0 %v1059
          %1119 = vmatpush.msra.mxu0 %v1058
          %1120 = vmatpush.msra.mxu0 %v1057
          %1121 = vmatpush.msra.mxu0 %v1056
          %1122 = vmatpush.msra.mxu0 %v1055
          %1123 = vmatpush.msra.mxu0 %v1054
          %1124 = vmatpush.msra.mxu0 %v1053
          %1125 = vmatpush.msra.mxu0 %v1052
          %1126 = vmatpush.msra.mxu0 %v1051
          %1127 = vmatpush.msra.mxu0 %v1050
          %1128 = vmatmul.f32.gmra.mxu0 %v1014
          %v1129 = vpop.f32.mrf.mxu0
          %v1130 = vadd.f32 %v1107, %v1129
          %1131 = vmatmul.f32.gmra.mxu0 %v1017
          %v1132 = vpop.f32.mrf.mxu0
          %v1133 = vadd.f32 %v1110, %v1132
          %1134 = vdwg.mxu0
          %1135 = vst [vmem:[%s1007] sm:$0xff] %v1130
          %1136 = vst [vmem:[%s1007 + $0x8] sm:$0xff] %v1133
        $region132: #{trans_mm_fc_forward.2} parent=75 // pred_fallthru
          _
        %v1137 = vld [vmem:[%s1007] sm:$0xff]
        %v1138 = vld [vmem:[%s1007 + $0x8] sm:$0xff]
        %v1139 = vpack.c.bf16 %v1138, %v1137
        %v1140 = vld [vmem:[%s789] sm:$0xff]
        %v1141 = vld [vmem:[%s789 + $0x8] sm:$0xf]
        %v1142 = vld [vmem:[%s789 + $0xc] sm:$0xff]
        %v1143 = vld [vmem:[%s789 + $0x14] sm:$0xf]
        %v1144 = vld [vmem:[%s789 + $0x18] sm:$0xff]
        %v1145 = vld [vmem:[%s789 + $0x20] sm:$0xf]
        %v1146 = vld [vmem:[%s789 + $0x24] sm:$0xff]
        %v1147 = vld [vmem:[%s789 + $0x2c] sm:$0xf]
        %v1148 = vld [vmem:[%s789 + $0x30] sm:$0xff]
        %v1149 = vld [vmem:[%s789 + $0x38] sm:$0xf]
        %v1150 = vld [vmem:[%s789 + $0x3c] sm:$0xff]
        %v1151 = vld [vmem:[%s789 + $0x44] sm:$0xf]
        %v1152 = vld [vmem:[%s789 + $0x48] sm:$0xff]
        %v1153 = vld [vmem:[%s789 + $0x50] sm:$0xf]
        %v1154 = vld [vmem:[%s789 + $0x54] sm:$0xff]
        %v1155 = vld [vmem:[%s789 + $0x5c] sm:$0xf]
        %v1156 = vld [vmem:[%s789 + $0x60] sm:$0xff]
        %v1157 = vld [vmem:[%s789 + $0x68] sm:$0xf]
        %v1158 = vld [vmem:[%s789 + $0x6c] sm:$0xff]
        %v1159 = vld [vmem:[%s789 + $0x74] sm:$0xf]
        %v1160 = vld [vmem:[%s789 + $0x78] sm:$0xff]
        %v1161 = vld [vmem:[%s789 + $0x80] sm:$0xf]
        %v1162 = vld [vmem:[%s789 + $0x84] sm:$0xff]
        %v1163 = vld [vmem:[%s789 + $0x8c] sm:$0xf]
        %v1164 = vld [vmem:[%s789 + $0x90] sm:$0xff]
        %v1165 = vld [vmem:[%s789 + $0x98] sm:$0xf]
        %v1166 = vld [vmem:[%s789 + $0x9c] sm:$0xff]
        %v1167 = vld [vmem:[%s789 + $0xa4] sm:$0xf]
        %v1168 = vld [vmem:[%s789 + $0xa8] sm:$0xff]
        %v1169 = vld [vmem:[%s789 + $0xb0] sm:$0xf]
        %v1170 = vld [vmem:[%s789 + $0xb4] sm:$0xff]
        %v1171 = vld [vmem:[%s789 + $0xbc] sm:$0xf]
        %v1172 = vld [vmem:[%s799] sm:$0x7]
        %v1174 = vperm.slane %v1172, 0
        %v1175 = vperm.slane %v1172, 1
        %v1176 = vperm.slane %v1172, 2
        %v1212 = vunpack.c.l.b16 %v1140
        %v1213 = vunpack.c.h.b16 %v1140
        %v1214 = vunpack.c.l.b16 %v1141
        %v1215 = vunpack.c.l.b16 %v1142
        %v1216 = vunpack.c.h.b16 %v1142
        %v1217 = vunpack.c.l.b16 %v1143
        %v1218 = vunpack.c.l.b16 %v1144
        %v1219 = vunpack.c.h.b16 %v1144
        %v1220 = vunpack.c.l.b16 %v1145
        %v1221 = vunpack.c.l.b16 %v1146
        %v1222 = vunpack.c.h.b16 %v1146
        %v1223 = vunpack.c.l.b16 %v1147
        %v1224 = vunpack.c.l.b16 %v1148
        %v1225 = vunpack.c.h.b16 %v1148
        %v1226 = vunpack.c.l.b16 %v1149
        %v1227 = vunpack.c.l.b16 %v1150
        %v1228 = vunpack.c.h.b16 %v1150
        %v1229 = vunpack.c.l.b16 %v1151
        %v1230 = vunpack.c.l.b16 %v1152
        %v1231 = vunpack.c.h.b16 %v1152
        %v1232 = vunpack.c.l.b16 %v1153
        %v1233 = vunpack.c.l.b16 %v1154
        %v1234 = vunpack.c.h.b16 %v1154
        %v1235 = vunpack.c.l.b16 %v1155
        %v1236 = vunpack.c.l.b16 %v1156
        %v1237 = vunpack.c.h.b16 %v1156
        %v1238 = vunpack.c.l.b16 %v1157
        %v1239 = vunpack.c.l.b16 %v1158
        %v1240 = vunpack.c.h.b16 %v1158
        %v1241 = vunpack.c.l.b16 %v1159
        %v1242 = vunpack.c.l.b16 %v1160
        %v1243 = vunpack.c.h.b16 %v1160
        %v1244 = vunpack.c.l.b16 %v1161
        %v1245 = vunpack.c.l.b16 %v1162
        %v1246 = vunpack.c.h.b16 %v1162
        %v1247 = vunpack.c.l.b16 %v1163
        %v1248 = vunpack.c.l.b16 %v1164
        %v1249 = vunpack.c.h.b16 %v1164
        %v1250 = vunpack.c.l.b16 %v1165
        %v1251 = vunpack.c.l.b16 %v1166
        %v1252 = vunpack.c.h.b16 %v1166
        %v1253 = vunpack.c.l.b16 %v1167
        %v1254 = vunpack.c.l.b16 %v1168
        %v1255 = vunpack.c.h.b16 %v1168
        %v1256 = vunpack.c.l.b16 %v1169
        %v1257 = vunpack.c.l.b16 %v1170
        %v1258 = vunpack.c.h.b16 %v1170
        %v1259 = vunpack.c.l.b16 %v1171
        %v1260 = vpack.c.b16 %v1215, %v1212
        %v1261 = vpack.c.b16 %v1216, %v1213
        %v1262 = vpack.c.b16 %v1217, %v1214
        %v1263 = vpack.c.b16 %v1221, %v1218
        %v1264 = vpack.c.b16 %v1222, %v1219
        %v1265 = vpack.c.b16 %v1223, %v1220
        %v1266 = vpack.c.b16 %v1227, %v1224
        %v1267 = vpack.c.b16 %v1228, %v1225
        %v1268 = vpack.c.b16 %v1229, %v1226
        %v1269 = vpack.c.b16 %v1233, %v1230
        %v1270 = vpack.c.b16 %v1234, %v1231
        %v1271 = vpack.c.b16 %v1235, %v1232
        %v1272 = vpack.c.b16 %v1239, %v1236
        %v1273 = vpack.c.b16 %v1240, %v1237
        %v1274 = vpack.c.b16 %v1241, %v1238
        %v1275 = vpack.c.b16 %v1245, %v1242
        %v1276 = vpack.c.b16 %v1246, %v1243
        %v1277 = vpack.c.b16 %v1247, %v1244
        %v1278 = vpack.c.b16 %v1251, %v1248
        %v1279 = vpack.c.b16 %v1252, %v1249
        %v1280 = vpack.c.b16 %v1253, %v1250
        %v1281 = vpack.c.b16 %v1257, %v1254
        %v1282 = vpack.c.b16 %v1258, %v1255
        %v1283 = vpack.c.b16 %v1259, %v1256
        %1308 = vmatpush.bf16.msra.mxu0 %v1281
        %1309 = vmatpush.bf16.msra.mxu0 %v1278
        %1310 = vmatpush.bf16.msra.mxu0 %v1275
        %1311 = vmatpush.bf16.msra.mxu0 %v1272
        %1312 = vmatpush.bf16.msra.mxu0 %v1269
        %1313 = vmatpush.bf16.msra.mxu0 %v1266
        %1314 = vmatpush.bf16.msra.mxu0 %v1263
        %1315 = vmatpush.bf16.msra.mxu0 %v1260
        %1316 = vmatmul.bf16.gmra.mxu0 %v1139
        %v1317 = vpop.f32.mrf.mxu0
        %v1318 = vadd.f32 %v1174, %v1317
        %v1319 = vpop.f32.mrf.mxu0
        %v1320 = vadd.f32 %v1174, %v1319
        %1321 = vdwg.mxu0
        %1322 = vmatpush.bf16.msra.mxu0 %v1282
        %1323 = vmatpush.bf16.msra.mxu0 %v1279
        %1324 = vmatpush.bf16.msra.mxu0 %v1276
        %1325 = vmatpush.bf16.msra.mxu0 %v1273
        %1326 = vmatpush.bf16.msra.mxu0 %v1270
        %1327 = vmatpush.bf16.msra.mxu0 %v1267
        %1328 = vmatpush.bf16.msra.mxu0 %v1264
        %1329 = vmatpush.bf16.msra.mxu0 %v1261
        %1330 = vmatmul.bf16.gmra.mxu0 %v1139
        %v1331 = vpop.f32.mrf.mxu0
        %v1332 = vadd.f32 %v1175, %v1331
        %v1333 = vpop.f32.mrf.mxu0
        %v1334 = vadd.f32 %v1175, %v1333
        %1335 = vdwg.mxu0
        %1336 = vmatpush.bf16.msra.mxu0 %v1283
        %1337 = vmatpush.bf16.msra.mxu0 %v1280
        %1338 = vmatpush.bf16.msra.mxu0 %v1277
        %1339 = vmatpush.bf16.msra.mxu0 %v1274
        %1340 = vmatpush.bf16.msra.mxu0 %v1271
        %1341 = vmatpush.bf16.msra.mxu0 %v1268
        %1342 = vmatpush.bf16.msra.mxu0 %v1265
        %1343 = vmatpush.bf16.msra.mxu0 %v1262
        %1344 = vmatmul.bf16.gmra.mxu0 %v1139
        %v1345 = vpop.f32.mrf.mxu0
        %v1346 = vadd.f32 %v1176, %v1345
        %v1347 = vpop.f32.mrf.mxu0
        %v1348 = vadd.f32 %v1176, %v1347
        %1349 = vdwg.mxu0
        %v1350 = vlaneseq
        %v1351 = vand.u32 %v1350, 127
        %v1352 = vlaneseq
        %v1353 = vshrl.u32 %v1352, 7
        %v1354 = vmul.u32 %v1353, 12
        %vm1355 = vcmp.ge.s32.totalorder %v1351, %v1354
        %v1356 = vadd.s32 %v1353, 1
        %v1357 = vmul.u32 %v1356, 12
        %vm1358 = vcmp.lt.s32.totalorder %v1351, %v1357
        %vm1359 = vmand %vm1355, %vm1358
        %v1360 = vsel %vm1359, 1, 0
        %v1361 = vcvt.s32.f32 %v1360
        %v1363 = vrot.slane %v1361, 1
        %v1364 = vrot.slane %v1361, 2
        %v1365 = vrot.slane %v1361, 3
        %v1366 = vrot.slane %v1361, 4
        %v1367 = vperm.slane %v1361, 0
        %v1368 = vperm.slane %v1363, 0
        %v1369 = vperm.slane %v1364, 0
        %v1370 = vperm.slane %v1365, 0
        %v1371 = vperm.slane %v1366, 0
        %v1377 = vmul.f32 %v1318, %v1367
        %v1378 = vmul.f32 %v1318, %v1368
        %v1379 = vmul.f32 %v1318, %v1369
        %v1380 = vmul.f32 %v1318, %v1370
        %v1381 = vmul.f32 %v1318, %v1371
        %v1382 = vmul.f32 %v1320, %v1367
        %v1383 = vmul.f32 %v1320, %v1368
        %v1384 = vmul.f32 %v1320, %v1369
        %v1385 = vmul.f32 %v1320, %v1370
        %v1386 = vmul.f32 %v1320, %v1371
        %v1387 = vmul.f32 %v1332, %v1367
        %v1388 = vmul.f32 %v1332, %v1368
        %v1389 = vmul.f32 %v1332, %v1369
        %v1390 = vmul.f32 %v1332, %v1370
        %v1391 = vmul.f32 %v1332, %v1371
        %v1392 = vmul.f32 %v1334, %v1367
        %v1393 = vmul.f32 %v1334, %v1368
        %v1394 = vmul.f32 %v1334, %v1369
        %v1395 = vmul.f32 %v1334, %v1370
        %v1396 = vmul.f32 %v1334, %v1371
        %v1397 = vmul.f32 %v1346, %v1367
        %v1398 = vmul.f32 %v1346, %v1368
        %v1399 = vmul.f32 %v1346, %v1369
        %v1400 = vmul.f32 %v1346, %v1370
        %v1401 = vmul.f32 %v1346, %v1371
        %v1402 = vmul.f32 %v1348, %v1367
        %v1403 = vmul.f32 %v1348, %v1368
        %v1404 = vmul.f32 %v1348, %v1369
        %v1405 = vmul.f32 %v1348, %v1370
        %v1406 = vmul.f32 %v1348, %v1371
        %1407 = vmatpush.xpose.msra.mxu0 0.0
        %1408 = vmatpush.xpose.msra.mxu0 0.0
        %1409 = vmatpush.xpose.msra.mxu0 0.0
        %1410 = vmatpush.xpose.msra.mxu0 0.0
        %1411 = vmatpush.xpose.msra.mxu0 0.0
        %1412 = vmatpush.xpose.msra.mxu0 0.0
        %1413 = vmatpush.xpose.msra.mxu0 0.0
        %1414 = vmatpush.xpose.msra.mxu0 0.0
        %1415 = vmatpush.xpose.msra.mxu0 0.0
        %1416 = vmatpush.xpose.msra.mxu0 0.0
        %1417 = vmatpush.xpose.msra.mxu0 0.0
        %1418 = vmatpush.xpose.msra.mxu0 0.0
        %1419 = vmatpush.xpose.msra.mxu0 0.0
        %1420 = vmatpush.xpose.msra.mxu0 0.0
        %1421 = vmatpush.xpose.msra.mxu0 0.0
        %1422 = vmatpush.xpose.msra.mxu0 %v1387
        %1423 = vmatmul.f32.gmra.mxu0 %v1377
        %v1424 = vpop.f32.mrf.mxu0
        %v1425 = vadd.f32 0.0, %v1424
        %1426 = vdwg.mxu0
        %1427 = vmatpush.xpose.msra.mxu0 0.0
        %1428 = vmatpush.xpose.msra.mxu0 0.0
        %1429 = vmatpush.xpose.msra.mxu0 0.0
        %1430 = vmatpush.xpose.msra.mxu0 0.0
        %1431 = vmatpush.xpose.msra.mxu0 0.0
        %1432 = vmatpush.xpose.msra.mxu0 0.0
        %1433 = vmatpush.xpose.msra.mxu0 0.0
        %1434 = vmatpush.xpose.msra.mxu0 0.0
        %1435 = vmatpush.xpose.msra.mxu0 0.0
        %1436 = vmatpush.xpose.msra.mxu0 0.0
        %1437 = vmatpush.xpose.msra.mxu0 0.0
        %1438 = vmatpush.xpose.msra.mxu0 0.0
        %1439 = vmatpush.xpose.msra.mxu0 0.0
        %1440 = vmatpush.xpose.msra.mxu0 0.0
        %1441 = vmatpush.xpose.msra.mxu0 0.0
        %1442 = vmatpush.xpose.msra.mxu0 %v1388
        %1443 = vmatmul.f32.gmra.mxu0 %v1378
        %v1444 = vpop.f32.mrf.mxu0
        %v1445 = vadd.f32 0.0, %v1444
        %1446 = vdwg.mxu0
        %1447 = vmatpush.xpose.msra.mxu0 0.0
        %1448 = vmatpush.xpose.msra.mxu0 0.0
        %1449 = vmatpush.xpose.msra.mxu0 0.0
        %1450 = vmatpush.xpose.msra.mxu0 0.0
        %1451 = vmatpush.xpose.msra.mxu0 0.0
        %1452 = vmatpush.xpose.msra.mxu0 0.0
        %1453 = vmatpush.xpose.msra.mxu0 0.0
        %1454 = vmatpush.xpose.msra.mxu0 0.0
        %1455 = vmatpush.xpose.msra.mxu0 0.0
        %1456 = vmatpush.xpose.msra.mxu0 0.0
        %1457 = vmatpush.xpose.msra.mxu0 0.0
        %1458 = vmatpush.xpose.msra.mxu0 0.0
        %1459 = vmatpush.xpose.msra.mxu0 0.0
        %1460 = vmatpush.xpose.msra.mxu0 0.0
        %1461 = vmatpush.xpose.msra.mxu0 0.0
        %1462 = vmatpush.xpose.msra.mxu0 %v1389
        %1463 = vmatmul.f32.gmra.mxu0 %v1379
        %v1464 = vpop.f32.mrf.mxu0
        %v1465 = vadd.f32 0.0, %v1464
        %1466 = vdwg.mxu0
        %1467 = vmatpush.xpose.msra.mxu0 0.0
        %1468 = vmatpush.xpose.msra.mxu0 0.0
        %1469 = vmatpush.xpose.msra.mxu0 0.0
        %1470 = vmatpush.xpose.msra.mxu0 0.0
        %1471 = vmatpush.xpose.msra.mxu0 0.0
        %1472 = vmatpush.xpose.msra.mxu0 0.0
        %1473 = vmatpush.xpose.msra.mxu0 0.0
        %1474 = vmatpush.xpose.msra.mxu0 0.0
        %1475 = vmatpush.xpose.msra.mxu0 0.0
        %1476 = vmatpush.xpose.msra.mxu0 0.0
        %1477 = vmatpush.xpose.msra.mxu0 0.0
        %1478 = vmatpush.xpose.msra.mxu0 0.0
        %1479 = vmatpush.xpose.msra.mxu0 0.0
        %1480 = vmatpush.xpose.msra.mxu0 0.0
        %1481 = vmatpush.xpose.msra.mxu0 0.0
        %1482 = vmatpush.xpose.msra.mxu0 %v1390
        %1483 = vmatmul.f32.gmra.mxu0 %v1380
        %v1484 = vpop.f32.mrf.mxu0
        %v1485 = vadd.f32 0.0, %v1484
        %1486 = vdwg.mxu0
        %1487 = vmatpush.xpose.msra.mxu0 0.0
        %1488 = vmatpush.xpose.msra.mxu0 0.0
        %1489 = vmatpush.xpose.msra.mxu0 0.0
        %1490 = vmatpush.xpose.msra.mxu0 0.0
        %1491 = vmatpush.xpose.msra.mxu0 0.0
        %1492 = vmatpush.xpose.msra.mxu0 0.0
        %1493 = vmatpush.xpose.msra.mxu0 0.0
        %1494 = vmatpush.xpose.msra.mxu0 0.0
        %1495 = vmatpush.xpose.msra.mxu0 0.0
        %1496 = vmatpush.xpose.msra.mxu0 0.0
        %1497 = vmatpush.xpose.msra.mxu0 0.0
        %1498 = vmatpush.xpose.msra.mxu0 0.0
        %1499 = vmatpush.xpose.msra.mxu0 0.0
        %1500 = vmatpush.xpose.msra.mxu0 0.0
        %1501 = vmatpush.xpose.msra.mxu0 0.0
        %1502 = vmatpush.xpose.msra.mxu0 %v1391
        %1503 = vmatmul.f32.gmra.mxu0 %v1381
        %v1504 = vpop.f32.mrf.mxu0
        %v1505 = vadd.f32 0.0, %v1504
        %1506 = vdwg.mxu0
        %1507 = vmatpush.xpose.msra.mxu0 0.0
        %1508 = vmatpush.xpose.msra.mxu0 0.0
        %1509 = vmatpush.xpose.msra.mxu0 0.0
        %1510 = vmatpush.xpose.msra.mxu0 0.0
        %1511 = vmatpush.xpose.msra.mxu0 0.0
        %1512 = vmatpush.xpose.msra.mxu0 0.0
        %1513 = vmatpush.xpose.msra.mxu0 0.0
        %1514 = vmatpush.xpose.msra.mxu0 0.0
        %1515 = vmatpush.xpose.msra.mxu0 0.0
        %1516 = vmatpush.xpose.msra.mxu0 0.0
        %1517 = vmatpush.xpose.msra.mxu0 0.0
        %1518 = vmatpush.xpose.msra.mxu0 0.0
        %1519 = vmatpush.xpose.msra.mxu0 0.0
        %1520 = vmatpush.xpose.msra.mxu0 0.0
        %1521 = vmatpush.xpose.msra.mxu0 0.0
        %1522 = vmatpush.xpose.msra.mxu0 %v1392
        %1523 = vmatmul.f32.gmra.mxu0 %v1382
        %v1524 = vpop.f32.mrf.mxu0
        %v1525 = vadd.f32 0.0, %v1524
        %1526 = vdwg.mxu0
        %1527 = vmatpush.xpose.msra.mxu0 0.0
        %1528 = vmatpush.xpose.msra.mxu0 0.0
        %1529 = vmatpush.xpose.msra.mxu0 0.0
        %1530 = vmatpush.xpose.msra.mxu0 0.0
        %1531 = vmatpush.xpose.msra.mxu0 0.0
        %1532 = vmatpush.xpose.msra.mxu0 0.0
        %1533 = vmatpush.xpose.msra.mxu0 0.0
        %1534 = vmatpush.xpose.msra.mxu0 0.0
        %1535 = vmatpush.xpose.msra.mxu0 0.0
        %1536 = vmatpush.xpose.msra.mxu0 0.0
        %1537 = vmatpush.xpose.msra.mxu0 0.0
        %1538 = vmatpush.xpose.msra.mxu0 0.0
        %1539 = vmatpush.xpose.msra.mxu0 0.0
        %1540 = vmatpush.xpose.msra.mxu0 0.0
        %1541 = vmatpush.xpose.msra.mxu0 0.0
        %1542 = vmatpush.xpose.msra.mxu0 %v1393
        %1543 = vmatmul.f32.gmra.mxu0 %v1383
        %v1544 = vpop.f32.mrf.mxu0
        %v1545 = vadd.f32 0.0, %v1544
        %1546 = vdwg.mxu0
        %1547 = vmatpush.xpose.msra.mxu0 0.0
        %1548 = vmatpush.xpose.msra.mxu0 0.0
        %1549 = vmatpush.xpose.msra.mxu0 0.0
        %1550 = vmatpush.xpose.msra.mxu0 0.0
        %1551 = vmatpush.xpose.msra.mxu0 0.0
        %1552 = vmatpush.xpose.msra.mxu0 0.0
        %1553 = vmatpush.xpose.msra.mxu0 0.0
        %1554 = vmatpush.xpose.msra.mxu0 0.0
        %1555 = vmatpush.xpose.msra.mxu0 0.0
        %1556 = vmatpush.xpose.msra.mxu0 0.0
        %1557 = vmatpush.xpose.msra.mxu0 0.0
        %1558 = vmatpush.xpose.msra.mxu0 0.0
        %1559 = vmatpush.xpose.msra.mxu0 0.0
        %1560 = vmatpush.xpose.msra.mxu0 0.0
        %1561 = vmatpush.xpose.msra.mxu0 0.0
        %1562 = vmatpush.xpose.msra.mxu0 %v1394
        %1563 = vmatmul.f32.gmra.mxu0 %v1384
        %v1564 = vpop.f32.mrf.mxu0
        %v1565 = vadd.f32 0.0, %v1564
        %1566 = vdwg.mxu0
        %1567 = vmatpush.xpose.msra.mxu0 0.0
        %1568 = vmatpush.xpose.msra.mxu0 0.0
        %1569 = vmatpush.xpose.msra.mxu0 0.0
        %1570 = vmatpush.xpose.msra.mxu0 0.0
        %1571 = vmatpush.xpose.msra.mxu0 0.0
        %1572 = vmatpush.xpose.msra.mxu0 0.0
        %1573 = vmatpush.xpose.msra.mxu0 0.0
        %1574 = vmatpush.xpose.msra.mxu0 0.0
        %1575 = vmatpush.xpose.msra.mxu0 0.0
        %1576 = vmatpush.xpose.msra.mxu0 0.0
        %1577 = vmatpush.xpose.msra.mxu0 0.0
        %1578 = vmatpush.xpose.msra.mxu0 0.0
        %1579 = vmatpush.xpose.msra.mxu0 0.0
        %1580 = vmatpush.xpose.msra.mxu0 0.0
        %1581 = vmatpush.xpose.msra.mxu0 0.0
        %1582 = vmatpush.xpose.msra.mxu0 %v1395
        %1583 = vmatmul.f32.gmra.mxu0 %v1385
        %v1584 = vpop.f32.mrf.mxu0
        %v1585 = vadd.f32 0.0, %v1584
        %1586 = vdwg.mxu0
        %1587 = vmatpush.xpose.msra.mxu0 0.0
        %1588 = vmatpush.xpose.msra.mxu0 0.0
        %1589 = vmatpush.xpose.msra.mxu0 0.0
        %1590 = vmatpush.xpose.msra.mxu0 0.0
        %1591 = vmatpush.xpose.msra.mxu0 0.0
        %1592 = vmatpush.xpose.msra.mxu0 0.0
        %1593 = vmatpush.xpose.msra.mxu0 0.0
        %1594 = vmatpush.xpose.msra.mxu0 0.0
        %1595 = vmatpush.xpose.msra.mxu0 0.0
        %1596 = vmatpush.xpose.msra.mxu0 0.0
        %1597 = vmatpush.xpose.msra.mxu0 0.0
        %1598 = vmatpush.xpose.msra.mxu0 0.0
        %1599 = vmatpush.xpose.msra.mxu0 0.0
        %1600 = vmatpush.xpose.msra.mxu0 0.0
        %1601 = vmatpush.xpose.msra.mxu0 0.0
        %1602 = vmatpush.xpose.msra.mxu0 %v1396
        %1603 = vmatmul.f32.gmra.mxu0 %v1386
        %v1604 = vpop.f32.mrf.mxu0
        %v1605 = vadd.f32 0.0, %v1604
        %1606 = vdwg.mxu0
        %v1607 = vmul.f32 %v1425, 0.28867513
        %v1608 = vmul.f32 %v1445, 0.28867513
        %v1609 = vmul.f32 %v1465, 0.28867513
        %v1610 = vmul.f32 %v1485, 0.28867513
        %v1611 = vmul.f32 %v1505, 0.28867513
        %v1612 = vmul.f32 %v1525, 0.28867513
        %v1613 = vmul.f32 %v1545, 0.28867513
        %v1614 = vmul.f32 %v1565, 0.28867513
        %v1615 = vmul.f32 %v1585, 0.28867513
        %v1616 = vmul.f32 %v1605, 0.28867513
        %vm1617 = vcmask 64512
        %v1618 = vsel %vm1617, %v1607, -inf
        %1619 = vmax.xlane.f32.xlu0 %v1618
        %v1620 = vpop.xlane.xlu0 %1619
        %v1621 = vsel %vm1617, %v1608, -inf
        %1622 = vmax.xlane.f32.xlu0 %v1621
        %v1623 = vpop.xlane.xlu0 %1622
        %v1624 = vsel %vm1617, %v1609, -inf
        %1625 = vmax.xlane.f32.xlu0 %v1624
        %v1626 = vpop.xlane.xlu0 %1625
        %v1627 = vsel %vm1617, %v1610, -inf
        %1628 = vmax.xlane.f32.xlu0 %v1627
        %v1629 = vpop.xlane.xlu0 %1628
        %v1630 = vsel %vm1617, %v1611, -inf
        %1631 = vmax.xlane.f32.xlu0 %v1630
        %v1632 = vpop.xlane.xlu0 %1631
        %v1633 = vsel %vm1617, %v1612, -inf
        %1634 = vmax.xlane.f32.xlu0 %v1633
        %v1635 = vpop.xlane.xlu0 %1634
        %v1636 = vsel %vm1617, %v1613, -inf
        %1637 = vmax.xlane.f32.xlu0 %v1636
        %v1638 = vpop.xlane.xlu0 %1637
        %v1639 = vsel %vm1617, %v1614, -inf
        %1640 = vmax.xlane.f32.xlu0 %v1639
        %v1641 = vpop.xlane.xlu0 %1640
        %v1642 = vsel %vm1617, %v1615, -inf
        %1643 = vmax.xlane.f32.xlu0 %v1642
        %v1644 = vpop.xlane.xlu0 %1643
        %v1645 = vsel %vm1617, %v1616, -inf
        %1646 = vmax.xlane.f32.xlu0 %v1645
        %v1647 = vpop.xlane.xlu0 %1646
        %v1648 = vsub.f32 %v1607, %v1620
        %v1649 = vsub.f32 %v1608, %v1623
        %v1650 = vsub.f32 %v1609, %v1626
        %v1651 = vsub.f32 %v1610, %v1629
        %v1652 = vsub.f32 %v1611, %v1632
        %v1653 = vsub.f32 %v1612, %v1635
        %v1654 = vsub.f32 %v1613, %v1638
        %v1655 = vsub.f32 %v1614, %v1641
        %v1656 = vsub.f32 %v1615, %v1644
        %v1657 = vsub.f32 %v1616, %v1647
        %v1658 = vmul.f32 %v1648, 1.442695
        %v1659 = vpow.pop %v1658
        %v1660 = vmul.f32 %v1649, 1.442695
        %v1661 = vpow.pop %v1660
        %v1662 = vmul.f32 %v1650, 1.442695
        %v1663 = vpow.pop %v1662
        %v1664 = vmul.f32 %v1651, 1.442695
        %v1665 = vpow.pop %v1664
        %v1666 = vmul.f32 %v1652, 1.442695
        %v1667 = vpow.pop %v1666
        %v1668 = vmul.f32 %v1653, 1.442695
        %v1669 = vpow.pop %v1668
        %v1670 = vmul.f32 %v1654, 1.442695
        %v1671 = vpow.pop %v1670
        %v1672 = vmul.f32 %v1655, 1.442695
        %v1673 = vpow.pop %v1672
        %v1674 = vmul.f32 %v1656, 1.442695
        %v1675 = vpow.pop %v1674
        %v1676 = vmul.f32 %v1657, 1.442695
        %v1677 = vpow.pop %v1676
        %v1678 = vsel %vm1617, %v1659, 0.0
        %1679 = vadd.xlane.f32.xlu0 %v1678
        %v1680 = vpop.xlane.xlu0 %1679
        %v1681 = vsel %vm1617, %v1661, 0.0
        %1682 = vadd.xlane.f32.xlu0 %v1681
        %v1683 = vpop.xlane.xlu0 %1682
        %v1684 = vsel %vm1617, %v1663, 0.0
        %1685 = vadd.xlane.f32.xlu0 %v1684
        %v1686 = vpop.xlane.xlu0 %1685
        %v1687 = vsel %vm1617, %v1665, 0.0
        %1688 = vadd.xlane.f32.xlu0 %v1687
        %v1689 = vpop.xlane.xlu0 %1688
        %v1690 = vsel %vm1617, %v1667, 0.0
        %1691 = vadd.xlane.f32.xlu0 %v1690
        %v1692 = vpop.xlane.xlu0 %1691
        %v1693 = vsel %vm1617, %v1669, 0.0
        %1694 = vadd.xlane.f32.xlu0 %v1693
        %v1695 = vpop.xlane.xlu0 %1694
        %v1696 = vsel %vm1617, %v1671, 0.0
        %1697 = vadd.xlane.f32.xlu0 %v1696
        %v1698 = vpop.xlane.xlu0 %1697
        %v1699 = vsel %vm1617, %v1673, 0.0
        %1700 = vadd.xlane.f32.xlu0 %v1699
        %v1701 = vpop.xlane.xlu0 %1700
        %v1702 = vsel %vm1617, %v1675, 0.0
        %1703 = vadd.xlane.f32.xlu0 %v1702
        %v1704 = vpop.xlane.xlu0 %1703
        %v1705 = vsel %vm1617, %v1677, 0.0
        %1706 = vadd.xlane.f32.xlu0 %v1705
        %v1707 = vpop.xlane.xlu0 %1706
        %v1708 = vrcp.pop %v1680
        %v1709 = vmul.f32 %v1680, %v1708
        %v1710 = vsub.f32 1.0, %v1709
        %v1711 = vmul.f32 %v1708, %v1710
        %v1712 = vadd.f32 %v1708, %v1711
        %vm1713 = vweird.f32 %v1680
        %vm1714 = vweird.f32 %v1708
        %vm1715 = vmor %vm1713, %vm1714
        %v1716 = vsel %vm1715, %v1708, %v1712
        %v1717 = vand.u32 2147483647, %v1680
        %vm1718 = vcmp.eq.f32.partialorder %v1717, 8.507059e+37
        %v1719 = vand.u32 %v1680, 2147483648
        %v1720 = vor.u32 1.1754944e-38, %v1719
        %v1721 = vsel %vm1718, %v1720, %v1716
        %v1722 = vmul.f32 %v1659, %v1721
        %v1723 = vrcp.pop %v1683
        %v1724 = vmul.f32 %v1683, %v1723
        %v1725 = vsub.f32 1.0, %v1724
        %v1726 = vmul.f32 %v1723, %v1725
        %v1727 = vadd.f32 %v1723, %v1726
        %vm1728 = vweird.f32 %v1683
        %vm1729 = vweird.f32 %v1723
        %vm1730 = vmor %vm1728, %vm1729
        %v1731 = vsel %vm1730, %v1723, %v1727
        %v1732 = vand.u32 2147483647, %v1683
        %vm1733 = vcmp.eq.f32.partialorder %v1732, 8.507059e+37
        %v1734 = vand.u32 %v1683, 2147483648
        %v1735 = vor.u32 1.1754944e-38, %v1734
        %v1736 = vsel %vm1733, %v1735, %v1731
        %v1737 = vmul.f32 %v1661, %v1736
        %v1738 = vrcp.pop %v1686
        %v1739 = vmul.f32 %v1686, %v1738
        %v1740 = vsub.f32 1.0, %v1739
        %v1741 = vmul.f32 %v1738, %v1740
        %v1742 = vadd.f32 %v1738, %v1741
        %vm1743 = vweird.f32 %v1686
        %vm1744 = vweird.f32 %v1738
        %vm1745 = vmor %vm1743, %vm1744
        %v1746 = vsel %vm1745, %v1738, %v1742
        %v1747 = vand.u32 2147483647, %v1686
        %vm1748 = vcmp.eq.f32.partialorder %v1747, 8.507059e+37
        %v1749 = vand.u32 %v1686, 2147483648
        %v1750 = vor.u32 1.1754944e-38, %v1749
        %v1751 = vsel %vm1748, %v1750, %v1746
        %v1752 = vmul.f32 %v1663, %v1751
        %v1753 = vrcp.pop %v1689
        %v1754 = vmul.f32 %v1689, %v1753
        %v1755 = vsub.f32 1.0, %v1754
        %v1756 = vmul.f32 %v1753, %v1755
        %v1757 = vadd.f32 %v1753, %v1756
        %vm1758 = vweird.f32 %v1689
        %vm1759 = vweird.f32 %v1753
        %vm1760 = vmor %vm1758, %vm1759
        %v1761 = vsel %vm1760, %v1753, %v1757
        %v1762 = vand.u32 2147483647, %v1689
        %vm1763 = vcmp.eq.f32.partialorder %v1762, 8.507059e+37
        %v1764 = vand.u32 %v1689, 2147483648
        %v1765 = vor.u32 1.1754944e-38, %v1764
        %v1766 = vsel %vm1763, %v1765, %v1761
        %v1767 = vmul.f32 %v1665, %v1766
        %v1768 = vrcp.pop %v1692
        %v1769 = vmul.f32 %v1692, %v1768
        %v1770 = vsub.f32 1.0, %v1769
        %v1771 = vmul.f32 %v1768, %v1770
        %v1772 = vadd.f32 %v1768, %v1771
        %vm1773 = vweird.f32 %v1692
        %vm1774 = vweird.f32 %v1768
        %vm1775 = vmor %vm1773, %vm1774
        %v1776 = vsel %vm1775, %v1768, %v1772
        %v1777 = vand.u32 2147483647, %v1692
        %vm1778 = vcmp.eq.f32.partialorder %v1777, 8.507059e+37
        %v1779 = vand.u32 %v1692, 2147483648
        %v1780 = vor.u32 1.1754944e-38, %v1779
        %v1781 = vsel %vm1778, %v1780, %v1776
        %v1782 = vmul.f32 %v1667, %v1781
        %v1783 = vrcp.pop %v1695
        %v1784 = vmul.f32 %v1695, %v1783
        %v1785 = vsub.f32 1.0, %v1784
        %v1786 = vmul.f32 %v1783, %v1785
        %v1787 = vadd.f32 %v1783, %v1786
        %vm1788 = vweird.f32 %v1695
        %vm1789 = vweird.f32 %v1783
        %vm1790 = vmor %vm1788, %vm1789
        %v1791 = vsel %vm1790, %v1783, %v1787
        %v1792 = vand.u32 2147483647, %v1695
        %vm1793 = vcmp.eq.f32.partialorder %v1792, 8.507059e+37
        %v1794 = vand.u32 %v1695, 2147483648
        %v1795 = vor.u32 1.1754944e-38, %v1794
        %v1796 = vsel %vm1793, %v1795, %v1791
        %v1797 = vmul.f32 %v1669, %v1796
        %v1798 = vrcp.pop %v1698
        %v1799 = vmul.f32 %v1698, %v1798
        %v1800 = vsub.f32 1.0, %v1799
        %v1801 = vmul.f32 %v1798, %v1800
        %v1802 = vadd.f32 %v1798, %v1801
        %vm1803 = vweird.f32 %v1698
        %vm1804 = vweird.f32 %v1798
        %vm1805 = vmor %vm1803, %vm1804
        %v1806 = vsel %vm1805, %v1798, %v1802
        %v1807 = vand.u32 2147483647, %v1698
        %vm1808 = vcmp.eq.f32.partialorder %v1807, 8.507059e+37
        %v1809 = vand.u32 %v1698, 2147483648
        %v1810 = vor.u32 1.1754944e-38, %v1809
        %v1811 = vsel %vm1808, %v1810, %v1806
        %v1812 = vmul.f32 %v1671, %v1811
        %v1813 = vrcp.pop %v1701
        %v1814 = vmul.f32 %v1701, %v1813
        %v1815 = vsub.f32 1.0, %v1814
        %v1816 = vmul.f32 %v1813, %v1815
        %v1817 = vadd.f32 %v1813, %v1816
        %vm1818 = vweird.f32 %v1701
        %vm1819 = vweird.f32 %v1813
        %vm1820 = vmor %vm1818, %vm1819
        %v1821 = vsel %vm1820, %v1813, %v1817
        %v1822 = vand.u32 2147483647, %v1701
        %vm1823 = vcmp.eq.f32.partialorder %v1822, 8.507059e+37
        %v1824 = vand.u32 %v1701, 2147483648
        %v1825 = vor.u32 1.1754944e-38, %v1824
        %v1826 = vsel %vm1823, %v1825, %v1821
        %v1827 = vmul.f32 %v1673, %v1826
        %v1828 = vrcp.pop %v1704
        %v1829 = vmul.f32 %v1704, %v1828
        %v1830 = vsub.f32 1.0, %v1829
        %v1831 = vmul.f32 %v1828, %v1830
        %v1832 = vadd.f32 %v1828, %v1831
        %vm1833 = vweird.f32 %v1704
        %vm1834 = vweird.f32 %v1828
        %vm1835 = vmor %vm1833, %vm1834
        %v1836 = vsel %vm1835, %v1828, %v1832
        %v1837 = vand.u32 2147483647, %v1704
        %vm1838 = vcmp.eq.f32.partialorder %v1837, 8.507059e+37
        %v1839 = vand.u32 %v1704, 2147483648
        %v1840 = vor.u32 1.1754944e-38, %v1839
        %v1841 = vsel %vm1838, %v1840, %v1836
        %v1842 = vmul.f32 %v1675, %v1841
        %v1843 = vrcp.pop %v1707
        %v1844 = vmul.f32 %v1707, %v1843
        %v1845 = vsub.f32 1.0, %v1844
        %v1846 = vmul.f32 %v1843, %v1845
        %v1847 = vadd.f32 %v1843, %v1846
        %vm1848 = vweird.f32 %v1707
        %vm1849 = vweird.f32 %v1843
        %vm1850 = vmor %vm1848, %vm1849
        %v1851 = vsel %vm1850, %v1843, %v1847
        %v1852 = vand.u32 2147483647, %v1707
        %vm1853 = vcmp.eq.f32.partialorder %v1852, 8.507059e+37
        %v1854 = vand.u32 %v1707, 2147483648
        %v1855 = vor.u32 1.1754944e-38, %v1854
        %v1856 = vsel %vm1853, %v1855, %v1851
        %v1857 = vmul.f32 %v1677, %v1856
        %v1859 = vsel %vm1617, %v1722, 0
        %1861 = vmatpush.msra.mxu0 0.0
        %1862 = vmatpush.msra.mxu0 0.0
        %1863 = vmatpush.msra.mxu0 0.0
        %1864 = vmatpush.msra.mxu0 0.0
        %1865 = vmatpush.msra.mxu0 0.0
        %1866 = vmatpush.msra.mxu0 0.0
        %1867 = vmatpush.msra.mxu0 0.0
        %1868 = vmatpush.msra.mxu0 0.0
        %1869 = vmatpush.msra.mxu0 0.0
        %1870 = vmatpush.msra.mxu0 0.0
        %1871 = vmatpush.msra.mxu0 0.0
        %1872 = vmatpush.msra.mxu0 0.0
        %1873 = vmatpush.msra.mxu0 0.0
        %1874 = vmatpush.msra.mxu0 0.0
        %1875 = vmatpush.msra.mxu0 0.0
        %1876 = vmatpush.msra.mxu0 %v1397
        %1877 = vmatmul.f32.gmra.mxu0 %v1859
        %v1878 = vpop.f32.mrf.mxu0
        %v1879 = vadd.f32 0.0, %v1878
        %1880 = vdwg.mxu0
        %v1882 = vsel %vm1617, %v1737, 0
        %1884 = vmatpush.msra.mxu0 0.0
        %1885 = vmatpush.msra.mxu0 0.0
        %1886 = vmatpush.msra.mxu0 0.0
        %1887 = vmatpush.msra.mxu0 0.0
        %1888 = vmatpush.msra.mxu0 0.0
        %1889 = vmatpush.msra.mxu0 0.0
        %1890 = vmatpush.msra.mxu0 0.0
        %1891 = vmatpush.msra.mxu0 0.0
        %1892 = vmatpush.msra.mxu0 0.0
        %1893 = vmatpush.msra.mxu0 0.0
        %1894 = vmatpush.msra.mxu0 0.0
        %1895 = vmatpush.msra.mxu0 0.0
        %1896 = vmatpush.msra.mxu0 0.0
        %1897 = vmatpush.msra.mxu0 0.0
        %1898 = vmatpush.msra.mxu0 0.0
        %1899 = vmatpush.msra.mxu0 %v1398
        %1900 = vmatmul.f32.gmra.mxu0 %v1882
        %v1901 = vpop.f32.mrf.mxu0
        %v1902 = vadd.f32 0.0, %v1901
        %1903 = vdwg.mxu0
        %v1905 = vsel %vm1617, %v1752, 0
        %1907 = vmatpush.msra.mxu0 0.0
        %1908 = vmatpush.msra.mxu0 0.0
        %1909 = vmatpush.msra.mxu0 0.0
        %1910 = vmatpush.msra.mxu0 0.0
        %1911 = vmatpush.msra.mxu0 0.0
        %1912 = vmatpush.msra.mxu0 0.0
        %1913 = vmatpush.msra.mxu0 0.0
        %1914 = vmatpush.msra.mxu0 0.0
        %1915 = vmatpush.msra.mxu0 0.0
        %1916 = vmatpush.msra.mxu0 0.0
        %1917 = vmatpush.msra.mxu0 0.0
        %1918 = vmatpush.msra.mxu0 0.0
        %1919 = vmatpush.msra.mxu0 0.0
        %1920 = vmatpush.msra.mxu0 0.0
        %1921 = vmatpush.msra.mxu0 0.0
        %1922 = vmatpush.msra.mxu0 %v1399
        %1923 = vmatmul.f32.gmra.mxu0 %v1905
        %v1924 = vpop.f32.mrf.mxu0
        %v1925 = vadd.f32 0.0, %v1924
        %1926 = vdwg.mxu0
        %v1928 = vsel %vm1617, %v1767, 0
        %1930 = vmatpush.msra.mxu0 0.0
        %1931 = vmatpush.msra.mxu0 0.0
        %1932 = vmatpush.msra.mxu0 0.0
        %1933 = vmatpush.msra.mxu0 0.0
        %1934 = vmatpush.msra.mxu0 0.0
        %1935 = vmatpush.msra.mxu0 0.0
        %1936 = vmatpush.msra.mxu0 0.0
        %1937 = vmatpush.msra.mxu0 0.0
        %1938 = vmatpush.msra.mxu0 0.0
        %1939 = vmatpush.msra.mxu0 0.0
        %1940 = vmatpush.msra.mxu0 0.0
        %1941 = vmatpush.msra.mxu0 0.0
        %1942 = vmatpush.msra.mxu0 0.0
        %1943 = vmatpush.msra.mxu0 0.0
        %1944 = vmatpush.msra.mxu0 0.0
        %1945 = vmatpush.msra.mxu0 %v1400
        %1946 = vmatmul.f32.gmra.mxu0 %v1928
        %v1947 = vpop.f32.mrf.mxu0
        %v1948 = vadd.f32 0.0, %v1947
        %1949 = vdwg.mxu0
        %v1951 = vsel %vm1617, %v1782, 0
        %1953 = vmatpush.msra.mxu0 0.0
        %1954 = vmatpush.msra.mxu0 0.0
        %1955 = vmatpush.msra.mxu0 0.0
        %1956 = vmatpush.msra.mxu0 0.0
        %1957 = vmatpush.msra.mxu0 0.0
        %1958 = vmatpush.msra.mxu0 0.0
        %1959 = vmatpush.msra.mxu0 0.0
        %1960 = vmatpush.msra.mxu0 0.0
        %1961 = vmatpush.msra.mxu0 0.0
        %1962 = vmatpush.msra.mxu0 0.0
        %1963 = vmatpush.msra.mxu0 0.0
        %1964 = vmatpush.msra.mxu0 0.0
        %1965 = vmatpush.msra.mxu0 0.0
        %1966 = vmatpush.msra.mxu0 0.0
        %1967 = vmatpush.msra.mxu0 0.0
        %1968 = vmatpush.msra.mxu0 %v1401
        %1969 = vmatmul.f32.gmra.mxu0 %v1951
        %v1970 = vpop.f32.mrf.mxu0
        %v1971 = vadd.f32 0.0, %v1970
        %1972 = vdwg.mxu0
        %v1974 = vsel %vm1617, %v1797, 0
        %1976 = vmatpush.msra.mxu0 0.0
        %1977 = vmatpush.msra.mxu0 0.0
        %1978 = vmatpush.msra.mxu0 0.0
        %1979 = vmatpush.msra.mxu0 0.0
        %1980 = vmatpush.msra.mxu0 0.0
        %1981 = vmatpush.msra.mxu0 0.0
        %1982 = vmatpush.msra.mxu0 0.0
        %1983 = vmatpush.msra.mxu0 0.0
        %1984 = vmatpush.msra.mxu0 0.0
        %1985 = vmatpush.msra.mxu0 0.0
        %1986 = vmatpush.msra.mxu0 0.0
        %1987 = vmatpush.msra.mxu0 0.0
        %1988 = vmatpush.msra.mxu0 0.0
        %1989 = vmatpush.msra.mxu0 0.0
        %1990 = vmatpush.msra.mxu0 0.0
        %1991 = vmatpush.msra.mxu0 %v1402
        %1992 = vmatmul.f32.gmra.mxu0 %v1974
        %v1993 = vpop.f32.mrf.mxu0
        %v1994 = vadd.f32 0.0, %v1993
        %1995 = vdwg.mxu0
        %v1997 = vsel %vm1617, %v1812, 0
        %1999 = vmatpush.msra.mxu0 0.0
        %2000 = vmatpush.msra.mxu0 0.0
        %2001 = vmatpush.msra.mxu0 0.0
        %2002 = vmatpush.msra.mxu0 0.0
        %2003 = vmatpush.msra.mxu0 0.0
        %2004 = vmatpush.msra.mxu0 0.0
        %2005 = vmatpush.msra.mxu0 0.0
        %2006 = vmatpush.msra.mxu0 0.0
        %2007 = vmatpush.msra.mxu0 0.0
        %2008 = vmatpush.msra.mxu0 0.0
        %2009 = vmatpush.msra.mxu0 0.0
        %2010 = vmatpush.msra.mxu0 0.0
        %2011 = vmatpush.msra.mxu0 0.0
        %2012 = vmatpush.msra.mxu0 0.0
        %2013 = vmatpush.msra.mxu0 0.0
        %2014 = vmatpush.msra.mxu0 %v1403
        %2015 = vmatmul.f32.gmra.mxu0 %v1997
        %v2016 = vpop.f32.mrf.mxu0
        %v2017 = vadd.f32 0.0, %v2016
        %2018 = vdwg.mxu0
        %v2020 = vsel %vm1617, %v1827, 0
        %2022 = vmatpush.msra.mxu0 0.0
        %2023 = vmatpush.msra.mxu0 0.0
        %2024 = vmatpush.msra.mxu0 0.0
        %2025 = vmatpush.msra.mxu0 0.0
        %2026 = vmatpush.msra.mxu0 0.0
        %2027 = vmatpush.msra.mxu0 0.0
        %2028 = vmatpush.msra.mxu0 0.0
        %2029 = vmatpush.msra.mxu0 0.0
        %2030 = vmatpush.msra.mxu0 0.0
        %2031 = vmatpush.msra.mxu0 0.0
        %2032 = vmatpush.msra.mxu0 0.0
        %2033 = vmatpush.msra.mxu0 0.0
        %2034 = vmatpush.msra.mxu0 0.0
        %2035 = vmatpush.msra.mxu0 0.0
        %2036 = vmatpush.msra.mxu0 0.0
        %2037 = vmatpush.msra.mxu0 %v1404
        %2038 = vmatmul.f32.gmra.mxu0 %v2020
        %v2039 = vpop.f32.mrf.mxu0
        %v2040 = vadd.f32 0.0, %v2039
        %2041 = vdwg.mxu0
        %v2043 = vsel %vm1617, %v1842, 0
        %2045 = vmatpush.msra.mxu0 0.0
        %2046 = vmatpush.msra.mxu0 0.0
        %2047 = vmatpush.msra.mxu0 0.0
        %2048 = vmatpush.msra.mxu0 0.0
        %2049 = vmatpush.msra.mxu0 0.0
        %2050 = vmatpush.msra.mxu0 0.0
        %2051 = vmatpush.msra.mxu0 0.0
        %2052 = vmatpush.msra.mxu0 0.0
        %2053 = vmatpush.msra.mxu0 0.0
        %2054 = vmatpush.msra.mxu0 0.0
        %2055 = vmatpush.msra.mxu0 0.0
        %2056 = vmatpush.msra.mxu0 0.0
        %2057 = vmatpush.msra.mxu0 0.0
        %2058 = vmatpush.msra.mxu0 0.0
        %2059 = vmatpush.msra.mxu0 0.0
        %2060 = vmatpush.msra.mxu0 %v1405
        %2061 = vmatmul.f32.gmra.mxu0 %v2043
        %v2062 = vpop.f32.mrf.mxu0
        %v2063 = vadd.f32 0.0, %v2062
        %2064 = vdwg.mxu0
        %v2066 = vsel %vm1617, %v1857, 0
        %2068 = vmatpush.msra.mxu0 0.0
        %2069 = vmatpush.msra.mxu0 0.0
        %2070 = vmatpush.msra.mxu0 0.0
        %2071 = vmatpush.msra.mxu0 0.0
        %2072 = vmatpush.msra.mxu0 0.0
        %2073 = vmatpush.msra.mxu0 0.0
        %2074 = vmatpush.msra.mxu0 0.0
        %2075 = vmatpush.msra.mxu0 0.0
        %2076 = vmatpush.msra.mxu0 0.0
        %2077 = vmatpush.msra.mxu0 0.0
        %2078 = vmatpush.msra.mxu0 0.0
        %2079 = vmatpush.msra.mxu0 0.0
        %2080 = vmatpush.msra.mxu0 0.0
        %2081 = vmatpush.msra.mxu0 0.0
        %2082 = vmatpush.msra.mxu0 0.0
        %2083 = vmatpush.msra.mxu0 %v1406
        %2084 = vmatmul.f32.gmra.mxu0 %v2066
        %v2085 = vpop.f32.mrf.mxu0
        %v2086 = vadd.f32 0.0, %v2085
        %2087 = vdwg.mxu0
        %v2088 = vadd.f32 %v1879, %v1902
        %v2089 = vadd.f32 %v2088, %v1925
        %v2090 = vadd.f32 %v2089, %v1948
        %v2091 = vadd.f32 %v2090, %v1971
        %v2092 = vadd.f32 %v1994, %v2017
        %v2093 = vadd.f32 %v2092, %v2040
        %v2094 = vadd.f32 %v2093, %v2063
        %v2095 = vadd.f32 %v2094, %v2086
        %v2096 = vpack.c.bf16 %v2095, %v2091
        %v2097 = vld [vmem:[%s809] sm:$0xf]
        %v2098 = vld [vmem:[%s809 + $0x4] sm:$0xf]
        %v2099 = vld [vmem:[%s809 + $0x8] sm:$0xf]
        %v2100 = vld [vmem:[%s809 + $0xc] sm:$0xf]
        %v2101 = vld [vmem:[%s809 + $0x10] sm:$0xf]
        %v2102 = vld [vmem:[%s809 + $0x14] sm:$0xf]
        %v2103 = vld [vmem:[%s809 + $0x18] sm:$0xf]
        %v2104 = vld [vmem:[%s809 + $0x1c] sm:$0xf]
        %v2105 = vld [vmem:[%s809 + $0x20] sm:$0xf]
        %v2106 = vld [vmem:[%s809 + $0x24] sm:$0xf]
        %v2107 = vld [vmem:[%s809 + $0x28] sm:$0xf]
        %v2108 = vld [vmem:[%s809 + $0x2c] sm:$0xf]
        %v2109 = vld [vmem:[%s809 + $0x30] sm:$0xf]
        %v2110 = vld [vmem:[%s809 + $0x34] sm:$0xf]
        %v2111 = vld [vmem:[%s809 + $0x38] sm:$0xf]
        %v2112 = vld [vmem:[%s809 + $0x3c] sm:$0xf]
        %v2113 = vld [vmem:[%s818] sm:$0x1]
        %v2115 = vperm.slane %v2113, 0
        %v2133 = vunpack.c.l.b16 %v2097
        %v2134 = vunpack.c.l.b16 %v2098
        %v2135 = vunpack.c.l.b16 %v2099
        %v2136 = vunpack.c.l.b16 %v2100
        %v2137 = vunpack.c.l.b16 %v2101
        %v2138 = vunpack.c.l.b16 %v2102
        %v2139 = vunpack.c.l.b16 %v2103
        %v2140 = vunpack.c.l.b16 %v2104
        %v2141 = vunpack.c.l.b16 %v2105
        %v2142 = vunpack.c.l.b16 %v2106
        %v2143 = vunpack.c.l.b16 %v2107
        %v2144 = vunpack.c.l.b16 %v2108
        %v2145 = vunpack.c.l.b16 %v2109
        %v2146 = vunpack.c.l.b16 %v2110
        %v2147 = vunpack.c.l.b16 %v2111
        %v2148 = vunpack.c.l.b16 %v2112
        %v2149 = vpack.c.b16 %v2134, %v2133
        %v2150 = vpack.c.b16 %v2136, %v2135
        %v2151 = vpack.c.b16 %v2138, %v2137
        %v2152 = vpack.c.b16 %v2140, %v2139
        %v2153 = vpack.c.b16 %v2142, %v2141
        %v2154 = vpack.c.b16 %v2144, %v2143
        %v2155 = vpack.c.b16 %v2146, %v2145
        %v2156 = vpack.c.b16 %v2148, %v2147
        %2165 = vmatpush.bf16.msra.mxu0 %v2156
        %2166 = vmatpush.bf16.msra.mxu0 %v2155
        %2167 = vmatpush.bf16.msra.mxu0 %v2154
        %2168 = vmatpush.bf16.msra.mxu0 %v2153
        %2169 = vmatpush.bf16.msra.mxu0 %v2152
        %2170 = vmatpush.bf16.msra.mxu0 %v2151
        %2171 = vmatpush.bf16.msra.mxu0 %v2150
        %2172 = vmatpush.bf16.msra.mxu0 %v2149
        %2173 = vmatmul.bf16.gmra.mxu0 %v2096
        %v2174 = vpop.f32.mrf.mxu0
        %v2175 = vadd.f32 %v2115, %v2174
        %v2176 = vpop.f32.mrf.mxu0
        %v2177 = vadd.f32 %v2115, %v2176
        %2178 = vdwg.mxu0
        %vm2179 = vcmp.lt.s32.totalorder %v1351, 60
        %v2180 = vsel %vm2179, 1, 0
        %v2181 = vcvt.s32.f32 %v2180
        %v2182 = vadd.f32 %v1137, %v2175
        %v2183 = vadd.f32 %v1138, %v2177
        %v2184 = vld [vmem:[%s827] sm:$0x1]
        %v2185 = vld [vmem:[%s836] sm:$0x1]
        %v2186 = vmul.f32 %v2182, %v2181
        %v2187 = vmul.f32 %v2183, %v2181
        %2188 = vadd.xlane.f32.xlu0 %v2186
        %v2189 = vpop.xlane.xlu0 %2188
        %2190 = vadd.xlane.f32.xlu0 %v2187
        %v2191 = vpop.xlane.xlu0 %2190
        %v2192 = vmul.f32 %v2189, 0.016666668
        %v2193 = vmul.f32 %v2191, 0.016666668
        %v2194 = vsub.f32 %v2186, %v2192
        %v2195 = vsub.f32 %v2187, %v2193
        %v2196 = vmul.f32 %v2194, %v2181
        %v2197 = vmul.f32 %v2195, %v2181
        %v2198 = vmul.f32 %v2196, %v2196
        %v2199 = vmul.f32 %v2197, %v2197
        %2200 = vadd.xlane.f32.xlu0 %v2198
        %v2201 = vpop.xlane.xlu0 %2200
        %2202 = vadd.xlane.f32.xlu0 %v2199
        %v2203 = vpop.xlane.xlu0 %2202
        %v2204 = vmul.f32 %v2201, 0.016666668
        %v2205 = vmul.f32 %v2203, 0.016666668
        %v2206 = vsub.f32 %v2182, %v2192
        %v2207 = vsub.f32 %v2183, %v2193
        %v2208 = vadd.f32 %v2204, 1e-05
        %v2209 = vadd.f32 %v2205, 1e-05
        %v2210 = vrsqrt.pop %v2208
        %v2211 = vmul.f32 %v2210, %v2208
        %v2212 = vmul.f32 %v2211, %v2210
        %v2213 = vmul.f32 0.5, %v2212
        %v2214 = vsub.f32 1.5, %v2213
        %v2215 = vmul.f32 %v2210, %v2214
        %vm2216 = vweird.f32 %v2208
        %vm2217 = vweird.f32 %v2210
        %vm2218 = vmor %vm2216, %vm2217
        %v2219 = vsel %vm2218, %v2210, %v2215
        %v2220 = vrsqrt.pop %v2209
        %v2221 = vmul.f32 %v2220, %v2209
        %v2222 = vmul.f32 %v2221, %v2220
        %v2223 = vmul.f32 0.5, %v2222
        %v2224 = vsub.f32 1.5, %v2223
        %v2225 = vmul.f32 %v2220, %v2224
        %vm2226 = vweird.f32 %v2209
        %vm2227 = vweird.f32 %v2220
        %vm2228 = vmor %vm2226, %vm2227
        %v2229 = vsel %vm2228, %v2220, %v2225
        %v2230 = vmul.f32 %v2206, %v2219
        %v2231 = vmul.f32 %v2207, %v2229
        %v2233 = vperm.slane %v2184, 0
        %v2235 = vmul.f32 %v2230, %v2233
        %v2236 = vmul.f32 %v2231, %v2233
        %v2238 = vperm.slane %v2185, 0
        %v2240 = vadd.f32 %v2235, %v2238
        %v2241 = vadd.f32 %v2236, %v2238
        %v2242 = vpack.c.bf16 %v2241, %v2240
        %v2243 = vld [vmem:[%s846] sm:$0xff]
        %v2244 = vld [vmem:[%s846 + $0x8] sm:$0xff]
        %v2245 = vld [vmem:[%s846 + $0x10] sm:$0xff]
        %v2246 = vld [vmem:[%s846 + $0x18] sm:$0xff]
        %v2247 = vld [vmem:[%s846 + $0x20] sm:$0xff]
        %v2248 = vld [vmem:[%s846 + $0x28] sm:$0xff]
        %v2249 = vld [vmem:[%s846 + $0x30] sm:$0xff]
        %v2250 = vld [vmem:[%s846 + $0x38] sm:$0xff]
        %v2251 = vld [vmem:[%s846 + $0x40] sm:$0xff]
        %v2252 = vld [vmem:[%s846 + $0x48] sm:$0xff]
        %v2253 = vld [vmem:[%s846 + $0x50] sm:$0xff]
        %v2254 = vld [vmem:[%s846 + $0x58] sm:$0xff]
        %v2255 = vld [vmem:[%s846 + $0x60] sm:$0xff]
        %v2256 = vld [vmem:[%s846 + $0x68] sm:$0xff]
        %v2257 = vld [vmem:[%s846 + $0x70] sm:$0xff]
        %v2258 = vld [vmem:[%s846 + $0x78] sm:$0xff]
        %v2259 = vld [vmem:[%s846 + $0x80] sm:$0xff]
        %v2260 = vld [vmem:[%s846 + $0x88] sm:$0xff]
        %v2261 = vld [vmem:[%s846 + $0x90] sm:$0xff]
        %v2262 = vld [vmem:[%s846 + $0x98] sm:$0xff]
        %v2263 = vld [vmem:[%s846 + $0xa0] sm:$0xff]
        %v2264 = vld [vmem:[%s846 + $0xa8] sm:$0xff]
        %v2265 = vld [vmem:[%s846 + $0xb0] sm:$0xff]
        %v2266 = vld [vmem:[%s846 + $0xb8] sm:$0xff]
        %v2267 = vld [vmem:[%s846 + $0xc0] sm:$0xff]
        %v2268 = vld [vmem:[%s846 + $0xc8] sm:$0xff]
        %v2269 = vld [vmem:[%s846 + $0xd0] sm:$0xff]
        %v2270 = vld [vmem:[%s846 + $0xd8] sm:$0xff]
        %v2271 = vld [vmem:[%s846 + $0xe0] sm:$0xff]
        %v2272 = vld [vmem:[%s846 + $0xe8] sm:$0xff]
        %v2273 = vld [vmem:[%s846 + $0xf0] sm:$0xff]
        %v2274 = vld [vmem:[%s846 + $0xf8] sm:$0xff]
        %v2275 = vld [vmem:[%s846 + $0x100] sm:$0xff]
        %v2276 = vld [vmem:[%s846 + $0x108] sm:$0xff]
        %v2277 = vld [vmem:[%s846 + $0x110] sm:$0xff]
        %v2278 = vld [vmem:[%s846 + $0x118] sm:$0xff]
        %v2279 = vld [vmem:[%s846 + $0x120] sm:$0xff]
        %v2280 = vld [vmem:[%s846 + $0x128] sm:$0xff]
        %v2281 = vld [vmem:[%s846 + $0x130] sm:$0xff]
        %v2282 = vld [vmem:[%s846 + $0x138] sm:$0xff]
        %v2283 = vld [vmem:[%s846 + $0x140] sm:$0xff]
        %v2284 = vld [vmem:[%s846 + $0x148] sm:$0xff]
        %v2285 = vld [vmem:[%s846 + $0x150] sm:$0xff]
        %v2286 = vld [vmem:[%s846 + $0x158] sm:$0xff]
        %v2287 = vld [vmem:[%s846 + $0x160] sm:$0xff]
        %v2288 = vld [vmem:[%s846 + $0x168] sm:$0xff]
        %v2289 = vld [vmem:[%s846 + $0x170] sm:$0xff]
        %v2290 = vld [vmem:[%s846 + $0x178] sm:$0xff]
        %v2291 = vld [vmem:[%s846 + $0x180] sm:$0xff]
        %v2292 = vld [vmem:[%s846 + $0x188] sm:$0xff]
        %v2293 = vld [vmem:[%s846 + $0x190] sm:$0xff]
        %v2294 = vld [vmem:[%s846 + $0x198] sm:$0xff]
        %v2295 = vld [vmem:[%s846 + $0x1a0] sm:$0xff]
        %v2296 = vld [vmem:[%s846 + $0x1a8] sm:$0xff]
        %v2297 = vld [vmem:[%s846 + $0x1b0] sm:$0xff]
        %v2298 = vld [vmem:[%s846 + $0x1b8] sm:$0xff]
        %v2299 = vld [vmem:[%s846 + $0x1c0] sm:$0xff]
        %v2300 = vld [vmem:[%s846 + $0x1c8] sm:$0xff]
        %v2301 = vld [vmem:[%s846 + $0x1d0] sm:$0xff]
        %v2302 = vld [vmem:[%s846 + $0x1d8] sm:$0xff]
        %v2303 = vld [vmem:[%s846 + $0x1e0] sm:$0xff]
        %v2304 = vld [vmem:[%s846 + $0x1e8] sm:$0xff]
        %v2305 = vld [vmem:[%s846 + $0x1f0] sm:$0xff]
        %v2306 = vld [vmem:[%s846 + $0x1f8] sm:$0xff]
        %v2307 = vld [vmem:[%s846 + $0x200] sm:$0xff]
        %v2308 = vld [vmem:[%s846 + $0x208] sm:$0xff]
        %v2309 = vld [vmem:[%s846 + $0x210] sm:$0xff]
        %v2310 = vld [vmem:[%s846 + $0x218] sm:$0xff]
        %v2311 = vld [vmem:[%s846 + $0x220] sm:$0xff]
        %v2312 = vld [vmem:[%s846 + $0x228] sm:$0xff]
        %v2313 = vld [vmem:[%s846 + $0x230] sm:$0xff]
        %v2314 = vld [vmem:[%s846 + $0x238] sm:$0xff]
        %v2315 = vld [vmem:[%s846 + $0x240] sm:$0xff]
        %v2316 = vld [vmem:[%s846 + $0x248] sm:$0xff]
        %v2317 = vld [vmem:[%s846 + $0x250] sm:$0xff]
        %v2318 = vld [vmem:[%s846 + $0x258] sm:$0xff]
        %v2319 = vld [vmem:[%s846 + $0x260] sm:$0xff]
        %v2320 = vld [vmem:[%s846 + $0x268] sm:$0xff]
        %v2321 = vld [vmem:[%s846 + $0x270] sm:$0xff]
        %v2322 = vld [vmem:[%s846 + $0x278] sm:$0xff]
        %v2323 = vld [vmem:[%s846 + $0x280] sm:$0xff]
        %v2324 = vld [vmem:[%s846 + $0x288] sm:$0xff]
        %v2325 = vld [vmem:[%s846 + $0x290] sm:$0xff]
        %v2326 = vld [vmem:[%s846 + $0x298] sm:$0xff]
        %v2327 = vld [vmem:[%s846 + $0x2a0] sm:$0xff]
        %v2328 = vld [vmem:[%s846 + $0x2a8] sm:$0xff]
        %v2329 = vld [vmem:[%s846 + $0x2b0] sm:$0xff]
        %v2330 = vld [vmem:[%s846 + $0x2b8] sm:$0xff]
        %v2331 = vld [vmem:[%s846 + $0x2c0] sm:$0xff]
        %v2332 = vld [vmem:[%s846 + $0x2c8] sm:$0xff]
        %v2333 = vld [vmem:[%s846 + $0x2d0] sm:$0xff]
        %v2334 = vld [vmem:[%s846 + $0x2d8] sm:$0xff]
        %v2335 = vld [vmem:[%s846 + $0x2e0] sm:$0xff]
        %v2336 = vld [vmem:[%s846 + $0x2e8] sm:$0xff]
        %v2337 = vld [vmem:[%s846 + $0x2f0] sm:$0xff]
        %v2338 = vld [vmem:[%s846 + $0x2f8] sm:$0xff]
        %v2339 = vld [vmem:[%s846 + $0x300] sm:$0xff]
        %v2340 = vld [vmem:[%s846 + $0x308] sm:$0xff]
        %v2341 = vld [vmem:[%s846 + $0x310] sm:$0xff]
        %v2342 = vld [vmem:[%s846 + $0x318] sm:$0xff]
        %v2343 = vld [vmem:[%s846 + $0x320] sm:$0xff]
        %v2344 = vld [vmem:[%s846 + $0x328] sm:$0xff]
        %v2345 = vld [vmem:[%s846 + $0x330] sm:$0xff]
        %v2346 = vld [vmem:[%s846 + $0x338] sm:$0xff]
        %v2347 = vld [vmem:[%s846 + $0x340] sm:$0xff]
        %v2348 = vld [vmem:[%s846 + $0x348] sm:$0xff]
        %v2349 = vld [vmem:[%s846 + $0x350] sm:$0xff]
        %v2350 = vld [vmem:[%s846 + $0x358] sm:$0xff]
        %v2351 = vld [vmem:[%s846 + $0x360] sm:$0xff]
        %v2352 = vld [vmem:[%s846 + $0x368] sm:$0xff]
        %v2353 = vld [vmem:[%s846 + $0x370] sm:$0xff]
        %v2354 = vld [vmem:[%s846 + $0x378] sm:$0xff]
        %v2355 = vld [vmem:[%s846 + $0x380] sm:$0xff]
        %v2356 = vld [vmem:[%s846 + $0x388] sm:$0xff]
        %v2357 = vld [vmem:[%s846 + $0x390] sm:$0xff]
        %v2358 = vld [vmem:[%s846 + $0x398] sm:$0xff]
        %v2359 = vld [vmem:[%s846 + $0x3a0] sm:$0xff]
        %v2360 = vld [vmem:[%s846 + $0x3a8] sm:$0xff]
        %v2361 = vld [vmem:[%s846 + $0x3b0] sm:$0xff]
        %v2362 = vld [vmem:[%s846 + $0x3b8] sm:$0xff]
        %v2363 = vld [vmem:[%s846 + $0x3c0] sm:$0xff]
        %v2364 = vld [vmem:[%s846 + $0x3c8] sm:$0xff]
        %v2365 = vld [vmem:[%s846 + $0x3d0] sm:$0xff]
        %v2366 = vld [vmem:[%s846 + $0x3d8] sm:$0xff]
        %v2367 = vld [vmem:[%s846 + $0x3e0] sm:$0xff]
        %v2368 = vld [vmem:[%s846 + $0x3e8] sm:$0xff]
        %v2369 = vld [vmem:[%s846 + $0x3f0] sm:$0xff]
        %v2370 = vld [vmem:[%s846 + $0x3f8] sm:$0xff]
        %v2371 = vld [vmem:[%s856] sm:$0xff]
        %v2372 = vld [vmem:[%s856 + $0x8] sm:$0xff]
        %v2375 = vperm.slane %v2371, 0
        %v2376 = vperm.slane %v2371, 1
        %v2377 = vperm.slane %v2371, 2
        %v2378 = vperm.slane %v2371, 3
        %v2379 = vperm.slane %v2371, 4
        %v2380 = vperm.slane %v2371, 5
        %v2381 = vperm.slane %v2371, 6
        %v2382 = vperm.slane %v2371, 7
        %v2383 = vperm.slane %v2372, 0
        %v2384 = vperm.slane %v2372, 1
        %v2385 = vperm.slane %v2372, 2
        %v2386 = vperm.slane %v2372, 3
        %v2387 = vperm.slane %v2372, 4
        %v2388 = vperm.slane %v2372, 5
        %v2389 = vperm.slane %v2372, 6
        %v2390 = vperm.slane %v2372, 7
        %v2535 = vunpack.c.l.b16 %v2243
        %v2536 = vunpack.c.h.b16 %v2243
        %v2537 = vunpack.c.l.b16 %v2244
        %v2538 = vunpack.c.h.b16 %v2244
        %v2539 = vunpack.c.l.b16 %v2245
        %v2540 = vunpack.c.h.b16 %v2245
        %v2541 = vunpack.c.l.b16 %v2246
        %v2542 = vunpack.c.h.b16 %v2246
        %v2543 = vunpack.c.l.b16 %v2247
        %v2544 = vunpack.c.h.b16 %v2247
        %v2545 = vunpack.c.l.b16 %v2248
        %v2546 = vunpack.c.h.b16 %v2248
        %v2547 = vunpack.c.l.b16 %v2249
        %v2548 = vunpack.c.h.b16 %v2249
        %v2549 = vunpack.c.l.b16 %v2250
        %v2550 = vunpack.c.h.b16 %v2250
        %v2551 = vunpack.c.l.b16 %v2251
        %v2552 = vunpack.c.h.b16 %v2251
        %v2553 = vunpack.c.l.b16 %v2252
        %v2554 = vunpack.c.h.b16 %v2252
        %v2555 = vunpack.c.l.b16 %v2253
        %v2556 = vunpack.c.h.b16 %v2253
        %v2557 = vunpack.c.l.b16 %v2254
        %v2558 = vunpack.c.h.b16 %v2254
        %v2559 = vunpack.c.l.b16 %v2255
        %v2560 = vunpack.c.h.b16 %v2255
        %v2561 = vunpack.c.l.b16 %v2256
        %v2562 = vunpack.c.h.b16 %v2256
        %v2563 = vunpack.c.l.b16 %v2257
        %v2564 = vunpack.c.h.b16 %v2257
        %v2565 = vunpack.c.l.b16 %v2258
        %v2566 = vunpack.c.h.b16 %v2258
        %v2567 = vunpack.c.l.b16 %v2259
        %v2568 = vunpack.c.h.b16 %v2259
        %v2569 = vunpack.c.l.b16 %v2260
        %v2570 = vunpack.c.h.b16 %v2260
        %v2571 = vunpack.c.l.b16 %v2261
        %v2572 = vunpack.c.h.b16 %v2261
        %v2573 = vunpack.c.l.b16 %v2262
        %v2574 = vunpack.c.h.b16 %v2262
        %v2575 = vunpack.c.l.b16 %v2263
        %v2576 = vunpack.c.h.b16 %v2263
        %v2577 = vunpack.c.l.b16 %v2264
        %v2578 = vunpack.c.h.b16 %v2264
        %v2579 = vunpack.c.l.b16 %v2265
        %v2580 = vunpack.c.h.b16 %v2265
        %v2581 = vunpack.c.l.b16 %v2266
        %v2582 = vunpack.c.h.b16 %v2266
        %v2583 = vunpack.c.l.b16 %v2267
        %v2584 = vunpack.c.h.b16 %v2267
        %v2585 = vunpack.c.l.b16 %v2268
        %v2586 = vunpack.c.h.b16 %v2268
        %v2587 = vunpack.c.l.b16 %v2269
        %v2588 = vunpack.c.h.b16 %v2269
        %v2589 = vunpack.c.l.b16 %v2270
        %v2590 = vunpack.c.h.b16 %v2270
        %v2591 = vunpack.c.l.b16 %v2271
        %v2592 = vunpack.c.h.b16 %v2271
        %v2593 = vunpack.c.l.b16 %v2272
        %v2594 = vunpack.c.h.b16 %v2272
        %v2595 = vunpack.c.l.b16 %v2273
        %v2596 = vunpack.c.h.b16 %v2273
        %v2597 = vunpack.c.l.b16 %v2274
        %v2598 = vunpack.c.h.b16 %v2274
        %v2599 = vunpack.c.l.b16 %v2275
        %v2600 = vunpack.c.h.b16 %v2275
        %v2601 = vunpack.c.l.b16 %v2276
        %v2602 = vunpack.c.h.b16 %v2276
        %v2603 = vunpack.c.l.b16 %v2277
        %v2604 = vunpack.c.h.b16 %v2277
        %v2605 = vunpack.c.l.b16 %v2278
        %v2606 = vunpack.c.h.b16 %v2278
        %v2607 = vunpack.c.l.b16 %v2279
        %v2608 = vunpack.c.h.b16 %v2279
        %v2609 = vunpack.c.l.b16 %v2280
        %v2610 = vunpack.c.h.b16 %v2280
        %v2611 = vunpack.c.l.b16 %v2281
        %v2612 = vunpack.c.h.b16 %v2281
        %v2613 = vunpack.c.l.b16 %v2282
        %v2614 = vunpack.c.h.b16 %v2282
        %v2615 = vunpack.c.l.b16 %v2283
        %v2616 = vunpack.c.h.b16 %v2283
        %v2617 = vunpack.c.l.b16 %v2284
        %v2618 = vunpack.c.h.b16 %v2284
        %v2619 = vunpack.c.l.b16 %v2285
        %v2620 = vunpack.c.h.b16 %v2285
        %v2621 = vunpack.c.l.b16 %v2286
        %v2622 = vunpack.c.h.b16 %v2286
        %v2623 = vunpack.c.l.b16 %v2287
        %v2624 = vunpack.c.h.b16 %v2287
        %v2625 = vunpack.c.l.b16 %v2288
        %v2626 = vunpack.c.h.b16 %v2288
        %v2627 = vunpack.c.l.b16 %v2289
        %v2628 = vunpack.c.h.b16 %v2289
        %v2629 = vunpack.c.l.b16 %v2290
        %v2630 = vunpack.c.h.b16 %v2290
        %v2631 = vunpack.c.l.b16 %v2291
        %v2632 = vunpack.c.h.b16 %v2291
        %v2633 = vunpack.c.l.b16 %v2292
        %v2634 = vunpack.c.h.b16 %v2292
        %v2635 = vunpack.c.l.b16 %v2293
        %v2636 = vunpack.c.h.b16 %v2293
        %v2637 = vunpack.c.l.b16 %v2294
        %v2638 = vunpack.c.h.b16 %v2294
        %v2639 = vunpack.c.l.b16 %v2295
        %v2640 = vunpack.c.h.b16 %v2295
        %v2641 = vunpack.c.l.b16 %v2296
        %v2642 = vunpack.c.h.b16 %v2296
        %v2643 = vunpack.c.l.b16 %v2297
        %v2644 = vunpack.c.h.b16 %v2297
        %v2645 = vunpack.c.l.b16 %v2298
        %v2646 = vunpack.c.h.b16 %v2298
        %v2647 = vunpack.c.l.b16 %v2299
        %v2648 = vunpack.c.h.b16 %v2299
        %v2649 = vunpack.c.l.b16 %v2300
        %v2650 = vunpack.c.h.b16 %v2300
        %v2651 = vunpack.c.l.b16 %v2301
        %v2652 = vunpack.c.h.b16 %v2301
        %v2653 = vunpack.c.l.b16 %v2302
        %v2654 = vunpack.c.h.b16 %v2302
        %v2655 = vunpack.c.l.b16 %v2303
        %v2656 = vunpack.c.h.b16 %v2303
        %v2657 = vunpack.c.l.b16 %v2304
        %v2658 = vunpack.c.h.b16 %v2304
        %v2659 = vunpack.c.l.b16 %v2305
        %v2660 = vunpack.c.h.b16 %v2305
        %v2661 = vunpack.c.l.b16 %v2306
        %v2662 = vunpack.c.h.b16 %v2306
        %v2663 = vunpack.c.l.b16 %v2307
        %v2664 = vunpack.c.h.b16 %v2307
        %v2665 = vunpack.c.l.b16 %v2308
        %v2666 = vunpack.c.h.b16 %v2308
        %v2667 = vunpack.c.l.b16 %v2309
        %v2668 = vunpack.c.h.b16 %v2309
        %v2669 = vunpack.c.l.b16 %v2310
        %v2670 = vunpack.c.h.b16 %v2310
        %v2671 = vunpack.c.l.b16 %v2311
        %v2672 = vunpack.c.h.b16 %v2311
        %v2673 = vunpack.c.l.b16 %v2312
        %v2674 = vunpack.c.h.b16 %v2312
        %v2675 = vunpack.c.l.b16 %v2313
        %v2676 = vunpack.c.h.b16 %v2313
        %v2677 = vunpack.c.l.b16 %v2314
        %v2678 = vunpack.c.h.b16 %v2314
        %v2679 = vunpack.c.l.b16 %v2315
        %v2680 = vunpack.c.h.b16 %v2315
        %v2681 = vunpack.c.l.b16 %v2316
        %v2682 = vunpack.c.h.b16 %v2316
        %v2683 = vunpack.c.l.b16 %v2317
        %v2684 = vunpack.c.h.b16 %v2317
        %v2685 = vunpack.c.l.b16 %v2318
        %v2686 = vunpack.c.h.b16 %v2318
        %v2687 = vunpack.c.l.b16 %v2319
        %v2688 = vunpack.c.h.b16 %v2319
        %v2689 = vunpack.c.l.b16 %v2320
        %v2690 = vunpack.c.h.b16 %v2320
        %v2691 = vunpack.c.l.b16 %v2321
        %v2692 = vunpack.c.h.b16 %v2321
        %v2693 = vunpack.c.l.b16 %v2322
        %v2694 = vunpack.c.h.b16 %v2322
        %v2695 = vunpack.c.l.b16 %v2323
        %v2696 = vunpack.c.h.b16 %v2323
        %v2697 = vunpack.c.l.b16 %v2324
        %v2698 = vunpack.c.h.b16 %v2324
        %v2699 = vunpack.c.l.b16 %v2325
        %v2700 = vunpack.c.h.b16 %v2325
        %v2701 = vunpack.c.l.b16 %v2326
        %v2702 = vunpack.c.h.b16 %v2326
        %v2703 = vunpack.c.l.b16 %v2327
        %v2704 = vunpack.c.h.b16 %v2327
        %v2705 = vunpack.c.l.b16 %v2328
        %v2706 = vunpack.c.h.b16 %v2328
        %v2707 = vunpack.c.l.b16 %v2329
        %v2708 = vunpack.c.h.b16 %v2329
        %v2709 = vunpack.c.l.b16 %v2330
        %v2710 = vunpack.c.h.b16 %v2330
        %v2711 = vunpack.c.l.b16 %v2331
        %v2712 = vunpack.c.h.b16 %v2331
        %v2713 = vunpack.c.l.b16 %v2332
        %v2714 = vunpack.c.h.b16 %v2332
        %v2715 = vunpack.c.l.b16 %v2333
        %v2716 = vunpack.c.h.b16 %v2333
        %v2717 = vunpack.c.l.b16 %v2334
        %v2718 = vunpack.c.h.b16 %v2334
        %v2719 = vunpack.c.l.b16 %v2335
        %v2720 = vunpack.c.h.b16 %v2335
        %v2721 = vunpack.c.l.b16 %v2336
        %v2722 = vunpack.c.h.b16 %v2336
        %v2723 = vunpack.c.l.b16 %v2337
        %v2724 = vunpack.c.h.b16 %v2337
        %v2725 = vunpack.c.l.b16 %v2338
        %v2726 = vunpack.c.h.b16 %v2338
        %v2727 = vunpack.c.l.b16 %v2339
        %v2728 = vunpack.c.h.b16 %v2339
        %v2729 = vunpack.c.l.b16 %v2340
        %v2730 = vunpack.c.h.b16 %v2340
        %v2731 = vunpack.c.l.b16 %v2341
        %v2732 = vunpack.c.h.b16 %v2341
        %v2733 = vunpack.c.l.b16 %v2342
        %v2734 = vunpack.c.h.b16 %v2342
        %v2735 = vunpack.c.l.b16 %v2343
        %v2736 = vunpack.c.h.b16 %v2343
        %v2737 = vunpack.c.l.b16 %v2344
        %v2738 = vunpack.c.h.b16 %v2344
        %v2739 = vunpack.c.l.b16 %v2345
        %v2740 = vunpack.c.h.b16 %v2345
        %v2741 = vunpack.c.l.b16 %v2346
        %v2742 = vunpack.c.h.b16 %v2346
        %v2743 = vunpack.c.l.b16 %v2347
        %v2744 = vunpack.c.h.b16 %v2347
        %v2745 = vunpack.c.l.b16 %v2348
        %v2746 = vunpack.c.h.b16 %v2348
        %v2747 = vunpack.c.l.b16 %v2349
        %v2748 = vunpack.c.h.b16 %v2349
        %v2749 = vunpack.c.l.b16 %v2350
        %v2750 = vunpack.c.h.b16 %v2350
        %v2751 = vunpack.c.l.b16 %v2351
        %v2752 = vunpack.c.h.b16 %v2351
        %v2753 = vunpack.c.l.b16 %v2352
        %v2754 = vunpack.c.h.b16 %v2352
        %v2755 = vunpack.c.l.b16 %v2353
        %v2756 = vunpack.c.h.b16 %v2353
        %v2757 = vunpack.c.l.b16 %v2354
        %v2758 = vunpack.c.h.b16 %v2354
        %v2759 = vunpack.c.l.b16 %v2355
        %v2760 = vunpack.c.h.b16 %v2355
        %v2761 = vunpack.c.l.b16 %v2356
        %v2762 = vunpack.c.h.b16 %v2356
        %v2763 = vunpack.c.l.b16 %v2357
        %v2764 = vunpack.c.h.b16 %v2357
        %v2765 = vunpack.c.l.b16 %v2358
        %v2766 = vunpack.c.h.b16 %v2358
        %v2767 = vunpack.c.l.b16 %v2359
        %v2768 = vunpack.c.h.b16 %v2359
        %v2769 = vunpack.c.l.b16 %v2360
        %v2770 = vunpack.c.h.b16 %v2360
        %v2771 = vunpack.c.l.b16 %v2361
        %v2772 = vunpack.c.h.b16 %v2361
        %v2773 = vunpack.c.l.b16 %v2362
        %v2774 = vunpack.c.h.b16 %v2362
        %v2775 = vunpack.c.l.b16 %v2363
        %v2776 = vunpack.c.h.b16 %v2363
        %v2777 = vunpack.c.l.b16 %v2364
        %v2778 = vunpack.c.h.b16 %v2364
        %v2779 = vunpack.c.l.b16 %v2365
        %v2780 = vunpack.c.h.b16 %v2365
        %v2781 = vunpack.c.l.b16 %v2366
        %v2782 = vunpack.c.h.b16 %v2366
        %v2783 = vunpack.c.l.b16 %v2367
        %v2784 = vunpack.c.h.b16 %v2367
        %v2785 = vunpack.c.l.b16 %v2368
        %v2786 = vunpack.c.h.b16 %v2368
        %v2787 = vunpack.c.l.b16 %v2369
        %v2788 = vunpack.c.h.b16 %v2369
        %v2789 = vunpack.c.l.b16 %v2370
        %v2790 = vunpack.c.h.b16 %v2370
        %v2791 = vpack.c.b16 %v2551, %v2535
        %v2792 = vpack.c.b16 %v2552, %v2536
        %v2793 = vpack.c.b16 %v2553, %v2537
        %v2794 = vpack.c.b16 %v2554, %v2538
        %v2795 = vpack.c.b16 %v2555, %v2539
        %v2796 = vpack.c.b16 %v2556, %v2540
        %v2797 = vpack.c.b16 %v2557, %v2541
        %v2798 = vpack.c.b16 %v2558, %v2542
        %v2799 = vpack.c.b16 %v2559, %v2543
        %v2800 = vpack.c.b16 %v2560, %v2544
        %v2801 = vpack.c.b16 %v2561, %v2545
        %v2802 = vpack.c.b16 %v2562, %v2546
        %v2803 = vpack.c.b16 %v2563, %v2547
        %v2804 = vpack.c.b16 %v2564, %v2548
        %v2805 = vpack.c.b16 %v2565, %v2549
        %v2806 = vpack.c.b16 %v2566, %v2550
        %v2807 = vpack.c.b16 %v2583, %v2567
        %v2808 = vpack.c.b16 %v2584, %v2568
        %v2809 = vpack.c.b16 %v2585, %v2569
        %v2810 = vpack.c.b16 %v2586, %v2570
        %v2811 = vpack.c.b16 %v2587, %v2571
        %v2812 = vpack.c.b16 %v2588, %v2572
        %v2813 = vpack.c.b16 %v2589, %v2573
        %v2814 = vpack.c.b16 %v2590, %v2574
        %v2815 = vpack.c.b16 %v2591, %v2575
        %v2816 = vpack.c.b16 %v2592, %v2576
        %v2817 = vpack.c.b16 %v2593, %v2577
        %v2818 = vpack.c.b16 %v2594, %v2578
        %v2819 = vpack.c.b16 %v2595, %v2579
        %v2820 = vpack.c.b16 %v2596, %v2580
        %v2821 = vpack.c.b16 %v2597, %v2581
        %v2822 = vpack.c.b16 %v2598, %v2582
        %v2823 = vpack.c.b16 %v2615, %v2599
        %v2824 = vpack.c.b16 %v2616, %v2600
        %v2825 = vpack.c.b16 %v2617, %v2601
        %v2826 = vpack.c.b16 %v2618, %v2602
        %v2827 = vpack.c.b16 %v2619, %v2603
        %v2828 = vpack.c.b16 %v2620, %v2604
        %v2829 = vpack.c.b16 %v2621, %v2605
        %v2830 = vpack.c.b16 %v2622, %v2606
        %v2831 = vpack.c.b16 %v2623, %v2607
        %v2832 = vpack.c.b16 %v2624, %v2608
        %v2833 = vpack.c.b16 %v2625, %v2609
        %v2834 = vpack.c.b16 %v2626, %v2610
        %v2835 = vpack.c.b16 %v2627, %v2611
        %v2836 = vpack.c.b16 %v2628, %v2612
        %v2837 = vpack.c.b16 %v2629, %v2613
        %v2838 = vpack.c.b16 %v2630, %v2614
        %v2839 = vpack.c.b16 %v2647, %v2631
        %v2840 = vpack.c.b16 %v2648, %v2632
        %v2841 = vpack.c.b16 %v2649, %v2633
        %v2842 = vpack.c.b16 %v2650, %v2634
        %v2843 = vpack.c.b16 %v2651, %v2635
        %v2844 = vpack.c.b16 %v2652, %v2636
        %v2845 = vpack.c.b16 %v2653, %v2637
        %v2846 = vpack.c.b16 %v2654, %v2638
        %v2847 = vpack.c.b16 %v2655, %v2639
        %v2848 = vpack.c.b16 %v2656, %v2640
        %v2849 = vpack.c.b16 %v2657, %v2641
        %v2850 = vpack.c.b16 %v2658, %v2642
        %v2851 = vpack.c.b16 %v2659, %v2643
        %v2852 = vpack.c.b16 %v2660, %v2644
        %v2853 = vpack.c.b16 %v2661, %v2645
        %v2854 = vpack.c.b16 %v2662, %v2646
        %v2855 = vpack.c.b16 %v2679, %v2663
        %v2856 = vpack.c.b16 %v2680, %v2664
        %v2857 = vpack.c.b16 %v2681, %v2665
        %v2858 = vpack.c.b16 %v2682, %v2666
        %v2859 = vpack.c.b16 %v2683, %v2667
        %v2860 = vpack.c.b16 %v2684, %v2668
        %v2861 = vpack.c.b16 %v2685, %v2669
        %v2862 = vpack.c.b16 %v2686, %v2670
        %v2863 = vpack.c.b16 %v2687, %v2671
        %v2864 = vpack.c.b16 %v2688, %v2672
        %v2865 = vpack.c.b16 %v2689, %v2673
        %v2866 = vpack.c.b16 %v2690, %v2674
        %v2867 = vpack.c.b16 %v2691, %v2675
        %v2868 = vpack.c.b16 %v2692, %v2676
        %v2869 = vpack.c.b16 %v2693, %v2677
        %v2870 = vpack.c.b16 %v2694, %v2678
        %v2871 = vpack.c.b16 %v2711, %v2695
        %v2872 = vpack.c.b16 %v2712, %v2696
        %v2873 = vpack.c.b16 %v2713, %v2697
        %v2874 = vpack.c.b16 %v2714, %v2698
        %v2875 = vpack.c.b16 %v2715, %v2699
        %v2876 = vpack.c.b16 %v2716, %v2700
        %v2877 = vpack.c.b16 %v2717, %v2701
        %v2878 = vpack.c.b16 %v2718, %v2702
        %v2879 = vpack.c.b16 %v2719, %v2703
        %v2880 = vpack.c.b16 %v2720, %v2704
        %v2881 = vpack.c.b16 %v2721, %v2705
        %v2882 = vpack.c.b16 %v2722, %v2706
        %v2883 = vpack.c.b16 %v2723, %v2707
        %v2884 = vpack.c.b16 %v2724, %v2708
        %v2885 = vpack.c.b16 %v2725, %v2709
        %v2886 = vpack.c.b16 %v2726, %v2710
        %v2887 = vpack.c.b16 %v2743, %v2727
        %v2888 = vpack.c.b16 %v2744, %v2728
        %v2889 = vpack.c.b16 %v2745, %v2729
        %v2890 = vpack.c.b16 %v2746, %v2730
        %v2891 = vpack.c.b16 %v2747, %v2731
        %v2892 = vpack.c.b16 %v2748, %v2732
        %v2893 = vpack.c.b16 %v2749, %v2733
        %v2894 = vpack.c.b16 %v2750, %v2734
        %v2895 = vpack.c.b16 %v2751, %v2735
        %v2896 = vpack.c.b16 %v2752, %v2736
        %v2897 = vpack.c.b16 %v2753, %v2737
        %v2898 = vpack.c.b16 %v2754, %v2738
        %v2899 = vpack.c.b16 %v2755, %v2739
        %v2900 = vpack.c.b16 %v2756, %v2740
        %v2901 = vpack.c.b16 %v2757, %v2741
        %v2902 = vpack.c.b16 %v2758, %v2742
        %v2903 = vpack.c.b16 %v2775, %v2759
        %v2904 = vpack.c.b16 %v2776, %v2760
        %v2905 = vpack.c.b16 %v2777, %v2761
        %v2906 = vpack.c.b16 %v2778, %v2762
        %v2907 = vpack.c.b16 %v2779, %v2763
        %v2908 = vpack.c.b16 %v2780, %v2764
        %v2909 = vpack.c.b16 %v2781, %v2765
        %v2910 = vpack.c.b16 %v2782, %v2766
        %v2911 = vpack.c.b16 %v2783, %v2767
        %v2912 = vpack.c.b16 %v2784, %v2768
        %v2913 = vpack.c.b16 %v2785, %v2769
        %v2914 = vpack.c.b16 %v2786, %v2770
        %v2915 = vpack.c.b16 %v2787, %v2771
        %v2916 = vpack.c.b16 %v2788, %v2772
        %v2917 = vpack.c.b16 %v2789, %v2773
        %v2918 = vpack.c.b16 %v2790, %v2774
        %3047 = vmatpush.bf16.msra.mxu0 %v2903
        %3048 = vmatpush.bf16.msra.mxu0 %v2887
        %3049 = vmatpush.bf16.msra.mxu0 %v2871
        %3050 = vmatpush.bf16.msra.mxu0 %v2855
        %3051 = vmatpush.bf16.msra.mxu0 %v2839
        %3052 = vmatpush.bf16.msra.mxu0 %v2823
        %3053 = vmatpush.bf16.msra.mxu0 %v2807
        %3054 = vmatpush.bf16.msra.mxu0 %v2791
        %3055 = vmatmul.bf16.gmra.mxu0 %v2242
        %v3056 = vpop.f32.mrf.mxu0
        %v3057 = vadd.f32 %v2375, %v3056
        %v3058 = vpop.f32.mrf.mxu0
        %v3059 = vadd.f32 %v2375, %v3058
        %3060 = vdwg.mxu0
        %3061 = vmatpush.bf16.msra.mxu0 %v2904
        %3062 = vmatpush.bf16.msra.mxu0 %v2888
        %3063 = vmatpush.bf16.msra.mxu0 %v2872
        %3064 = vmatpush.bf16.msra.mxu0 %v2856
        %3065 = vmatpush.bf16.msra.mxu0 %v2840
        %3066 = vmatpush.bf16.msra.mxu0 %v2824
        %3067 = vmatpush.bf16.msra.mxu0 %v2808
        %3068 = vmatpush.bf16.msra.mxu0 %v2792
        %3069 = vmatmul.bf16.gmra.mxu0 %v2242
        %v3070 = vpop.f32.mrf.mxu0
        %v3071 = vadd.f32 %v2376, %v3070
        %v3072 = vpop.f32.mrf.mxu0
        %v3073 = vadd.f32 %v2376, %v3072
        %3074 = vdwg.mxu0
        %3075 = vmatpush.bf16.msra.mxu0 %v2905
        %3076 = vmatpush.bf16.msra.mxu0 %v2889
        %3077 = vmatpush.bf16.msra.mxu0 %v2873
        %3078 = vmatpush.bf16.msra.mxu0 %v2857
        %3079 = vmatpush.bf16.msra.mxu0 %v2841
        %3080 = vmatpush.bf16.msra.mxu0 %v2825
        %3081 = vmatpush.bf16.msra.mxu0 %v2809
        %3082 = vmatpush.bf16.msra.mxu0 %v2793
        %3083 = vmatmul.bf16.gmra.mxu0 %v2242
        %v3084 = vpop.f32.mrf.mxu0
        %v3085 = vadd.f32 %v2377, %v3084
        %v3086 = vpop.f32.mrf.mxu0
        %v3087 = vadd.f32 %v2377, %v3086
        %3088 = vdwg.mxu0
        %3089 = vmatpush.bf16.msra.mxu0 %v2906
        %3090 = vmatpush.bf16.msra.mxu0 %v2890
        %3091 = vmatpush.bf16.msra.mxu0 %v2874
        %3092 = vmatpush.bf16.msra.mxu0 %v2858
        %3093 = vmatpush.bf16.msra.mxu0 %v2842
        %3094 = vmatpush.bf16.msra.mxu0 %v2826
        %3095 = vmatpush.bf16.msra.mxu0 %v2810
        %3096 = vmatpush.bf16.msra.mxu0 %v2794
        %3097 = vmatmul.bf16.gmra.mxu0 %v2242
        %v3098 = vpop.f32.mrf.mxu0
        %v3099 = vadd.f32 %v2378, %v3098
        %v3100 = vpop.f32.mrf.mxu0
        %v3101 = vadd.f32 %v2378, %v3100
        %3102 = vdwg.mxu0
        %3103 = vmatpush.bf16.msra.mxu0 %v2907
        %3104 = vmatpush.bf16.msra.mxu0 %v2891
        %3105 = vmatpush.bf16.msra.mxu0 %v2875
        %3106 = vmatpush.bf16.msra.mxu0 %v2859
        %3107 = vmatpush.bf16.msra.mxu0 %v2843
        %3108 = vmatpush.bf16.msra.mxu0 %v2827
        %3109 = vmatpush.bf16.msra.mxu0 %v2811
        %3110 = vmatpush.bf16.msra.mxu0 %v2795
        %3111 = vmatmul.bf16.gmra.mxu0 %v2242
        %v3112 = vpop.f32.mrf.mxu0
        %v3113 = vadd.f32 %v2379, %v3112
        %v3114 = vpop.f32.mrf.mxu0
        %v3115 = vadd.f32 %v2379, %v3114
        %3116 = vdwg.mxu0
        %3117 = vmatpush.bf16.msra.mxu0 %v2908
        %3118 = vmatpush.bf16.msra.mxu0 %v2892
        %3119 = vmatpush.bf16.msra.mxu0 %v2876
        %3120 = vmatpush.bf16.msra.mxu0 %v2860
        %3121 = vmatpush.bf16.msra.mxu0 %v2844
        %3122 = vmatpush.bf16.msra.mxu0 %v2828
        %3123 = vmatpush.bf16.msra.mxu0 %v2812
        %3124 = vmatpush.bf16.msra.mxu0 %v2796
        %3125 = vmatmul.bf16.gmra.mxu0 %v2242
        %v3126 = vpop.f32.mrf.mxu0
        %v3127 = vadd.f32 %v2380, %v3126
        %v3128 = vpop.f32.mrf.mxu0
        %v3129 = vadd.f32 %v2380, %v3128
        %3130 = vdwg.mxu0
        %3131 = vmatpush.bf16.msra.mxu0 %v2909
        %3132 = vmatpush.bf16.msra.mxu0 %v2893
        %3133 = vmatpush.bf16.msra.mxu0 %v2877
        %3134 = vmatpush.bf16.msra.mxu0 %v2861
        %3135 = vmatpush.bf16.msra.mxu0 %v2845
        %3136 = vmatpush.bf16.msra.mxu0 %v2829
        %3137 = vmatpush.bf16.msra.mxu0 %v2813
        %3138 = vmatpush.bf16.msra.mxu0 %v2797
        %3139 = vmatmul.bf16.gmra.mxu0 %v2242
        %v3140 = vpop.f32.mrf.mxu0
        %v3141 = vadd.f32 %v2381, %v3140
        %v3142 = vpop.f32.mrf.mxu0
        %v3143 = vadd.f32 %v2381, %v3142
        %3144 = vdwg.mxu0
        %3145 = vmatpush.bf16.msra.mxu0 %v2910
        %3146 = vmatpush.bf16.msra.mxu0 %v2894
        %3147 = vmatpush.bf16.msra.mxu0 %v2878
        %3148 = vmatpush.bf16.msra.mxu0 %v2862
        %3149 = vmatpush.bf16.msra.mxu0 %v2846
        %3150 = vmatpush.bf16.msra.mxu0 %v2830
        %3151 = vmatpush.bf16.msra.mxu0 %v2814
        %3152 = vmatpush.bf16.msra.mxu0 %v2798
        %3153 = vmatmul.bf16.gmra.mxu0 %v2242
        %v3154 = vpop.f32.mrf.mxu0
        %v3155 = vadd.f32 %v2382, %v3154
        %v3156 = vpop.f32.mrf.mxu0
        %v3157 = vadd.f32 %v2382, %v3156
        %3158 = vdwg.mxu0
        %3159 = vmatpush.bf16.msra.mxu0 %v2911
        %3160 = vmatpush.bf16.msra.mxu0 %v2895
        %3161 = vmatpush.bf16.msra.mxu0 %v2879
        %3162 = vmatpush.bf16.msra.mxu0 %v2863
        %3163 = vmatpush.bf16.msra.mxu0 %v2847
        %3164 = vmatpush.bf16.msra.mxu0 %v2831
        %3165 = vmatpush.bf16.msra.mxu0 %v2815
        %3166 = vmatpush.bf16.msra.mxu0 %v2799
        %3167 = vmatmul.bf16.gmra.mxu0 %v2242
        %v3168 = vpop.f32.mrf.mxu0
        %v3169 = vadd.f32 %v2383, %v3168
        %v3170 = vpop.f32.mrf.mxu0
        %v3171 = vadd.f32 %v2383, %v3170
        %3172 = vdwg.mxu0
        %3173 = vmatpush.bf16.msra.mxu0 %v2912
        %3174 = vmatpush.bf16.msra.mxu0 %v2896
        %3175 = vmatpush.bf16.msra.mxu0 %v2880
        %3176 = vmatpush.bf16.msra.mxu0 %v2864
        %3177 = vmatpush.bf16.msra.mxu0 %v2848
        %3178 = vmatpush.bf16.msra.mxu0 %v2832
        %3179 = vmatpush.bf16.msra.mxu0 %v2816
        %3180 = vmatpush.bf16.msra.mxu0 %v2800
        %3181 = vmatmul.bf16.gmra.mxu0 %v2242
        %v3182 = vpop.f32.mrf.mxu0
        %v3183 = vadd.f32 %v2384, %v3182
        %v3184 = vpop.f32.mrf.mxu0
        %v3185 = vadd.f32 %v2384, %v3184
        %3186 = vdwg.mxu0
        %3187 = vmatpush.bf16.msra.mxu0 %v2913
        %3188 = vmatpush.bf16.msra.mxu0 %v2897
        %3189 = vmatpush.bf16.msra.mxu0 %v2881
        %3190 = vmatpush.bf16.msra.mxu0 %v2865
        %3191 = vmatpush.bf16.msra.mxu0 %v2849
        %3192 = vmatpush.bf16.msra.mxu0 %v2833
        %3193 = vmatpush.bf16.msra.mxu0 %v2817
        %3194 = vmatpush.bf16.msra.mxu0 %v2801
        %3195 = vmatmul.bf16.gmra.mxu0 %v2242
        %v3196 = vpop.f32.mrf.mxu0
        %v3197 = vadd.f32 %v2385, %v3196
        %v3198 = vpop.f32.mrf.mxu0
        %v3199 = vadd.f32 %v2385, %v3198
        %3200 = vdwg.mxu0
        %3201 = vmatpush.bf16.msra.mxu0 %v2914
        %3202 = vmatpush.bf16.msra.mxu0 %v2898
        %3203 = vmatpush.bf16.msra.mxu0 %v2882
        %3204 = vmatpush.bf16.msra.mxu0 %v2866
        %3205 = vmatpush.bf16.msra.mxu0 %v2850
        %3206 = vmatpush.bf16.msra.mxu0 %v2834
        %3207 = vmatpush.bf16.msra.mxu0 %v2818
        %3208 = vmatpush.bf16.msra.mxu0 %v2802
        %3209 = vmatmul.bf16.gmra.mxu0 %v2242
        %v3210 = vpop.f32.mrf.mxu0
        %v3211 = vadd.f32 %v2386, %v3210
        %v3212 = vpop.f32.mrf.mxu0
        %v3213 = vadd.f32 %v2386, %v3212
        %3214 = vdwg.mxu0
        %3215 = vmatpush.bf16.msra.mxu0 %v2915
        %3216 = vmatpush.bf16.msra.mxu0 %v2899
        %3217 = vmatpush.bf16.msra.mxu0 %v2883
        %3218 = vmatpush.bf16.msra.mxu0 %v2867
        %3219 = vmatpush.bf16.msra.mxu0 %v2851
        %3220 = vmatpush.bf16.msra.mxu0 %v2835
        %3221 = vmatpush.bf16.msra.mxu0 %v2819
        %3222 = vmatpush.bf16.msra.mxu0 %v2803
        %3223 = vmatmul.bf16.gmra.mxu0 %v2242
        %v3224 = vpop.f32.mrf.mxu0
        %v3225 = vadd.f32 %v2387, %v3224
        %v3226 = vpop.f32.mrf.mxu0
        %v3227 = vadd.f32 %v2387, %v3226
        %3228 = vdwg.mxu0
        %3229 = vmatpush.bf16.msra.mxu0 %v2916
        %3230 = vmatpush.bf16.msra.mxu0 %v2900
        %3231 = vmatpush.bf16.msra.mxu0 %v2884
        %3232 = vmatpush.bf16.msra.mxu0 %v2868
        %3233 = vmatpush.bf16.msra.mxu0 %v2852
        %3234 = vmatpush.bf16.msra.mxu0 %v2836
        %3235 = vmatpush.bf16.msra.mxu0 %v2820
        %3236 = vmatpush.bf16.msra.mxu0 %v2804
        %3237 = vmatmul.bf16.gmra.mxu0 %v2242
        %v3238 = vpop.f32.mrf.mxu0
        %v3239 = vadd.f32 %v2388, %v3238
        %v3240 = vpop.f32.mrf.mxu0
        %v3241 = vadd.f32 %v2388, %v3240
        %3242 = vdwg.mxu0
        %3243 = vmatpush.bf16.msra.mxu0 %v2917
        %3244 = vmatpush.bf16.msra.mxu0 %v2901
        %3245 = vmatpush.bf16.msra.mxu0 %v2885
        %3246 = vmatpush.bf16.msra.mxu0 %v2869
        %3247 = vmatpush.bf16.msra.mxu0 %v2853
        %3248 = vmatpush.bf16.msra.mxu0 %v2837
        %3249 = vmatpush.bf16.msra.mxu0 %v2821
        %3250 = vmatpush.bf16.msra.mxu0 %v2805
        %3251 = vmatmul.bf16.gmra.mxu0 %v2242
        %v3252 = vpop.f32.mrf.mxu0
        %v3253 = vadd.f32 %v2389, %v3252
        %v3254 = vpop.f32.mrf.mxu0
        %v3255 = vadd.f32 %v2389, %v3254
        %3256 = vdwg.mxu0
        %3257 = vmatpush.bf16.msra.mxu0 %v2918
        %3258 = vmatpush.bf16.msra.mxu0 %v2902
        %3259 = vmatpush.bf16.msra.mxu0 %v2886
        %3260 = vmatpush.bf16.msra.mxu0 %v2870
        %3261 = vmatpush.bf16.msra.mxu0 %v2854
        %3262 = vmatpush.bf16.msra.mxu0 %v2838
        %3263 = vmatpush.bf16.msra.mxu0 %v2822
        %3264 = vmatpush.bf16.msra.mxu0 %v2806
        %3265 = vmatmul.bf16.gmra.mxu0 %v2242
        %v3266 = vpop.f32.mrf.mxu0
        %v3267 = vadd.f32 %v2390, %v3266
        %v3268 = vpop.f32.mrf.mxu0
        %v3269 = vadd.f32 %v2390, %v3268
        %3270 = vdwg.mxu0
        %v3271 = vmax.f32 %v3057, 0.0
        %v3272 = vmax.f32 %v3071, 0.0
        %v3273 = vmax.f32 %v3085, 0.0
        %v3274 = vmax.f32 %v3099, 0.0
        %v3275 = vmax.f32 %v3113, 0.0
        %v3276 = vmax.f32 %v3127, 0.0
        %v3277 = vmax.f32 %v3141, 0.0
        %v3278 = vmax.f32 %v3155, 0.0
        %v3279 = vmax.f32 %v3169, 0.0
        %v3280 = vmax.f32 %v3183, 0.0
        %v3281 = vmax.f32 %v3197, 0.0
        %v3282 = vmax.f32 %v3211, 0.0
        %v3283 = vmax.f32 %v3225, 0.0
        %v3284 = vmax.f32 %v3239, 0.0
        %v3285 = vmax.f32 %v3253, 0.0
        %v3286 = vmax.f32 %v3267, 0.0
        %v3287 = vmax.f32 %v3059, 0.0
        %v3288 = vmax.f32 %v3073, 0.0
        %v3289 = vmax.f32 %v3087, 0.0
        %v3290 = vmax.f32 %v3101, 0.0
        %v3291 = vmax.f32 %v3115, 0.0
        %v3292 = vmax.f32 %v3129, 0.0
        %v3293 = vmax.f32 %v3143, 0.0
        %v3294 = vmax.f32 %v3157, 0.0
        %v3295 = vmax.f32 %v3171, 0.0
        %v3296 = vmax.f32 %v3185, 0.0
        %v3297 = vmax.f32 %v3199, 0.0
        %v3298 = vmax.f32 %v3213, 0.0
        %v3299 = vmax.f32 %v3227, 0.0
        %v3300 = vmax.f32 %v3241, 0.0
        %v3301 = vmax.f32 %v3255, 0.0
        %v3302 = vmax.f32 %v3269, 0.0
        %v3303 = vpack.c.bf16 %v3287, %v3271
        %v3304 = vpack.c.bf16 %v3288, %v3272
        %v3305 = vpack.c.bf16 %v3289, %v3273
        %v3306 = vpack.c.bf16 %v3290, %v3274
        %v3307 = vpack.c.bf16 %v3291, %v3275
        %v3308 = vpack.c.bf16 %v3292, %v3276
        %v3309 = vpack.c.bf16 %v3293, %v3277
        %v3310 = vpack.c.bf16 %v3294, %v3278
        %v3311 = vpack.c.bf16 %v3295, %v3279
        %v3312 = vpack.c.bf16 %v3296, %v3280
        %v3313 = vpack.c.bf16 %v3297, %v3281
        %v3314 = vpack.c.bf16 %v3298, %v3282
        %v3315 = vpack.c.bf16 %v3299, %v3283
        %v3316 = vpack.c.bf16 %v3300, %v3284
        %v3317 = vpack.c.bf16 %v3301, %v3285
        %v3318 = vpack.c.bf16 %v3302, %v3286
        %v3319 = vld [vmem:[%s866] sm:$0xf]
        %v3320 = vld [vmem:[%s866 + $0x4] sm:$0xf]
        %v3321 = vld [vmem:[%s866 + $0x8] sm:$0xf]
        %v3322 = vld [vmem:[%s866 + $0xc] sm:$0xf]
        %v3323 = vld [vmem:[%s866 + $0x10] sm:$0xf]
        %v3324 = vld [vmem:[%s866 + $0x14] sm:$0xf]
        %v3325 = vld [vmem:[%s866 + $0x18] sm:$0xf]
        %v3326 = vld [vmem:[%s866 + $0x1c] sm:$0xf]
        %v3327 = vld [vmem:[%s866 + $0x20] sm:$0xf]
        %v3328 = vld [vmem:[%s866 + $0x24] sm:$0xf]
        %v3329 = vld [vmem:[%s866 + $0x28] sm:$0xf]
        %v3330 = vld [vmem:[%s866 + $0x2c] sm:$0xf]
        %v3331 = vld [vmem:[%s866 + $0x30] sm:$0xf]
        %v3332 = vld [vmem:[%s866 + $0x34] sm:$0xf]
        %v3333 = vld [vmem:[%s866 + $0x38] sm:$0xf]
        %v3334 = vld [vmem:[%s866 + $0x3c] sm:$0xf]
        %v3335 = vld [vmem:[%s866 + $0x40] sm:$0xf]
        %v3336 = vld [vmem:[%s866 + $0x44] sm:$0xf]
        %v3337 = vld [vmem:[%s866 + $0x48] sm:$0xf]
        %v3338 = vld [vmem:[%s866 + $0x4c] sm:$0xf]
        %v3339 = vld [vmem:[%s866 + $0x50] sm:$0xf]
        %v3340 = vld [vmem:[%s866 + $0x54] sm:$0xf]
        %v3341 = vld [vmem:[%s866 + $0x58] sm:$0xf]
        %v3342 = vld [vmem:[%s866 + $0x5c] sm:$0xf]
        %v3343 = vld [vmem:[%s866 + $0x60] sm:$0xf]
        %v3344 = vld [vmem:[%s866 + $0x64] sm:$0xf]
        %v3345 = vld [vmem:[%s866 + $0x68] sm:$0xf]
        %v3346 = vld [vmem:[%s866 + $0x6c] sm:$0xf]
        %v3347 = vld [vmem:[%s866 + $0x70] sm:$0xf]
        %v3348 = vld [vmem:[%s866 + $0x74] sm:$0xf]
        %v3349 = vld [vmem:[%s866 + $0x78] sm:$0xf]
        %v3350 = vld [vmem:[%s866 + $0x7c] sm:$0xf]
        %v3351 = vld [vmem:[%s866 + $0x80] sm:$0xf]
        %v3352 = vld [vmem:[%s866 + $0x84] sm:$0xf]
        %v3353 = vld [vmem:[%s866 + $0x88] sm:$0xf]
        %v3354 = vld [vmem:[%s866 + $0x8c] sm:$0xf]
        %v3355 = vld [vmem:[%s866 + $0x90] sm:$0xf]
        %v3356 = vld [vmem:[%s866 + $0x94] sm:$0xf]
        %v3357 = vld [vmem:[%s866 + $0x98] sm:$0xf]
        %v3358 = vld [vmem:[%s866 + $0x9c] sm:$0xf]
        %v3359 = vld [vmem:[%s866 + $0xa0] sm:$0xf]
        %v3360 = vld [vmem:[%s866 + $0xa4] sm:$0xf]
        %v3361 = vld [vmem:[%s866 + $0xa8] sm:$0xf]
        %v3362 = vld [vmem:[%s866 + $0xac] sm:$0xf]
        %v3363 = vld [vmem:[%s866 + $0xb0] sm:$0xf]
        %v3364 = vld [vmem:[%s866 + $0xb4] sm:$0xf]
        %v3365 = vld [vmem:[%s866 + $0xb8] sm:$0xf]
        %v3366 = vld [vmem:[%s866 + $0xbc] sm:$0xf]
        %v3367 = vld [vmem:[%s866 + $0xc0] sm:$0xf]
        %v3368 = vld [vmem:[%s866 + $0xc4] sm:$0xf]
        %v3369 = vld [vmem:[%s866 + $0xc8] sm:$0xf]
        %v3370 = vld [vmem:[%s866 + $0xcc] sm:$0xf]
        %v3371 = vld [vmem:[%s866 + $0xd0] sm:$0xf]
        %v3372 = vld [vmem:[%s866 + $0xd4] sm:$0xf]
        %v3373 = vld [vmem:[%s866 + $0xd8] sm:$0xf]
        %v3374 = vld [vmem:[%s866 + $0xdc] sm:$0xf]
        %v3375 = vld [vmem:[%s866 + $0xe0] sm:$0xf]
        %v3376 = vld [vmem:[%s866 + $0xe4] sm:$0xf]
        %v3377 = vld [vmem:[%s866 + $0xe8] sm:$0xf]
        %v3378 = vld [vmem:[%s866 + $0xec] sm:$0xf]
        %v3379 = vld [vmem:[%s866 + $0xf0] sm:$0xf]
        %v3380 = vld [vmem:[%s866 + $0xf4] sm:$0xf]
        %v3381 = vld [vmem:[%s866 + $0xf8] sm:$0xf]
        %v3382 = vld [vmem:[%s866 + $0xfc] sm:$0xf]
        %v3383 = vld [vmem:[%s866 + $0x100] sm:$0xf]
        %v3384 = vld [vmem:[%s866 + $0x104] sm:$0xf]
        %v3385 = vld [vmem:[%s866 + $0x108] sm:$0xf]
        %v3386 = vld [vmem:[%s866 + $0x10c] sm:$0xf]
        %v3387 = vld [vmem:[%s866 + $0x110] sm:$0xf]
        %v3388 = vld [vmem:[%s866 + $0x114] sm:$0xf]
        %v3389 = vld [vmem:[%s866 + $0x118] sm:$0xf]
        %v3390 = vld [vmem:[%s866 + $0x11c] sm:$0xf]
        %v3391 = vld [vmem:[%s866 + $0x120] sm:$0xf]
        %v3392 = vld [vmem:[%s866 + $0x124] sm:$0xf]
        %v3393 = vld [vmem:[%s866 + $0x128] sm:$0xf]
        %v3394 = vld [vmem:[%s866 + $0x12c] sm:$0xf]
        %v3395 = vld [vmem:[%s866 + $0x130] sm:$0xf]
        %v3396 = vld [vmem:[%s866 + $0x134] sm:$0xf]
        %v3397 = vld [vmem:[%s866 + $0x138] sm:$0xf]
        %v3398 = vld [vmem:[%s866 + $0x13c] sm:$0xf]
        %v3399 = vld [vmem:[%s866 + $0x140] sm:$0xf]
        %v3400 = vld [vmem:[%s866 + $0x144] sm:$0xf]
        %v3401 = vld [vmem:[%s866 + $0x148] sm:$0xf]
        %v3402 = vld [vmem:[%s866 + $0x14c] sm:$0xf]
        %v3403 = vld [vmem:[%s866 + $0x150] sm:$0xf]
        %v3404 = vld [vmem:[%s866 + $0x154] sm:$0xf]
        %v3405 = vld [vmem:[%s866 + $0x158] sm:$0xf]
        %v3406 = vld [vmem:[%s866 + $0x15c] sm:$0xf]
        %v3407 = vld [vmem:[%s866 + $0x160] sm:$0xf]
        %v3408 = vld [vmem:[%s866 + $0x164] sm:$0xf]
        %v3409 = vld [vmem:[%s866 + $0x168] sm:$0xf]
        %v3410 = vld [vmem:[%s866 + $0x16c] sm:$0xf]
        %v3411 = vld [vmem:[%s866 + $0x170] sm:$0xf]
        %v3412 = vld [vmem:[%s866 + $0x174] sm:$0xf]
        %v3413 = vld [vmem:[%s866 + $0x178] sm:$0xf]
        %v3414 = vld [vmem:[%s866 + $0x17c] sm:$0xf]
        %v3415 = vld [vmem:[%s866 + $0x180] sm:$0xf]
        %v3416 = vld [vmem:[%s866 + $0x184] sm:$0xf]
        %v3417 = vld [vmem:[%s866 + $0x188] sm:$0xf]
        %v3418 = vld [vmem:[%s866 + $0x18c] sm:$0xf]
        %v3419 = vld [vmem:[%s866 + $0x190] sm:$0xf]
        %v3420 = vld [vmem:[%s866 + $0x194] sm:$0xf]
        %v3421 = vld [vmem:[%s866 + $0x198] sm:$0xf]
        %v3422 = vld [vmem:[%s866 + $0x19c] sm:$0xf]
        %v3423 = vld [vmem:[%s866 + $0x1a0] sm:$0xf]
        %v3424 = vld [vmem:[%s866 + $0x1a4] sm:$0xf]
        %v3425 = vld [vmem:[%s866 + $0x1a8] sm:$0xf]
        %v3426 = vld [vmem:[%s866 + $0x1ac] sm:$0xf]
        %v3427 = vld [vmem:[%s866 + $0x1b0] sm:$0xf]
        %v3428 = vld [vmem:[%s866 + $0x1b4] sm:$0xf]
        %v3429 = vld [vmem:[%s866 + $0x1b8] sm:$0xf]
        %v3430 = vld [vmem:[%s866 + $0x1bc] sm:$0xf]
        %v3431 = vld [vmem:[%s866 + $0x1c0] sm:$0xf]
        %v3432 = vld [vmem:[%s866 + $0x1c4] sm:$0xf]
        %v3433 = vld [vmem:[%s866 + $0x1c8] sm:$0xf]
        %v3434 = vld [vmem:[%s866 + $0x1cc] sm:$0xf]
        %v3435 = vld [vmem:[%s866 + $0x1d0] sm:$0xf]
        %v3436 = vld [vmem:[%s866 + $0x1d4] sm:$0xf]
        %v3437 = vld [vmem:[%s866 + $0x1d8] sm:$0xf]
        %v3438 = vld [vmem:[%s866 + $0x1dc] sm:$0xf]
        %v3439 = vld [vmem:[%s866 + $0x1e0] sm:$0xf]
        %v3440 = vld [vmem:[%s866 + $0x1e4] sm:$0xf]
        %v3441 = vld [vmem:[%s866 + $0x1e8] sm:$0xf]
        %v3442 = vld [vmem:[%s866 + $0x1ec] sm:$0xf]
        %v3443 = vld [vmem:[%s866 + $0x1f0] sm:$0xf]
        %v3444 = vld [vmem:[%s866 + $0x1f4] sm:$0xf]
        %v3445 = vld [vmem:[%s866 + $0x1f8] sm:$0xf]
        %v3446 = vld [vmem:[%s866 + $0x1fc] sm:$0xf]
        %v3447 = vld [vmem:[%s866 + $0x200] sm:$0xf]
        %v3448 = vld [vmem:[%s866 + $0x204] sm:$0xf]
        %v3449 = vld [vmem:[%s866 + $0x208] sm:$0xf]
        %v3450 = vld [vmem:[%s866 + $0x20c] sm:$0xf]
        %v3451 = vld [vmem:[%s866 + $0x210] sm:$0xf]
        %v3452 = vld [vmem:[%s866 + $0x214] sm:$0xf]
        %v3453 = vld [vmem:[%s866 + $0x218] sm:$0xf]
        %v3454 = vld [vmem:[%s866 + $0x21c] sm:$0xf]
        %v3455 = vld [vmem:[%s866 + $0x220] sm:$0xf]
        %v3456 = vld [vmem:[%s866 + $0x224] sm:$0xf]
        %v3457 = vld [vmem:[%s866 + $0x228] sm:$0xf]
        %v3458 = vld [vmem:[%s866 + $0x22c] sm:$0xf]
        %v3459 = vld [vmem:[%s866 + $0x230] sm:$0xf]
        %v3460 = vld [vmem:[%s866 + $0x234] sm:$0xf]
        %v3461 = vld [vmem:[%s866 + $0x238] sm:$0xf]
        %v3462 = vld [vmem:[%s866 + $0x23c] sm:$0xf]
        %v3463 = vld [vmem:[%s866 + $0x240] sm:$0xf]
        %v3464 = vld [vmem:[%s866 + $0x244] sm:$0xf]
        %v3465 = vld [vmem:[%s866 + $0x248] sm:$0xf]
        %v3466 = vld [vmem:[%s866 + $0x24c] sm:$0xf]
        %v3467 = vld [vmem:[%s866 + $0x250] sm:$0xf]
        %v3468 = vld [vmem:[%s866 + $0x254] sm:$0xf]
        %v3469 = vld [vmem:[%s866 + $0x258] sm:$0xf]
        %v3470 = vld [vmem:[%s866 + $0x25c] sm:$0xf]
        %v3471 = vld [vmem:[%s866 + $0x260] sm:$0xf]
        %v3472 = vld [vmem:[%s866 + $0x264] sm:$0xf]
        %v3473 = vld [vmem:[%s866 + $0x268] sm:$0xf]
        %v3474 = vld [vmem:[%s866 + $0x26c] sm:$0xf]
        %v3475 = vld [vmem:[%s866 + $0x270] sm:$0xf]
        %v3476 = vld [vmem:[%s866 + $0x274] sm:$0xf]
        %v3477 = vld [vmem:[%s866 + $0x278] sm:$0xf]
        %v3478 = vld [vmem:[%s866 + $0x27c] sm:$0xf]
        %v3479 = vld [vmem:[%s866 + $0x280] sm:$0xf]
        %v3480 = vld [vmem:[%s866 + $0x284] sm:$0xf]
        %v3481 = vld [vmem:[%s866 + $0x288] sm:$0xf]
        %v3482 = vld [vmem:[%s866 + $0x28c] sm:$0xf]
        %v3483 = vld [vmem:[%s866 + $0x290] sm:$0xf]
        %v3484 = vld [vmem:[%s866 + $0x294] sm:$0xf]
        %v3485 = vld [vmem:[%s866 + $0x298] sm:$0xf]
        %v3486 = vld [vmem:[%s866 + $0x29c] sm:$0xf]
        %v3487 = vld [vmem:[%s866 + $0x2a0] sm:$0xf]
        %v3488 = vld [vmem:[%s866 + $0x2a4] sm:$0xf]
        %v3489 = vld [vmem:[%s866 + $0x2a8] sm:$0xf]
        %v3490 = vld [vmem:[%s866 + $0x2ac] sm:$0xf]
        %v3491 = vld [vmem:[%s866 + $0x2b0] sm:$0xf]
        %v3492 = vld [vmem:[%s866 + $0x2b4] sm:$0xf]
        %v3493 = vld [vmem:[%s866 + $0x2b8] sm:$0xf]
        %v3494 = vld [vmem:[%s866 + $0x2bc] sm:$0xf]
        %v3495 = vld [vmem:[%s866 + $0x2c0] sm:$0xf]
        %v3496 = vld [vmem:[%s866 + $0x2c4] sm:$0xf]
        %v3497 = vld [vmem:[%s866 + $0x2c8] sm:$0xf]
        %v3498 = vld [vmem:[%s866 + $0x2cc] sm:$0xf]
        %v3499 = vld [vmem:[%s866 + $0x2d0] sm:$0xf]
        %v3500 = vld [vmem:[%s866 + $0x2d4] sm:$0xf]
        %v3501 = vld [vmem:[%s866 + $0x2d8] sm:$0xf]
        %v3502 = vld [vmem:[%s866 + $0x2dc] sm:$0xf]
        %v3503 = vld [vmem:[%s866 + $0x2e0] sm:$0xf]
        %v3504 = vld [vmem:[%s866 + $0x2e4] sm:$0xf]
        %v3505 = vld [vmem:[%s866 + $0x2e8] sm:$0xf]
        %v3506 = vld [vmem:[%s866 + $0x2ec] sm:$0xf]
        %v3507 = vld [vmem:[%s866 + $0x2f0] sm:$0xf]
        %v3508 = vld [vmem:[%s866 + $0x2f4] sm:$0xf]
        %v3509 = vld [vmem:[%s866 + $0x2f8] sm:$0xf]
        %v3510 = vld [vmem:[%s866 + $0x2fc] sm:$0xf]
        %v3511 = vld [vmem:[%s866 + $0x300] sm:$0xf]
        %v3512 = vld [vmem:[%s866 + $0x304] sm:$0xf]
        %v3513 = vld [vmem:[%s866 + $0x308] sm:$0xf]
        %v3514 = vld [vmem:[%s866 + $0x30c] sm:$0xf]
        %v3515 = vld [vmem:[%s866 + $0x310] sm:$0xf]
        %v3516 = vld [vmem:[%s866 + $0x314] sm:$0xf]
        %v3517 = vld [vmem:[%s866 + $0x318] sm:$0xf]
        %v3518 = vld [vmem:[%s866 + $0x31c] sm:$0xf]
        %v3519 = vld [vmem:[%s866 + $0x320] sm:$0xf]
        %v3520 = vld [vmem:[%s866 + $0x324] sm:$0xf]
        %v3521 = vld [vmem:[%s866 + $0x328] sm:$0xf]
        %v3522 = vld [vmem:[%s866 + $0x32c] sm:$0xf]
        %v3523 = vld [vmem:[%s866 + $0x330] sm:$0xf]
        %v3524 = vld [vmem:[%s866 + $0x334] sm:$0xf]
        %v3525 = vld [vmem:[%s866 + $0x338] sm:$0xf]
        %v3526 = vld [vmem:[%s866 + $0x33c] sm:$0xf]
        %v3527 = vld [vmem:[%s866 + $0x340] sm:$0xf]
        %v3528 = vld [vmem:[%s866 + $0x344] sm:$0xf]
        %v3529 = vld [vmem:[%s866 + $0x348] sm:$0xf]
        %v3530 = vld [vmem:[%s866 + $0x34c] sm:$0xf]
        %v3531 = vld [vmem:[%s866 + $0x350] sm:$0xf]
        %v3532 = vld [vmem:[%s866 + $0x354] sm:$0xf]
        %v3533 = vld [vmem:[%s866 + $0x358] sm:$0xf]
        %v3534 = vld [vmem:[%s866 + $0x35c] sm:$0xf]
        %v3535 = vld [vmem:[%s866 + $0x360] sm:$0xf]
        %v3536 = vld [vmem:[%s866 + $0x364] sm:$0xf]
        %v3537 = vld [vmem:[%s866 + $0x368] sm:$0xf]
        %v3538 = vld [vmem:[%s866 + $0x36c] sm:$0xf]
        %v3539 = vld [vmem:[%s866 + $0x370] sm:$0xf]
        %v3540 = vld [vmem:[%s866 + $0x374] sm:$0xf]
        %v3541 = vld [vmem:[%s866 + $0x378] sm:$0xf]
        %v3542 = vld [vmem:[%s866 + $0x37c] sm:$0xf]
        %v3543 = vld [vmem:[%s866 + $0x380] sm:$0xf]
        %v3544 = vld [vmem:[%s866 + $0x384] sm:$0xf]
        %v3545 = vld [vmem:[%s866 + $0x388] sm:$0xf]
        %v3546 = vld [vmem:[%s866 + $0x38c] sm:$0xf]
        %v3547 = vld [vmem:[%s866 + $0x390] sm:$0xf]
        %v3548 = vld [vmem:[%s866 + $0x394] sm:$0xf]
        %v3549 = vld [vmem:[%s866 + $0x398] sm:$0xf]
        %v3550 = vld [vmem:[%s866 + $0x39c] sm:$0xf]
        %v3551 = vld [vmem:[%s866 + $0x3a0] sm:$0xf]
        %v3552 = vld [vmem:[%s866 + $0x3a4] sm:$0xf]
        %v3553 = vld [vmem:[%s866 + $0x3a8] sm:$0xf]
        %v3554 = vld [vmem:[%s866 + $0x3ac] sm:$0xf]
        %v3555 = vld [vmem:[%s866 + $0x3b0] sm:$0xf]
        %v3556 = vld [vmem:[%s866 + $0x3b4] sm:$0xf]
        %v3557 = vld [vmem:[%s866 + $0x3b8] sm:$0xf]
        %v3558 = vld [vmem:[%s866 + $0x3bc] sm:$0xf]
        %v3559 = vld [vmem:[%s866 + $0x3c0] sm:$0xf]
        %v3560 = vld [vmem:[%s866 + $0x3c4] sm:$0xf]
        %v3561 = vld [vmem:[%s866 + $0x3c8] sm:$0xf]
        %v3562 = vld [vmem:[%s866 + $0x3cc] sm:$0xf]
        %v3563 = vld [vmem:[%s866 + $0x3d0] sm:$0xf]
        %v3564 = vld [vmem:[%s866 + $0x3d4] sm:$0xf]
        %v3565 = vld [vmem:[%s866 + $0x3d8] sm:$0xf]
        %v3566 = vld [vmem:[%s866 + $0x3dc] sm:$0xf]
        %v3567 = vld [vmem:[%s866 + $0x3e0] sm:$0xf]
        %v3568 = vld [vmem:[%s866 + $0x3e4] sm:$0xf]
        %v3569 = vld [vmem:[%s866 + $0x3e8] sm:$0xf]
        %v3570 = vld [vmem:[%s866 + $0x3ec] sm:$0xf]
        %v3571 = vld [vmem:[%s866 + $0x3f0] sm:$0xf]
        %v3572 = vld [vmem:[%s866 + $0x3f4] sm:$0xf]
        %v3573 = vld [vmem:[%s866 + $0x3f8] sm:$0xf]
        %v3574 = vld [vmem:[%s866 + $0x3fc] sm:$0xf]
        %v3575 = vld [vmem:[%s875] sm:$0x1]
        %v3577 = vperm.slane %v3575, 0
        %v3835 = vunpack.c.l.b16 %v3319
        %v3836 = vunpack.c.l.b16 %v3320
        %v3837 = vunpack.c.l.b16 %v3321
        %v3838 = vunpack.c.l.b16 %v3322
        %v3839 = vunpack.c.l.b16 %v3323
        %v3840 = vunpack.c.l.b16 %v3324
        %v3841 = vunpack.c.l.b16 %v3325
        %v3842 = vunpack.c.l.b16 %v3326
        %v3843 = vunpack.c.l.b16 %v3327
        %v3844 = vunpack.c.l.b16 %v3328
        %v3845 = vunpack.c.l.b16 %v3329
        %v3846 = vunpack.c.l.b16 %v3330
        %v3847 = vunpack.c.l.b16 %v3331
        %v3848 = vunpack.c.l.b16 %v3332
        %v3849 = vunpack.c.l.b16 %v3333
        %v3850 = vunpack.c.l.b16 %v3334
        %v3851 = vunpack.c.l.b16 %v3335
        %v3852 = vunpack.c.l.b16 %v3336
        %v3853 = vunpack.c.l.b16 %v3337
        %v3854 = vunpack.c.l.b16 %v3338
        %v3855 = vunpack.c.l.b16 %v3339
        %v3856 = vunpack.c.l.b16 %v3340
        %v3857 = vunpack.c.l.b16 %v3341
        %v3858 = vunpack.c.l.b16 %v3342
        %v3859 = vunpack.c.l.b16 %v3343
        %v3860 = vunpack.c.l.b16 %v3344
        %v3861 = vunpack.c.l.b16 %v3345
        %v3862 = vunpack.c.l.b16 %v3346
        %v3863 = vunpack.c.l.b16 %v3347
        %v3864 = vunpack.c.l.b16 %v3348
        %v3865 = vunpack.c.l.b16 %v3349
        %v3866 = vunpack.c.l.b16 %v3350
        %v3867 = vunpack.c.l.b16 %v3351
        %v3868 = vunpack.c.l.b16 %v3352
        %v3869 = vunpack.c.l.b16 %v3353
        %v3870 = vunpack.c.l.b16 %v3354
        %v3871 = vunpack.c.l.b16 %v3355
        %v3872 = vunpack.c.l.b16 %v3356
        %v3873 = vunpack.c.l.b16 %v3357
        %v3874 = vunpack.c.l.b16 %v3358
        %v3875 = vunpack.c.l.b16 %v3359
        %v3876 = vunpack.c.l.b16 %v3360
        %v3877 = vunpack.c.l.b16 %v3361
        %v3878 = vunpack.c.l.b16 %v3362
        %v3879 = vunpack.c.l.b16 %v3363
        %v3880 = vunpack.c.l.b16 %v3364
        %v3881 = vunpack.c.l.b16 %v3365
        %v3882 = vunpack.c.l.b16 %v3366
        %v3883 = vunpack.c.l.b16 %v3367
        %v3884 = vunpack.c.l.b16 %v3368
        %v3885 = vunpack.c.l.b16 %v3369
        %v3886 = vunpack.c.l.b16 %v3370
        %v3887 = vunpack.c.l.b16 %v3371
        %v3888 = vunpack.c.l.b16 %v3372
        %v3889 = vunpack.c.l.b16 %v3373
        %v3890 = vunpack.c.l.b16 %v3374
        %v3891 = vunpack.c.l.b16 %v3375
        %v3892 = vunpack.c.l.b16 %v3376
        %v3893 = vunpack.c.l.b16 %v3377
        %v3894 = vunpack.c.l.b16 %v3378
        %v3895 = vunpack.c.l.b16 %v3379
        %v3896 = vunpack.c.l.b16 %v3380
        %v3897 = vunpack.c.l.b16 %v3381
        %v3898 = vunpack.c.l.b16 %v3382
        %v3899 = vunpack.c.l.b16 %v3383
        %v3900 = vunpack.c.l.b16 %v3384
        %v3901 = vunpack.c.l.b16 %v3385
        %v3902 = vunpack.c.l.b16 %v3386
        %v3903 = vunpack.c.l.b16 %v3387
        %v3904 = vunpack.c.l.b16 %v3388
        %v3905 = vunpack.c.l.b16 %v3389
        %v3906 = vunpack.c.l.b16 %v3390
        %v3907 = vunpack.c.l.b16 %v3391
        %v3908 = vunpack.c.l.b16 %v3392
        %v3909 = vunpack.c.l.b16 %v3393
        %v3910 = vunpack.c.l.b16 %v3394
        %v3911 = vunpack.c.l.b16 %v3395
        %v3912 = vunpack.c.l.b16 %v3396
        %v3913 = vunpack.c.l.b16 %v3397
        %v3914 = vunpack.c.l.b16 %v3398
        %v3915 = vunpack.c.l.b16 %v3399
        %v3916 = vunpack.c.l.b16 %v3400
        %v3917 = vunpack.c.l.b16 %v3401
        %v3918 = vunpack.c.l.b16 %v3402
        %v3919 = vunpack.c.l.b16 %v3403
        %v3920 = vunpack.c.l.b16 %v3404
        %v3921 = vunpack.c.l.b16 %v3405
        %v3922 = vunpack.c.l.b16 %v3406
        %v3923 = vunpack.c.l.b16 %v3407
        %v3924 = vunpack.c.l.b16 %v3408
        %v3925 = vunpack.c.l.b16 %v3409
        %v3926 = vunpack.c.l.b16 %v3410
        %v3927 = vunpack.c.l.b16 %v3411
        %v3928 = vunpack.c.l.b16 %v3412
        %v3929 = vunpack.c.l.b16 %v3413
        %v3930 = vunpack.c.l.b16 %v3414
        %v3931 = vunpack.c.l.b16 %v3415
        %v3932 = vunpack.c.l.b16 %v3416
        %v3933 = vunpack.c.l.b16 %v3417
        %v3934 = vunpack.c.l.b16 %v3418
        %v3935 = vunpack.c.l.b16 %v3419
        %v3936 = vunpack.c.l.b16 %v3420
        %v3937 = vunpack.c.l.b16 %v3421
        %v3938 = vunpack.c.l.b16 %v3422
        %v3939 = vunpack.c.l.b16 %v3423
        %v3940 = vunpack.c.l.b16 %v3424
        %v3941 = vunpack.c.l.b16 %v3425
        %v3942 = vunpack.c.l.b16 %v3426
        %v3943 = vunpack.c.l.b16 %v3427
        %v3944 = vunpack.c.l.b16 %v3428
        %v3945 = vunpack.c.l.b16 %v3429
        %v3946 = vunpack.c.l.b16 %v3430
        %v3947 = vunpack.c.l.b16 %v3431
        %v3948 = vunpack.c.l.b16 %v3432
        %v3949 = vunpack.c.l.b16 %v3433
        %v3950 = vunpack.c.l.b16 %v3434
        %v3951 = vunpack.c.l.b16 %v3435
        %v3952 = vunpack.c.l.b16 %v3436
        %v3953 = vunpack.c.l.b16 %v3437
        %v3954 = vunpack.c.l.b16 %v3438
        %v3955 = vunpack.c.l.b16 %v3439
        %v3956 = vunpack.c.l.b16 %v3440
        %v3957 = vunpack.c.l.b16 %v3441
        %v3958 = vunpack.c.l.b16 %v3442
        %v3959 = vunpack.c.l.b16 %v3443
        %v3960 = vunpack.c.l.b16 %v3444
        %v3961 = vunpack.c.l.b16 %v3445
        %v3962 = vunpack.c.l.b16 %v3446
        %v3963 = vunpack.c.l.b16 %v3447
        %v3964 = vunpack.c.l.b16 %v3448
        %v3965 = vunpack.c.l.b16 %v3449
        %v3966 = vunpack.c.l.b16 %v3450
        %v3967 = vunpack.c.l.b16 %v3451
        %v3968 = vunpack.c.l.b16 %v3452
        %v3969 = vunpack.c.l.b16 %v3453
        %v3970 = vunpack.c.l.b16 %v3454
        %v3971 = vunpack.c.l.b16 %v3455
        %v3972 = vunpack.c.l.b16 %v3456
        %v3973 = vunpack.c.l.b16 %v3457
        %v3974 = vunpack.c.l.b16 %v3458
        %v3975 = vunpack.c.l.b16 %v3459
        %v3976 = vunpack.c.l.b16 %v3460
        %v3977 = vunpack.c.l.b16 %v3461
        %v3978 = vunpack.c.l.b16 %v3462
        %v3979 = vunpack.c.l.b16 %v3463
        %v3980 = vunpack.c.l.b16 %v3464
        %v3981 = vunpack.c.l.b16 %v3465
        %v3982 = vunpack.c.l.b16 %v3466
        %v3983 = vunpack.c.l.b16 %v3467
        %v3984 = vunpack.c.l.b16 %v3468
        %v3985 = vunpack.c.l.b16 %v3469
        %v3986 = vunpack.c.l.b16 %v3470
        %v3987 = vunpack.c.l.b16 %v3471
        %v3988 = vunpack.c.l.b16 %v3472
        %v3989 = vunpack.c.l.b16 %v3473
        %v3990 = vunpack.c.l.b16 %v3474
        %v3991 = vunpack.c.l.b16 %v3475
        %v3992 = vunpack.c.l.b16 %v3476
        %v3993 = vunpack.c.l.b16 %v3477
        %v3994 = vunpack.c.l.b16 %v3478
        %v3995 = vunpack.c.l.b16 %v3479
        %v3996 = vunpack.c.l.b16 %v3480
        %v3997 = vunpack.c.l.b16 %v3481
        %v3998 = vunpack.c.l.b16 %v3482
        %v3999 = vunpack.c.l.b16 %v3483
        %v4000 = vunpack.c.l.b16 %v3484
        %v4001 = vunpack.c.l.b16 %v3485
        %v4002 = vunpack.c.l.b16 %v3486
        %v4003 = vunpack.c.l.b16 %v3487
        %v4004 = vunpack.c.l.b16 %v3488
        %v4005 = vunpack.c.l.b16 %v3489
        %v4006 = vunpack.c.l.b16 %v3490
        %v4007 = vunpack.c.l.b16 %v3491
        %v4008 = vunpack.c.l.b16 %v3492
        %v4009 = vunpack.c.l.b16 %v3493
        %v4010 = vunpack.c.l.b16 %v3494
        %v4011 = vunpack.c.l.b16 %v3495
        %v4012 = vunpack.c.l.b16 %v3496
        %v4013 = vunpack.c.l.b16 %v3497
        %v4014 = vunpack.c.l.b16 %v3498
        %v4015 = vunpack.c.l.b16 %v3499
        %v4016 = vunpack.c.l.b16 %v3500
        %v4017 = vunpack.c.l.b16 %v3501
        %v4018 = vunpack.c.l.b16 %v3502
        %v4019 = vunpack.c.l.b16 %v3503
        %v4020 = vunpack.c.l.b16 %v3504
        %v4021 = vunpack.c.l.b16 %v3505
        %v4022 = vunpack.c.l.b16 %v3506
        %v4023 = vunpack.c.l.b16 %v3507
        %v4024 = vunpack.c.l.b16 %v3508
        %v4025 = vunpack.c.l.b16 %v3509
        %v4026 = vunpack.c.l.b16 %v3510
        %v4027 = vunpack.c.l.b16 %v3511
        %v4028 = vunpack.c.l.b16 %v3512
        %v4029 = vunpack.c.l.b16 %v3513
        %v4030 = vunpack.c.l.b16 %v3514
        %v4031 = vunpack.c.l.b16 %v3515
        %v4032 = vunpack.c.l.b16 %v3516
        %v4033 = vunpack.c.l.b16 %v3517
        %v4034 = vunpack.c.l.b16 %v3518
        %v4035 = vunpack.c.l.b16 %v3519
        %v4036 = vunpack.c.l.b16 %v3520
        %v4037 = vunpack.c.l.b16 %v3521
        %v4038 = vunpack.c.l.b16 %v3522
        %v4039 = vunpack.c.l.b16 %v3523
        %v4040 = vunpack.c.l.b16 %v3524
        %v4041 = vunpack.c.l.b16 %v3525
        %v4042 = vunpack.c.l.b16 %v3526
        %v4043 = vunpack.c.l.b16 %v3527
        %v4044 = vunpack.c.l.b16 %v3528
        %v4045 = vunpack.c.l.b16 %v3529
        %v4046 = vunpack.c.l.b16 %v3530
        %v4047 = vunpack.c.l.b16 %v3531
        %v4048 = vunpack.c.l.b16 %v3532
        %v4049 = vunpack.c.l.b16 %v3533
        %v4050 = vunpack.c.l.b16 %v3534
        %v4051 = vunpack.c.l.b16 %v3535
        %v4052 = vunpack.c.l.b16 %v3536
        %v4053 = vunpack.c.l.b16 %v3537
        %v4054 = vunpack.c.l.b16 %v3538
        %v4055 = vunpack.c.l.b16 %v3539
        %v4056 = vunpack.c.l.b16 %v3540
        %v4057 = vunpack.c.l.b16 %v3541
        %v4058 = vunpack.c.l.b16 %v3542
        %v4059 = vunpack.c.l.b16 %v3543
        %v4060 = vunpack.c.l.b16 %v3544
        %v4061 = vunpack.c.l.b16 %v3545
        %v4062 = vunpack.c.l.b16 %v3546
        %v4063 = vunpack.c.l.b16 %v3547
        %v4064 = vunpack.c.l.b16 %v3548
        %v4065 = vunpack.c.l.b16 %v3549
        %v4066 = vunpack.c.l.b16 %v3550
        %v4067 = vunpack.c.l.b16 %v3551
        %v4068 = vunpack.c.l.b16 %v3552
        %v4069 = vunpack.c.l.b16 %v3553
        %v4070 = vunpack.c.l.b16 %v3554
        %v4071 = vunpack.c.l.b16 %v3555
        %v4072 = vunpack.c.l.b16 %v3556
        %v4073 = vunpack.c.l.b16 %v3557
        %v4074 = vunpack.c.l.b16 %v3558
        %v4075 = vunpack.c.l.b16 %v3559
        %v4076 = vunpack.c.l.b16 %v3560
        %v4077 = vunpack.c.l.b16 %v3561
        %v4078 = vunpack.c.l.b16 %v3562
        %v4079 = vunpack.c.l.b16 %v3563
        %v4080 = vunpack.c.l.b16 %v3564
        %v4081 = vunpack.c.l.b16 %v3565
        %v4082 = vunpack.c.l.b16 %v3566
        %v4083 = vunpack.c.l.b16 %v3567
        %v4084 = vunpack.c.l.b16 %v3568
        %v4085 = vunpack.c.l.b16 %v3569
        %v4086 = vunpack.c.l.b16 %v3570
        %v4087 = vunpack.c.l.b16 %v3571
        %v4088 = vunpack.c.l.b16 %v3572
        %v4089 = vunpack.c.l.b16 %v3573
        %v4090 = vunpack.c.l.b16 %v3574
        %v4091 = vpack.c.b16 %v3836, %v3835
        %v4092 = vpack.c.b16 %v3838, %v3837
        %v4093 = vpack.c.b16 %v3840, %v3839
        %v4094 = vpack.c.b16 %v3842, %v3841
        %v4095 = vpack.c.b16 %v3844, %v3843
        %v4096 = vpack.c.b16 %v3846, %v3845
        %v4097 = vpack.c.b16 %v3848, %v3847
        %v4098 = vpack.c.b16 %v3850, %v3849
        %v4099 = vpack.c.b16 %v3852, %v3851
        %v4100 = vpack.c.b16 %v3854, %v3853
        %v4101 = vpack.c.b16 %v3856, %v3855
        %v4102 = vpack.c.b16 %v3858, %v3857
        %v4103 = vpack.c.b16 %v3860, %v3859
        %v4104 = vpack.c.b16 %v3862, %v3861
        %v4105 = vpack.c.b16 %v3864, %v3863
        %v4106 = vpack.c.b16 %v3866, %v3865
        %v4107 = vpack.c.b16 %v3868, %v3867
        %v4108 = vpack.c.b16 %v3870, %v3869
        %v4109 = vpack.c.b16 %v3872, %v3871
        %v4110 = vpack.c.b16 %v3874, %v3873
        %v4111 = vpack.c.b16 %v3876, %v3875
        %v4112 = vpack.c.b16 %v3878, %v3877
        %v4113 = vpack.c.b16 %v3880, %v3879
        %v4114 = vpack.c.b16 %v3882, %v3881
        %v4115 = vpack.c.b16 %v3884, %v3883
        %v4116 = vpack.c.b16 %v3886, %v3885
        %v4117 = vpack.c.b16 %v3888, %v3887
        %v4118 = vpack.c.b16 %v3890, %v3889
        %v4119 = vpack.c.b16 %v3892, %v3891
        %v4120 = vpack.c.b16 %v3894, %v3893
        %v4121 = vpack.c.b16 %v3896, %v3895
        %v4122 = vpack.c.b16 %v3898, %v3897
        %v4123 = vpack.c.b16 %v3900, %v3899
        %v4124 = vpack.c.b16 %v3902, %v3901
        %v4125 = vpack.c.b16 %v3904, %v3903
        %v4126 = vpack.c.b16 %v3906, %v3905
        %v4127 = vpack.c.b16 %v3908, %v3907
        %v4128 = vpack.c.b16 %v3910, %v3909
        %v4129 = vpack.c.b16 %v3912, %v3911
        %v4130 = vpack.c.b16 %v3914, %v3913
        %v4131 = vpack.c.b16 %v3916, %v3915
        %v4132 = vpack.c.b16 %v3918, %v3917
        %v4133 = vpack.c.b16 %v3920, %v3919
        %v4134 = vpack.c.b16 %v3922, %v3921
        %v4135 = vpack.c.b16 %v3924, %v3923
        %v4136 = vpack.c.b16 %v3926, %v3925
        %v4137 = vpack.c.b16 %v3928, %v3927
        %v4138 = vpack.c.b16 %v3930, %v3929
        %v4139 = vpack.c.b16 %v3932, %v3931
        %v4140 = vpack.c.b16 %v3934, %v3933
        %v4141 = vpack.c.b16 %v3936, %v3935
        %v4142 = vpack.c.b16 %v3938, %v3937
        %v4143 = vpack.c.b16 %v3940, %v3939
        %v4144 = vpack.c.b16 %v3942, %v3941
        %v4145 = vpack.c.b16 %v3944, %v3943
        %v4146 = vpack.c.b16 %v3946, %v3945
        %v4147 = vpack.c.b16 %v3948, %v3947
        %v4148 = vpack.c.b16 %v3950, %v3949
        %v4149 = vpack.c.b16 %v3952, %v3951
        %v4150 = vpack.c.b16 %v3954, %v3953
        %v4151 = vpack.c.b16 %v3956, %v3955
        %v4152 = vpack.c.b16 %v3958, %v3957
        %v4153 = vpack.c.b16 %v3960, %v3959
        %v4154 = vpack.c.b16 %v3962, %v3961
        %v4155 = vpack.c.b16 %v3964, %v3963
        %v4156 = vpack.c.b16 %v3966, %v3965
        %v4157 = vpack.c.b16 %v3968, %v3967
        %v4158 = vpack.c.b16 %v3970, %v3969
        %v4159 = vpack.c.b16 %v3972, %v3971
        %v4160 = vpack.c.b16 %v3974, %v3973
        %v4161 = vpack.c.b16 %v3976, %v3975
        %v4162 = vpack.c.b16 %v3978, %v3977
        %v4163 = vpack.c.b16 %v3980, %v3979
        %v4164 = vpack.c.b16 %v3982, %v3981
        %v4165 = vpack.c.b16 %v3984, %v3983
        %v4166 = vpack.c.b16 %v3986, %v3985
        %v4167 = vpack.c.b16 %v3988, %v3987
        %v4168 = vpack.c.b16 %v3990, %v3989
        %v4169 = vpack.c.b16 %v3992, %v3991
        %v4170 = vpack.c.b16 %v3994, %v3993
        %v4171 = vpack.c.b16 %v3996, %v3995
        %v4172 = vpack.c.b16 %v3998, %v3997
        %v4173 = vpack.c.b16 %v4000, %v3999
        %v4174 = vpack.c.b16 %v4002, %v4001
        %v4175 = vpack.c.b16 %v4004, %v4003
        %v4176 = vpack.c.b16 %v4006, %v4005
        %v4177 = vpack.c.b16 %v4008, %v4007
        %v4178 = vpack.c.b16 %v4010, %v4009
        %v4179 = vpack.c.b16 %v4012, %v4011
        %v4180 = vpack.c.b16 %v4014, %v4013
        %v4181 = vpack.c.b16 %v4016, %v4015
        %v4182 = vpack.c.b16 %v4018, %v4017
        %v4183 = vpack.c.b16 %v4020, %v4019
        %v4184 = vpack.c.b16 %v4022, %v4021
        %v4185 = vpack.c.b16 %v4024, %v4023
        %v4186 = vpack.c.b16 %v4026, %v4025
        %v4187 = vpack.c.b16 %v4028, %v4027
        %v4188 = vpack.c.b16 %v4030, %v4029
        %v4189 = vpack.c.b16 %v4032, %v4031
        %v4190 = vpack.c.b16 %v4034, %v4033
        %v4191 = vpack.c.b16 %v4036, %v4035
        %v4192 = vpack.c.b16 %v4038, %v4037
        %v4193 = vpack.c.b16 %v4040, %v4039
        %v4194 = vpack.c.b16 %v4042, %v4041
        %v4195 = vpack.c.b16 %v4044, %v4043
        %v4196 = vpack.c.b16 %v4046, %v4045
        %v4197 = vpack.c.b16 %v4048, %v4047
        %v4198 = vpack.c.b16 %v4050, %v4049
        %v4199 = vpack.c.b16 %v4052, %v4051
        %v4200 = vpack.c.b16 %v4054, %v4053
        %v4201 = vpack.c.b16 %v4056, %v4055
        %v4202 = vpack.c.b16 %v4058, %v4057
        %v4203 = vpack.c.b16 %v4060, %v4059
        %v4204 = vpack.c.b16 %v4062, %v4061
        %v4205 = vpack.c.b16 %v4064, %v4063
        %v4206 = vpack.c.b16 %v4066, %v4065
        %v4207 = vpack.c.b16 %v4068, %v4067
        %v4208 = vpack.c.b16 %v4070, %v4069
        %v4209 = vpack.c.b16 %v4072, %v4071
        %v4210 = vpack.c.b16 %v4074, %v4073
        %v4211 = vpack.c.b16 %v4076, %v4075
        %v4212 = vpack.c.b16 %v4078, %v4077
        %v4213 = vpack.c.b16 %v4080, %v4079
        %v4214 = vpack.c.b16 %v4082, %v4081
        %v4215 = vpack.c.b16 %v4084, %v4083
        %v4216 = vpack.c.b16 %v4086, %v4085
        %v4217 = vpack.c.b16 %v4088, %v4087
        %v4218 = vpack.c.b16 %v4090, %v4089
        %4347 = vmatpush.bf16.msra.mxu0 %v4098
        %4348 = vmatpush.bf16.msra.mxu0 %v4097
        %4349 = vmatpush.bf16.msra.mxu0 %v4096
        %4350 = vmatpush.bf16.msra.mxu0 %v4095
        %4351 = vmatpush.bf16.msra.mxu0 %v4094
        %4352 = vmatpush.bf16.msra.mxu0 %v4093
        %4353 = vmatpush.bf16.msra.mxu0 %v4092
        %4354 = vmatpush.bf16.msra.mxu0 %v4091
        %4355 = vmatmul.bf16.gmra.mxu0 %v3303
        %v4356 = vpop.f32.mrf.mxu0
        %v4357 = vadd.f32 %v3577, %v4356
        %v4358 = vpop.f32.mrf.mxu0
        %v4359 = vadd.f32 %v3577, %v4358
        %4360 = vdwg.mxu0
        %4361 = vmatpush.bf16.msra.mxu0 %v4106
        %4362 = vmatpush.bf16.msra.mxu0 %v4105
        %4363 = vmatpush.bf16.msra.mxu0 %v4104
        %4364 = vmatpush.bf16.msra.mxu0 %v4103
        %4365 = vmatpush.bf16.msra.mxu0 %v4102
        %4366 = vmatpush.bf16.msra.mxu0 %v4101
        %4367 = vmatpush.bf16.msra.mxu0 %v4100
        %4368 = vmatpush.bf16.msra.mxu0 %v4099
        %4369 = vmatmul.bf16.gmra.mxu0 %v3304
        %v4370 = vpop.f32.mrf.mxu0
        %v4371 = vadd.f32 %v4357, %v4370
        %v4372 = vpop.f32.mrf.mxu0
        %v4373 = vadd.f32 %v4359, %v4372
        %4374 = vdwg.mxu0
        %4375 = vmatpush.bf16.msra.mxu0 %v4114
        %4376 = vmatpush.bf16.msra.mxu0 %v4113
        %4377 = vmatpush.bf16.msra.mxu0 %v4112
        %4378 = vmatpush.bf16.msra.mxu0 %v4111
        %4379 = vmatpush.bf16.msra.mxu0 %v4110
        %4380 = vmatpush.bf16.msra.mxu0 %v4109
        %4381 = vmatpush.bf16.msra.mxu0 %v4108
        %4382 = vmatpush.bf16.msra.mxu0 %v4107
        %4383 = vmatmul.bf16.gmra.mxu0 %v3305
        %v4384 = vpop.f32.mrf.mxu0
        %v4385 = vadd.f32 %v4371, %v4384
        %v4386 = vpop.f32.mrf.mxu0
        %v4387 = vadd.f32 %v4373, %v4386
        %4388 = vdwg.mxu0
        %4389 = vmatpush.bf16.msra.mxu0 %v4122
        %4390 = vmatpush.bf16.msra.mxu0 %v4121
        %4391 = vmatpush.bf16.msra.mxu0 %v4120
        %4392 = vmatpush.bf16.msra.mxu0 %v4119
        %4393 = vmatpush.bf16.msra.mxu0 %v4118
        %4394 = vmatpush.bf16.msra.mxu0 %v4117
        %4395 = vmatpush.bf16.msra.mxu0 %v4116
        %4396 = vmatpush.bf16.msra.mxu0 %v4115
        %4397 = vmatmul.bf16.gmra.mxu0 %v3306
        %v4398 = vpop.f32.mrf.mxu0
        %v4399 = vadd.f32 %v4385, %v4398
        %v4400 = vpop.f32.mrf.mxu0
        %v4401 = vadd.f32 %v4387, %v4400
        %4402 = vdwg.mxu0
        %4403 = vmatpush.bf16.msra.mxu0 %v4130
        %4404 = vmatpush.bf16.msra.mxu0 %v4129
        %4405 = vmatpush.bf16.msra.mxu0 %v4128
        %4406 = vmatpush.bf16.msra.mxu0 %v4127
        %4407 = vmatpush.bf16.msra.mxu0 %v4126
        %4408 = vmatpush.bf16.msra.mxu0 %v4125
        %4409 = vmatpush.bf16.msra.mxu0 %v4124
        %4410 = vmatpush.bf16.msra.mxu0 %v4123
        %4411 = vmatmul.bf16.gmra.mxu0 %v3307
        %v4412 = vpop.f32.mrf.mxu0
        %v4413 = vadd.f32 %v4399, %v4412
        %v4414 = vpop.f32.mrf.mxu0
        %v4415 = vadd.f32 %v4401, %v4414
        %4416 = vdwg.mxu0
        %4417 = vmatpush.bf16.msra.mxu0 %v4138
        %4418 = vmatpush.bf16.msra.mxu0 %v4137
        %4419 = vmatpush.bf16.msra.mxu0 %v4136
        %4420 = vmatpush.bf16.msra.mxu0 %v4135
        %4421 = vmatpush.bf16.msra.mxu0 %v4134
        %4422 = vmatpush.bf16.msra.mxu0 %v4133
        %4423 = vmatpush.bf16.msra.mxu0 %v4132
        %4424 = vmatpush.bf16.msra.mxu0 %v4131
        %4425 = vmatmul.bf16.gmra.mxu0 %v3308
        %v4426 = vpop.f32.mrf.mxu0
        %v4427 = vadd.f32 %v4413, %v4426
        %v4428 = vpop.f32.mrf.mxu0
        %v4429 = vadd.f32 %v4415, %v4428
        %4430 = vdwg.mxu0
        %4431 = vmatpush.bf16.msra.mxu0 %v4146
        %4432 = vmatpush.bf16.msra.mxu0 %v4145
        %4433 = vmatpush.bf16.msra.mxu0 %v4144
        %4434 = vmatpush.bf16.msra.mxu0 %v4143
        %4435 = vmatpush.bf16.msra.mxu0 %v4142
        %4436 = vmatpush.bf16.msra.mxu0 %v4141
        %4437 = vmatpush.bf16.msra.mxu0 %v4140
        %4438 = vmatpush.bf16.msra.mxu0 %v4139
        %4439 = vmatmul.bf16.gmra.mxu0 %v3309
        %v4440 = vpop.f32.mrf.mxu0
        %v4441 = vadd.f32 %v4427, %v4440
        %v4442 = vpop.f32.mrf.mxu0
        %v4443 = vadd.f32 %v4429, %v4442
        %4444 = vdwg.mxu0
        %4445 = vmatpush.bf16.msra.mxu0 %v4154
        %4446 = vmatpush.bf16.msra.mxu0 %v4153
        %4447 = vmatpush.bf16.msra.mxu0 %v4152
        %4448 = vmatpush.bf16.msra.mxu0 %v4151
        %4449 = vmatpush.bf16.msra.mxu0 %v4150
        %4450 = vmatpush.bf16.msra.mxu0 %v4149
        %4451 = vmatpush.bf16.msra.mxu0 %v4148
        %4452 = vmatpush.bf16.msra.mxu0 %v4147
        %4453 = vmatmul.bf16.gmra.mxu0 %v3310
        %v4454 = vpop.f32.mrf.mxu0
        %v4455 = vadd.f32 %v4441, %v4454
        %v4456 = vpop.f32.mrf.mxu0
        %v4457 = vadd.f32 %v4443, %v4456
        %4458 = vdwg.mxu0
        %4459 = vmatpush.bf16.msra.mxu0 %v4162
        %4460 = vmatpush.bf16.msra.mxu0 %v4161
        %4461 = vmatpush.bf16.msra.mxu0 %v4160
        %4462 = vmatpush.bf16.msra.mxu0 %v4159
        %4463 = vmatpush.bf16.msra.mxu0 %v4158
        %4464 = vmatpush.bf16.msra.mxu0 %v4157
        %4465 = vmatpush.bf16.msra.mxu0 %v4156
        %4466 = vmatpush.bf16.msra.mxu0 %v4155
        %4467 = vmatmul.bf16.gmra.mxu0 %v3311
        %v4468 = vpop.f32.mrf.mxu0
        %v4469 = vadd.f32 %v4455, %v4468
        %v4470 = vpop.f32.mrf.mxu0
        %v4471 = vadd.f32 %v4457, %v4470
        %4472 = vdwg.mxu0
        %4473 = vmatpush.bf16.msra.mxu0 %v4170
        %4474 = vmatpush.bf16.msra.mxu0 %v4169
        %4475 = vmatpush.bf16.msra.mxu0 %v4168
        %4476 = vmatpush.bf16.msra.mxu0 %v4167
        %4477 = vmatpush.bf16.msra.mxu0 %v4166
        %4478 = vmatpush.bf16.msra.mxu0 %v4165
        %4479 = vmatpush.bf16.msra.mxu0 %v4164
        %4480 = vmatpush.bf16.msra.mxu0 %v4163
        %4481 = vmatmul.bf16.gmra.mxu0 %v3312
        %v4482 = vpop.f32.mrf.mxu0
        %v4483 = vadd.f32 %v4469, %v4482
        %v4484 = vpop.f32.mrf.mxu0
        %v4485 = vadd.f32 %v4471, %v4484
        %4486 = vdwg.mxu0
        %4487 = vmatpush.bf16.msra.mxu0 %v4178
        %4488 = vmatpush.bf16.msra.mxu0 %v4177
        %4489 = vmatpush.bf16.msra.mxu0 %v4176
        %4490 = vmatpush.bf16.msra.mxu0 %v4175
        %4491 = vmatpush.bf16.msra.mxu0 %v4174
        %4492 = vmatpush.bf16.msra.mxu0 %v4173
        %4493 = vmatpush.bf16.msra.mxu0 %v4172
        %4494 = vmatpush.bf16.msra.mxu0 %v4171
        %4495 = vmatmul.bf16.gmra.mxu0 %v3313
        %v4496 = vpop.f32.mrf.mxu0
        %v4497 = vadd.f32 %v4483, %v4496
        %v4498 = vpop.f32.mrf.mxu0
        %v4499 = vadd.f32 %v4485, %v4498
        %4500 = vdwg.mxu0
        %4501 = vmatpush.bf16.msra.mxu0 %v4186
        %4502 = vmatpush.bf16.msra.mxu0 %v4185
        %4503 = vmatpush.bf16.msra.mxu0 %v4184
        %4504 = vmatpush.bf16.msra.mxu0 %v4183
        %4505 = vmatpush.bf16.msra.mxu0 %v4182
        %4506 = vmatpush.bf16.msra.mxu0 %v4181
        %4507 = vmatpush.bf16.msra.mxu0 %v4180
        %4508 = vmatpush.bf16.msra.mxu0 %v4179
        %4509 = vmatmul.bf16.gmra.mxu0 %v3314
        %v4510 = vpop.f32.mrf.mxu0
        %v4511 = vadd.f32 %v4497, %v4510
        %v4512 = vpop.f32.mrf.mxu0
        %v4513 = vadd.f32 %v4499, %v4512
        %4514 = vdwg.mxu0
        %4515 = vmatpush.bf16.msra.mxu0 %v4194
        %4516 = vmatpush.bf16.msra.mxu0 %v4193
        %4517 = vmatpush.bf16.msra.mxu0 %v4192
        %4518 = vmatpush.bf16.msra.mxu0 %v4191
        %4519 = vmatpush.bf16.msra.mxu0 %v4190
        %4520 = vmatpush.bf16.msra.mxu0 %v4189
        %4521 = vmatpush.bf16.msra.mxu0 %v4188
        %4522 = vmatpush.bf16.msra.mxu0 %v4187
        %4523 = vmatmul.bf16.gmra.mxu0 %v3315
        %v4524 = vpop.f32.mrf.mxu0
        %v4525 = vadd.f32 %v4511, %v4524
        %v4526 = vpop.f32.mrf.mxu0
        %v4527 = vadd.f32 %v4513, %v4526
        %4528 = vdwg.mxu0
        %4529 = vmatpush.bf16.msra.mxu0 %v4202
        %4530 = vmatpush.bf16.msra.mxu0 %v4201
        %4531 = vmatpush.bf16.msra.mxu0 %v4200
        %4532 = vmatpush.bf16.msra.mxu0 %v4199
        %4533 = vmatpush.bf16.msra.mxu0 %v4198
        %4534 = vmatpush.bf16.msra.mxu0 %v4197
        %4535 = vmatpush.bf16.msra.mxu0 %v4196
        %4536 = vmatpush.bf16.msra.mxu0 %v4195
        %4537 = vmatmul.bf16.gmra.mxu0 %v3316
        %v4538 = vpop.f32.mrf.mxu0
        %v4539 = vadd.f32 %v4525, %v4538
        %v4540 = vpop.f32.mrf.mxu0
        %v4541 = vadd.f32 %v4527, %v4540
        %4542 = vdwg.mxu0
        %4543 = vmatpush.bf16.msra.mxu0 %v4210
        %4544 = vmatpush.bf16.msra.mxu0 %v4209
        %4545 = vmatpush.bf16.msra.mxu0 %v4208
        %4546 = vmatpush.bf16.msra.mxu0 %v4207
        %4547 = vmatpush.bf16.msra.mxu0 %v4206
        %4548 = vmatpush.bf16.msra.mxu0 %v4205
        %4549 = vmatpush.bf16.msra.mxu0 %v4204
        %4550 = vmatpush.bf16.msra.mxu0 %v4203
        %4551 = vmatmul.bf16.gmra.mxu0 %v3317
        %v4552 = vpop.f32.mrf.mxu0
        %v4553 = vadd.f32 %v4539, %v4552
        %v4554 = vpop.f32.mrf.mxu0
        %v4555 = vadd.f32 %v4541, %v4554
        %4556 = vdwg.mxu0
        %4557 = vmatpush.bf16.msra.mxu0 %v4218
        %4558 = vmatpush.bf16.msra.mxu0 %v4217
        %4559 = vmatpush.bf16.msra.mxu0 %v4216
        %4560 = vmatpush.bf16.msra.mxu0 %v4215
        %4561 = vmatpush.bf16.msra.mxu0 %v4214
        %4562 = vmatpush.bf16.msra.mxu0 %v4213
        %4563 = vmatpush.bf16.msra.mxu0 %v4212
        %4564 = vmatpush.bf16.msra.mxu0 %v4211
        %4565 = vmatmul.bf16.gmra.mxu0 %v3318
        %v4566 = vpop.f32.mrf.mxu0
        %v4567 = vadd.f32 %v4553, %v4566
        %v4568 = vpop.f32.mrf.mxu0
        %v4569 = vadd.f32 %v4555, %v4568
        %4570 = vdwg.mxu0
        %v4571 = vadd.f32 %v2240, %v4567
        %v4572 = vadd.f32 %v2241, %v4569
        %v4573 = vld [vmem:[%s884] sm:$0x1]
        %v4574 = vld [vmem:[%s893] sm:$0x1]
        %v4575 = vmul.f32 %v4571, %v2181
        %v4576 = vmul.f32 %v4572, %v2181
        %4577 = vadd.xlane.f32.xlu0 %v4575
        %v4578 = vpop.xlane.xlu0 %4577
        %4579 = vadd.xlane.f32.xlu0 %v4576
        %v4580 = vpop.xlane.xlu0 %4579
        %v4581 = vmul.f32 %v4578, 0.016666668
        %v4582 = vmul.f32 %v4580, 0.016666668
        %v4583 = vsub.f32 %v4575, %v4581
        %v4584 = vsub.f32 %v4576, %v4582
        %v4585 = vmul.f32 %v4583, %v2181
        %v4586 = vmul.f32 %v4584, %v2181
        %v4587 = vmul.f32 %v4585, %v4585
        %v4588 = vmul.f32 %v4586, %v4586
        %4589 = vadd.xlane.f32.xlu0 %v4587
        %v4590 = vpop.xlane.xlu0 %4589
        %4591 = vadd.xlane.f32.xlu0 %v4588
        %v4592 = vpop.xlane.xlu0 %4591
        %v4593 = vmul.f32 %v4590, 0.016666668
        %v4594 = vmul.f32 %v4592, 0.016666668
        %v4595 = vsub.f32 %v4571, %v4581
        %v4596 = vsub.f32 %v4572, %v4582
        %v4597 = vadd.f32 %v4593, 1e-05
        %v4598 = vadd.f32 %v4594, 1e-05
        %v4599 = vrsqrt.pop %v4597
        %v4600 = vmul.f32 %v4599, %v4597
        %v4601 = vmul.f32 %v4600, %v4599
        %v4602 = vmul.f32 0.5, %v4601
        %v4603 = vsub.f32 1.5, %v4602
        %v4604 = vmul.f32 %v4599, %v4603
        %vm4605 = vweird.f32 %v4597
        %vm4606 = vweird.f32 %v4599
        %vm4607 = vmor %vm4605, %vm4606
        %v4608 = vsel %vm4607, %v4599, %v4604
        %v4609 = vrsqrt.pop %v4598
        %v4610 = vmul.f32 %v4609, %v4598
        %v4611 = vmul.f32 %v4610, %v4609
        %v4612 = vmul.f32 0.5, %v4611
        %v4613 = vsub.f32 1.5, %v4612
        %v4614 = vmul.f32 %v4609, %v4613
        %vm4615 = vweird.f32 %v4598
        %vm4616 = vweird.f32 %v4609
        %vm4617 = vmor %vm4615, %vm4616
        %v4618 = vsel %vm4617, %v4609, %v4614
        %v4619 = vmul.f32 %v4595, %v4608
        %v4620 = vmul.f32 %v4596, %v4618
        %v4622 = vperm.slane %v4573, 0
        %v4624 = vmul.f32 %v4619, %v4622
        %v4625 = vmul.f32 %v4620, %v4622
        %v4627 = vperm.slane %v4574, 0
        %v4629 = vadd.f32 %v4624, %v4627
        %v4630 = vadd.f32 %v4625, %v4627
        %4631 = vst [vmem:[%s1007] sm:$0xff] %v4629
        %4632 = vst [vmem:[%s1007 + $0x8] sm:$0xff] %v4630
        %p4633 = scmp.lt.s32.totalorder %s50, 1
        %s4634 = scalar_select %p4633, %s50, 1
        %s4635 = smul.addr %s4634, 2
        %s4636 = smul.addr %s4635, 8
        %s4637 = scalar_lea.vmem %s14, %s4636
        // Predicated region
        $region133: #{trans_mm_fc_forward.2} parent=75 // pred_check
          %p4638 = pneg %p464
        $region134: #{trans_mm_fc_forward.2} parent=75 // pred_check_branch
          %4640 = sbr.rel (%p4638) target = $region136
        $region135: #{trans_mm_fc_forward.2} parent=75 // pred_region
          _
        $region136: #{trans_mm_fc_forward.2} parent=75 // pred_fallthru
          _
      $region76: #{trans_mm_fc_forward.2} parent=5 // pred_fallthru
        _
      %p4641 = scmp.le.s32.totalorder 2, %s41
      // Predicated region
      $region137: #{trans_mm_fc_forward.2} parent=5 // pred_check
        %p4642 = pneg %p4641
      $region138: #{trans_mm_fc_forward.2} parent=5 // pred_check_branch
        %4644 = sbr.rel (%p4642) target = $region140
      $region139: #{trans_mm_fc_forward.2} parent=5 // pred_region
        %s4645 = ssub.s32 %s41, 2
        // Predicated region
        $region141: #{trans_mm_fc_forward.2} parent=139 // pred_check
          %p4646 = pneg %p470
        $region142: #{trans_mm_fc_forward.2} parent=139 // pred_check_branch
          %4648 = sbr.rel (%p4646) target = $region144
        $region143: #{trans_mm_fc_forward.2} parent=139 // pred_region
          %p4649 = scmp.lt.s32.totalorder %s52, 1
          %s4650 = scalar_select %p4649, %s52, 1
          %s4651 = smul.addr %s4650, 2
          %s4652 = smul.addr %s4651, 8
          %s4653 = scalar_lea.vmem %s14, %s4652
        $region144: #{trans_mm_fc_forward.2} parent=139 // pred_fallthru
          _
      $region140: #{trans_mm_fc_forward.2} parent=5 // pred_fallthru
        _
    $region6: #{trans_mm_fc_forward.2} parent=1 // loop_footer
      %s45 = sadd.s32 1, %s41
    $region7: #{trans_mm_fc_forward.2} parent=1 // loop_footer_branch
      %40 = sbr.rel target = $region3
    $region8: #{trans_mm_fc_forward.2} parent=1 // loop_exit
      _
    %4654 = vsyncpa [#allocation3], 1
    %s4655 = scalar_lea.sflag [#allocation3], 1
    %4656 = vsyncpa %s4655, 1
    %4657 = vsyncpa [#allocation5], 1
    %s4658 = scalar_lea.sflag [#allocation5], 1
    %4659 = vsyncpa %s4658, 1
    %4660 = vsyncpa [#allocation8], 1
    %s4661 = scalar_lea.sflag [#allocation8], 1
    %4662 = vsyncpa %s4661, 1
    %4663 = vsyncpa [#allocation11], 1
    %s4664 = scalar_lea.sflag [#allocation11], 1
    %4665 = vsyncpa %s4664, 1
    %4666 = vsyncpa [#allocation14], 1
    %s4667 = scalar_lea.sflag [#allocation14], 1
    %4668 = vsyncpa %s4667, 1
    %4669 = vsyncpa [#allocation17], 1
    %s4670 = scalar_lea.sflag [#allocation17], 1
    %4671 = vsyncpa %s4670, 1
    %4672 = vsyncpa [#allocation20], 1
    %s4673 = scalar_lea.sflag [#allocation20], 1
    %4674 = vsyncpa %s4673, 1

</llo_original>
